<compile_context>
chip_gen: v5e
topology: v5e:2x2
jax: 0.10.0
libtpu: 0.0.40
codegen_flags: <defaults>
</compile_context>

<pallas_src>
import functools
import math

import jax
import jax.numpy as jnp
from jax.experimental import pallas as pl
from jax.experimental.pallas import tpu as pltpu


# ---------------------------------------------------------------------------
# helpers
# ---------------------------------------------------------------------------
def _round_up(x, m):
    return ((x + m - 1) // m) * m


def _div_candidates(n, step):
    """Divisors of n that are multiples of `step`, descending. n must be a multiple of step."""
    assert n % step == 0
    out = []
    d = n
    while d >= step:
        if n % d == 0:
            out.append(d)
        d -= step
    return out


# ---------------------------------------------------------------------------
# Kernel factory
# ---------------------------------------------------------------------------
def _make_qlinear_kernel(has_bias: bool, use_acc: bool, out_fp: int):
    """Ref order: xr,xi,xj,xk, wr,wi,wj,wk, [bias], o, [acc]."""
    n_in = 8 + (1 if has_bias else 0)

    def kernel(*refs):
        x_refs = refs[0:4]
        w_refs = refs[4:8]
        b_ref = refs[8] if has_bias else None
        o_ref = refs[n_in]
        acc_ref = refs[n_in + 1] if use_acc else o_ref

        k = pl.program_id(1)

        @pl.when(k == 0)
        def _init():
            acc_ref[...] = jnp.zeros_like(acc_ref)

        xs = [r[...] for r in x_refs]   # 4 x (tm, tk)
        ws = [r[...] for r in w_refs]   # 4 x (tk, out_fp)

        def dot(a, b):
            return jnp.dot(a, b, preferred_element_type=jnp.float32)

        # Hamilton product in block form (0=r, 1=i, 2=j, 3=k): 16 MXU dots per step.
        comps = (
            dot(xs[0], ws[0]) - dot(xs[1], ws[1]) - dot(xs[2], ws[2]) - dot(xs[3], ws[3]),
            dot(xs[0], ws[1]) + dot(xs[1], ws[0]) - dot(xs[2], ws[3]) + dot(xs[3], ws[2]),
            dot(xs[0], ws[2]) + dot(xs[1], ws[3]) + dot(xs[2], ws[0]) - dot(xs[3], ws[1]),
            dot(xs[0], ws[3]) - dot(xs[1], ws[2]) + dot(xs[2], ws[1]) + dot(xs[3], ws[0]),
        )
        # Each component lands in a 128-aligned lane slice of the full-width block.
        for c, v in enumerate(comps):
            acc_ref[:, pl.ds(c * out_fp, out_fp)] += v

        if has_bias or use_acc:
            @pl.when(k == pl.num_programs(1) - 1)
            def _finalize():
                if use_acc:
                    val = acc_ref[...]
                    if has_bias:
                        val = val + b_ref[...]          # (1, 4*out_fp) broadcast
                    o_ref[...] = val.astype(o_ref.dtype)
                else:                                   # f32 accumulates directly in o_ref
                    o_ref[...] = o_ref[...] + b_ref[...]

    return kernel


# ---------------------------------------------------------------------------
# Wrapper
# ---------------------------------------------------------------------------
def quaternion_linear_pallas(x, r_w, i_w, j_w, k_w, bias=None, *,
                             operand_dtype=jnp.bfloat16, tm=None, tk=None):
    """Forward pass of QuaternionLinearAutograd.

    x : (N, 4*in_f)   r_w/i_w/j_w/k_w : (in_f, out_f)   bias : (4*out_f,) or None
    Returns (N, 4*out_f).  MXU operands are cast to `operand_dtype` (default bf16,
    f32 accumulation); pass operand_dtype=None / jnp.float32 to keep f32 operands.
    """
    M, Kdim = x.shape
    in_f, out_f = r_w.shape
    assert Kdim == 4 * in_f, "x last dim must be 4 * in_features"
    for w in (i_w, j_w, k_w):
        assert w.shape == (in_f, out_f)

    out_dtype = x.dtype
    op_dtype = jnp.dtype(out_dtype if operand_dtype is None else operand_dtype)

    # ---- pad per-component dims to lane/sublane alignment (no-op when aligned) --
    in_f_p = _round_up(in_f, 128)
    out_f_p = _round_up(out_f, 128)
    M_p = _round_up(M, 8)

    if (M_p, in_f_p) != (M, in_f):
        x_in = jnp.pad(x.reshape(M, 4, in_f),
                       ((0, M_p - M), (0, 0), (0, in_f_p - in_f))).reshape(M_p, 4 * in_f_p)
    else:
        x_in = x
    if (in_f_p, out_f_p) != (in_f, out_f):
        pad_w = lambda w: jnp.pad(w, ((0, in_f_p - in_f), (0, out_f_p - out_f)))
        r_w, i_w, j_w, k_w = pad_w(r_w), pad_w(i_w), pad_w(j_w), pad_w(k_w)

    x_in = x_in.astype(op_dtype)
    r_w, i_w, j_w, k_w = (w.astype(op_dtype) for w in (r_w, i_w, j_w, k_w))

    has_bias = bias is not None
    if has_bias:
        b2 = bias.reshape(4, out_f).astype(jnp.float32)
        if out_f_p != out_f:
            b2 = jnp.pad(b2, ((0, 0), (0, out_f_p - out_f)))
        b_flat = b2.reshape(1, 4 * out_f_p)            # flat [b_r | b_i | b_j | b_k]

    use_acc = jnp.dtype(out_dtype) != jnp.dtype(jnp.float32)
    ib = jnp.dtype(op_dtype).itemsize
    ob = jnp.dtype(out_dtype).itemsize

    # ---- VMEM budget & tile selection -------------------------------------
    try:
        device_vmem = int(pltpu.get_tpu_info().vmem_capacity_bytes)
    except Exception:
        device_vmem = 64 * 1024 * 1024                 # conservative (v7x) fallback
    budget = int(0.45 * device_vmem)                   # leave pipelining headroom

    def est_bytes(tm_c, tk_c):
        return (2 * 4 * tm_c * tk_c * ib               # 4 x tiles, double-buffered
                + 2 * 4 * tk_c * out_f_p * ib          # 4 weight tiles, double-buffered
                + 2 * tm_c * 4 * out_f_p * ob          # full-width output tile
                + (tm_c * 4 * out_f_p * 4 if use_acc else 0)
                + (2 * 4 * out_f_p * 4 if has_bias else 0))

    if tm is None or tk is None:
        cap_m = 512
        if M_p >= 16:                                  # keep >=2 row blocks (v7x has 2 TCs)
            cap_m = min(cap_m, max(8, (M_p // 2) // 8 * 8))
        tm_cands = [t for t in _div_candidates(M_p, 8) if t <= cap_m] or [8]
        tk_cands = _div_candidates(in_f_p, 128)        # descending: prefer tk == in_f_p
        tm_sel, tk_sel = tm_cands[-1], tk_cands[-1]
        done = False
        for tk_c in tk_cands:                          # tk = in_f_p collapses the k axis
            for tm_c in tm_cands:                      # then maximize tm (weight reuse)
                if est_bytes(tm_c, tk_c) <= budget:
                    tm_sel, tk_sel, done = tm_c, tk_c, True
                    break
            if done:
                break
        # TODO(synk): add j-tiling of out_features for very wide layers where even
        # (tm=8, tk=128) exceeds the VMEM budget.
        tm = tm_sel if tm is None else tm
        tk = tk_sel if tk is None else tk

    assert M_p % tm == 0 and (tm % 8 == 0 or tm == M_p)
    assert in_f_p % tk == 0 and tk % 128 == 0

    ni, nk = M_p // tm, in_f_p // tk
    grid = (ni, nk)                                    # reduction axis last
    nkb = nk

    # ---- specs --------------------------------------------------------------
    def x_spec(c):
        # component c lives in flat columns [c*in_f_p, (c+1)*in_f_p) -> block col c*nkb + k
        return pl.BlockSpec((tm, tk), lambda i, k, c=c, nkb=nkb: (i, c * nkb + k))

    w_spec = pl.BlockSpec((tk, out_f_p), lambda i, k: (k, 0))
    in_specs = [x_spec(0), x_spec(1), x_spec(2), x_spec(3)] + [w_spec] * 4
    inputs = [x_in, x_in, x_in, x_in, r_w, i_w, j_w, k_w]
    if has_bias:
        in_specs.append(pl.BlockSpec((1, 4 * out_f_p), lambda i, k: (0, 0)))
        inputs.append(b_flat)

    out_spec = pl.BlockSpec((tm, 4 * out_f_p), lambda i, k: (i, 0))
    out_shape = jax.ShapeDtypeStruct((M_p, 4 * out_f_p), out_dtype)
    scratch_shapes = [pltpu.VMEM((tm, 4 * out_f_p), jnp.float32)] if use_acc else []

    # ---- cost & VMEM limit ---------------------------------------------------
    flops = 2 * M_p * (4 * in_f_p) * (4 * out_f_p)
    w_reads = 1 if nk == 1 else ni                     # weights resident when k collapses
    bytes_accessed = (M_p * 4 * in_f_p * ib
                      + w_reads * 4 * in_f_p * out_f_p * ib
                      + M_p * 4 * out_f_p * ob
                      + (4 * out_f_p * 4 if has_bias else 0))
    cost = pl.CostEstimate(flops=flops, transcendentals=0, bytes_accessed=bytes_accessed)

    est = est_bytes(tm, tk)
    vmem_limit = int(min(device_vmem, max(int(1.5 * est) + (2 << 20), 8 << 20)))

    kernel = _make_qlinear_kernel(has_bias, use_acc, out_f_p)
    out_p = pl.pallas_call(
        kernel,
        out_shape=out_shape,
        grid_spec=pltpu.PrefetchScalarGridSpec(
            num_scalar_prefetch=0,
            grid=grid,
            in_specs=in_specs,
            out_specs=out_spec,
            scratch_shapes=scratch_shapes,
        ),
        compiler_params=pltpu.CompilerParams(
            dimension_semantics=("parallel", "arbitrary"),
            vmem_limit_bytes=vmem_limit,
        ),
        cost_estimate=cost,
    )(*inputs)

    if (M_p, out_f_p) != (M, out_f):
        out = out_p.reshape(M_p, 4, out_f_p)[:M, :, :out_f].reshape(M, 4 * out_f)
    else:
        out = out_p                                    # already flat [r | i | j | k]
    return out


# ---------------------------------------------------------------------------
# Deterministic "quaternion"-style (glorot) initialization, in JAX.
# ---------------------------------------------------------------------------
def quaternion_init(key, in_features, out_features):
    s = 1.0 / math.sqrt(2.0 * (in_features + out_features))
    shape = (in_features, out_features)
    k1, k2, k3, k4, k5 = jax.random.split(key, 5)

    v_i = jax.random.uniform(k1, shape, minval=-1.0, maxval=1.0)
    v_j = jax.random.uniform(k2, shape, minval=-1.0, maxval=1.0)
    v_k = jax.random.uniform(k3, shape, minval=-1.0, maxval=1.0)
    norm = jnp.sqrt(v_i**2 + v_j**2 + v_k**2) + 1e-4
    v_i, v_j, v_k = v_i / norm, v_j / norm, v_k / norm

    modulus = jax.random.uniform(k4, shape, minval=-s, maxval=s)
    phase = jax.random.uniform(k5, shape, minval=-math.pi, maxval=math.pi)

    weight_r = modulus * jnp.cos(phase)
    weight_i = modulus * v_i * jnp.sin(phase)
    weight_j = modulus * v_j * jnp.sin(phase)
    weight_k = modulus * v_k * jnp.sin(phase)
    return (weight_r.astype(jnp.float32), weight_i.astype(jnp.float32),
            weight_j.astype(jnp.float32), weight_k.astype(jnp.float32))


def _hamilton_matrix(r, i, j, k):
    col_r = jnp.concatenate([r, -i, -j, -k], axis=0)
    col_i = jnp.concatenate([i,  r, -k,  j], axis=0)
    col_j = jnp.concatenate([j,  k,  r, -i], axis=0)
    col_k = jnp.concatenate([k, -j,  i,  r], axis=0)
    return jnp.concatenate([col_r, col_i, col_j, col_k], axis=1)


# ---------------------------------------------------------------------------
# Main
# ---------------------------------------------------------------------------
if __name__ == "__main__":
    key = jax.random.PRNGKey(0)
    kx, kw, kb, kx3, kw3 = jax.random.split(key, 5)

    # ---- Test 1: aligned shapes, default bf16-operand fast path -------------
    # QuaternionLinearAutograd(1024, 512): per-component in_f=256, out_f=128.
    N, in_f, out_f = 256, 256, 128
    x = jax.random.normal(kx, (N, 4 * in_f), dtype=jnp.float32)
    r_w, i_w, j_w, k_w = quaternion_init(kw, in_f, out_f)
    bias = 0.1 * jax.random.normal(kb, (4 * out_f,), dtype=jnp.float32)

    qlin_bf16 = jax.jit(quaternion_linear_pallas)       # bf16 operands, f32 accum
    out1 = jax.block_until_ready(qlin_bf16(x, r_w, i_w, j_w, k_w, bias))

    f32 = lambda a: a.astype(jnp.bfloat16).astype(jnp.float32)   # same operand quantization
    W_b = _hamilton_matrix(f32(r_w), f32(i_w), f32(j_w), f32(k_w))
    ref1 = jnp.dot(f32(x), W_b, precision=jax.lax.Precision.HIGHEST) + bias
    assert out1.shape == (N, 4 * out_f)
    assert jnp.allclose(out1, ref1, atol=2e-3, rtol=2e-3), "bf16 path mismatch"

    # ---- Test 2: f32 escape hatch + explicit tiles exercising the k reduction axis
    qlin_f32 = jax.jit(functools.partial(quaternion_linear_pallas,
                                         operand_dtype=jnp.float32, tm=64, tk=128))
    out2 = jax.block_until_ready(qlin_f32(x, r_w, i_w, j_w, k_w, bias))
    W_f = _hamilton_matrix(r_w, i_w, j_w, k_w)
    ref2 = jnp.dot(x, W_f, precision=jax.lax.Precision.HIGHEST) + bias
    assert jnp.allclose(out2, ref2, atol=1e-3, rtol=1e-3), "f32 path mismatch"

    # ---- Test 3: padding path (non-128 in_f/out_f), no bias ------------------
    N3, in_f3, out_f3 = 16, 40, 24                      # QuaternionLinearAutograd(160, 96)
    x3 = jax.random.normal(kx3, (N3, 4 * in_f3), dtype=jnp.float32)
    r3, i3, j3, k3 = quaternion_init(kw3, in_f3, out_f3)
    qlin_pad = jax.jit(functools.partial(quaternion_linear_pallas,
                                         operand_dtype=jnp.float32))
    out3 = jax.block_until_ready(qlin_pad(x3, r3, i3, j3, k3, None))
    ref3 = jnp.dot(x3, _hamilton_matrix(r3, i3, j3, k3),
                   precision=jax.lax.Precision.HIGHEST)
    assert out3.shape == (N3, 4 * out_f3)
    assert jnp.allclose(out3, ref3, atol=1e-3, rtol=1e-3), "padded path mismatch"

    print("KERNEL_OK")
</pallas_src>

<mosaic_0001>
module attributes {stable_mosaic.version = 11 : i64} {
  func.func @kernel(%arg0: i32, %arg1: i32, %arg2: memref<128x256xbf16, #tpu.memory_space<vmem>>, %arg3: memref<128x256xbf16, #tpu.memory_space<vmem>>, %arg4: memref<128x256xbf16, #tpu.memory_space<vmem>>, %arg5: memref<128x256xbf16, #tpu.memory_space<vmem>>, %arg6: memref<256x128xbf16, #tpu.memory_space<vmem>>, %arg7: memref<256x128xbf16, #tpu.memory_space<vmem>>, %arg8: memref<256x128xbf16, #tpu.memory_space<vmem>>, %arg9: memref<256x128xbf16, #tpu.memory_space<vmem>>, %arg10: memref<1x512xf32, #tpu.memory_space<vmem>>, %arg11: memref<128x512xf32, #tpu.memory_space<vmem>>) attributes {dimension_semantics = [#tpu.dimension_semantics<parallel>, #tpu.dimension_semantics<arbitrary>], iteration_bounds = array<i64: 2, 1>, scalar_prefetch = 0 : i64, scratch_operands = 0 : i64, tpu.core_type = #tpu.core_type<tc>, window_params = [{transform_indices = @transform_0, window_bounds = array<i64: 128, 256>}, {transform_indices = @transform_1, window_bounds = array<i64: 128, 256>}, {transform_indices = @transform_2, window_bounds = array<i64: 128, 256>}, {transform_indices = @transform_3, window_bounds = array<i64: 128, 256>}, {transform_indices = @transform_4, window_bounds = array<i64: 256, 128>}, {transform_indices = @transform_5, window_bounds = array<i64: 256, 128>}, {transform_indices = @transform_6, window_bounds = array<i64: 256, 128>}, {transform_indices = @transform_7, window_bounds = array<i64: 256, 128>}, {pipeline_mode = #tpu.pipeline_mode<synchronous>, transform_indices = @transform_8, window_bounds = array<i64: 1, 512>}, {transform_indices = @transform_9, window_bounds = array<i64: 128, 512>}]} {
    %c0_i32 = arith.constant 0 : i32
    %0 = arith.cmpi eq, %arg1, %c0_i32 : i32
    %1 = arith.extui %0 : i1 to i32
    %c0_i32_0 = arith.constant 0 : i32
    %2 = arith.cmpi ne, %1, %c0_i32_0 : i32
    scf.if %2 {
      %cst_46 = arith.constant 0.000000e+00 : f32
      %54 = vector.broadcast %cst_46 : f32 to vector<128x512xf32>
      %c0_47 = arith.constant 0 : index
      %c0_48 = arith.constant 0 : index
      %55 = vector.load %arg11[%c0_47, %c0_48] : memref<128x512xf32, #tpu.memory_space<vmem>>, vector<128x512xf32>
      tpu.vector_store %arg11[%c0_47, %c0_48], %54 {strides = array<i32>} : memref<128x512xf32, #tpu.memory_space<vmem>>, vector<128x512xf32>,
    } else {
    }
    %c0 = arith.constant 0 : index
    %c0_1 = arith.constant 0 : index
    %3 = vector.load %arg2[%c0, %c0_1] : memref<128x256xbf16, #tpu.memory_space<vmem>>, vector<128x256xbf16>
    %c0_2 = arith.constant 0 : index
    %c0_3 = arith.constant 0 : index
    %4 = vector.load %arg3[%c0_2, %c0_3] : memref<128x256xbf16, #tpu.memory_space<vmem>>, vector<128x256xbf16>
    %c0_4 = arith.constant 0 : index
    %c0_5 = arith.constant 0 : index
    %5 = vector.load %arg4[%c0_4, %c0_5] : memref<128x256xbf16, #tpu.memory_space<vmem>>, vector<128x256xbf16>
    %c0_6 = arith.constant 0 : index
    %c0_7 = arith.constant 0 : index
    %6 = vector.load %arg5[%c0_6, %c0_7] : memref<128x256xbf16, #tpu.memory_space<vmem>>, vector<128x256xbf16>
    %c0_8 = arith.constant 0 : index
    %c0_9 = arith.constant 0 : index
    %7 = vector.load %arg6[%c0_8, %c0_9] : memref<256x128xbf16, #tpu.memory_space<vmem>>, vector<256x128xbf16>
    %c0_10 = arith.constant 0 : index
    %c0_11 = arith.constant 0 : index
    %8 = vector.load %arg7[%c0_10, %c0_11] : memref<256x128xbf16, #tpu.memory_space<vmem>>, vector<256x128xbf16>
    %c0_12 = arith.constant 0 : index
    %c0_13 = arith.constant 0 : index
    %9 = vector.load %arg8[%c0_12, %c0_13] : memref<256x128xbf16, #tpu.memory_space<vmem>>, vector<256x128xbf16>
    %c0_14 = arith.constant 0 : index
    %c0_15 = arith.constant 0 : index
    %10 = vector.load %arg9[%c0_14, %c0_15] : memref<256x128xbf16, #tpu.memory_space<vmem>>, vector<256x128xbf16>
    %cst = arith.constant dense<0.000000e+00> : vector<128x128xf32>
    %11 = tpu.matmul %3, %7, %cst {dimension_numbers = #tpu.dot_dimension_numbers<[1], [0], [0], [1], [0, 0, 1, 1], [], []>} : vector<128x256xbf16>, vector<256x128xbf16>, vector<128x128xf32> -> vector<128x128xf32>
    %cst_16 = arith.constant dense<0.000000e+00> : vector<128x128xf32>
    %12 = tpu.matmul %4, %8, %cst_16 {dimension_numbers = #tpu.dot_dimension_numbers<[1], [0], [0], [1], [0, 0, 1, 1], [], []>} : vector<128x256xbf16>, vector<256x128xbf16>, vector<128x128xf32> -> vector<128x128xf32>
    %13 = arith.subf %11, %12 : vector<128x128xf32>
    %cst_17 = arith.constant dense<0.000000e+00> : vector<128x128xf32>
    %14 = tpu.matmul %5, %9, %cst_17 {dimension_numbers = #tpu.dot_dimension_numbers<[1], [0], [0], [1], [0, 0, 1, 1], [], []>} : vector<128x256xbf16>, vector<256x128xbf16>, vector<128x128xf32> -> vector<128x128xf32>
    %15 = arith.subf %13, %14 : vector<128x128xf32>
    %cst_18 = arith.constant dense<0.000000e+00> : vector<128x128xf32>
    %16 = tpu.matmul %6, %10, %cst_18 {dimension_numbers = #tpu.dot_dimension_numbers<[1], [0], [0], [1], [0, 0, 1, 1], [], []>} : vector<128x256xbf16>, vector<256x128xbf16>, vector<128x128xf32> -> vector<128x128xf32>
    %17 = arith.subf %15, %16 : vector<128x128xf32>
    %cst_19 = arith.constant dense<0.000000e+00> : vector<128x128xf32>
    %18 = tpu.matmul %3, %8, %cst_19 {dimension_numbers = #tpu.dot_dimension_numbers<[1], [0], [0], [1], [0, 0, 1, 1], [], []>} : vector<128x256xbf16>, vector<256x128xbf16>, vector<128x128xf32> -> vector<128x128xf32>
    %cst_20 = arith.constant dense<0.000000e+00> : vector<128x128xf32>
    %19 = tpu.matmul %4, %7, %cst_20 {dimension_numbers = #tpu.dot_dimension_numbers<[1], [0], [0], [1], [0, 0, 1, 1], [], []>} : vector<128x256xbf16>, vector<256x128xbf16>, vector<128x128xf32> -> vector<128x128xf32>
    %20 = arith.addf %18, %19 : vector<128x128xf32>
    %cst_21 = arith.constant dense<0.000000e+00> : vector<128x128xf32>
    %21 = tpu.matmul %5, %10, %cst_21 {dimension_numbers = #tpu.dot_dimension_numbers<[1], [0], [0], [1], [0, 0, 1, 1], [], []>} : vector<128x256xbf16>, vector<256x128xbf16>, vector<128x128xf32> -> vector<128x128xf32>
    %22 = arith.subf %20, %21 : vector<128x128xf32>
    %cst_22 = arith.constant dense<0.000000e+00> : vector<128x128xf32>
    %23 = tpu.matmul %6, %9, %cst_22 {dimension_numbers = #tpu.dot_dimension_numbers<[1], [0], [0], [1], [0, 0, 1, 1], [], []>} : vector<128x256xbf16>, vector<256x128xbf16>, vector<128x128xf32> -> vector<128x128xf32>
    %24 = arith.addf %22, %23 : vector<128x128xf32>
    %cst_23 = arith.constant dense<0.000000e+00> : vector<128x128xf32>
    %25 = tpu.matmul %3, %9, %cst_23 {dimension_numbers = #tpu.dot_dimension_numbers<[1], [0], [0], [1], [0, 0, 1, 1], [], []>} : vector<128x256xbf16>, vector<256x128xbf16>, vector<128x128xf32> -> vector<128x128xf32>
    %cst_24 = arith.constant dense<0.000000e+00> : vector<128x128xf32>
    %26 = tpu.matmul %4, %10, %cst_24 {dimension_numbers = #tpu.dot_dimension_numbers<[1], [0], [0], [1], [0, 0, 1, 1], [], []>} : vector<128x256xbf16>, vector<256x128xbf16>, vector<128x128xf32> -> vector<128x128xf32>
    %27 = arith.addf %25, %26 : vector<128x128xf32>
    %cst_25 = arith.constant dense<0.000000e+00> : vector<128x128xf32>
    %28 = tpu.matmul %5, %7, %cst_25 {dimension_numbers = #tpu.dot_dimension_numbers<[1], [0], [0], [1], [0, 0, 1, 1], [], []>} : vector<128x256xbf16>, vector<256x128xbf16>, vector<128x128xf32> -> vector<128x128xf32>
    %29 = arith.addf %27, %28 : vector<128x128xf32>
    %cst_26 = arith.constant dense<0.000000e+00> : vector<128x128xf32>
    %30 = tpu.matmul %6, %8, %cst_26 {dimension_numbers = #tpu.dot_dimension_numbers<[1], [0], [0], [1], [0, 0, 1, 1], [], []>} : vector<128x256xbf16>, vector<256x128xbf16>, vector<128x128xf32> -> vector<128x128xf32>
    %31 = arith.subf %29, %30 : vector<128x128xf32>
    %cst_27 = arith.constant dense<0.000000e+00> : vector<128x128xf32>
    %32 = tpu.matmul %3, %10, %cst_27 {dimension_numbers = #tpu.dot_dimension_numbers<[1], [0], [0], [1], [0, 0, 1, 1], [], []>} : vector<128x256xbf16>, vector<256x128xbf16>, vector<128x128xf32> -> vector<128x128xf32>
    %cst_28 = arith.constant dense<0.000000e+00> : vector<128x128xf32>
    %33 = tpu.matmul %4, %9, %cst_28 {dimension_numbers = #tpu.dot_dimension_numbers<[1], [0], [0], [1], [0, 0, 1, 1], [], []>} : vector<128x256xbf16>, vector<256x128xbf16>, vector<128x128xf32> -> vector<128x128xf32>
    %34 = arith.subf %32, %33 : vector<128x128xf32>
    %cst_29 = arith.constant dense<0.000000e+00> : vector<128x128xf32>
    %35 = tpu.matmul %5, %8, %cst_29 {dimension_numbers = #tpu.dot_dimension_numbers<[1], [0], [0], [1], [0, 0, 1, 1], [], []>} : vector<128x256xbf16>, vector<256x128xbf16>, vector<128x128xf32> -> vector<128x128xf32>
    %36 = arith.addf %34, %35 : vector<128x128xf32>
    %cst_30 = arith.constant dense<0.000000e+00> : vector<128x128xf32>
    %37 = tpu.matmul %6, %7, %cst_30 {dimension_numbers = #tpu.dot_dimension_numbers<[1], [0], [0], [1], [0, 0, 1, 1], [], []>} : vector<128x256xbf16>, vector<256x128xbf16>, vector<128x128xf32> -> vector<128x128xf32>
    %38 = arith.addf %36, %37 : vector<128x128xf32>
    %c0_31 = arith.constant 0 : index
    %c0_32 = arith.constant 0 : index
    %39 = vector.load %arg11[%c0_31, %c0_32] : memref<128x512xf32, #tpu.memory_space<vmem>>, vector<128x128xf32>
    %40 = arith.addf %39, %17 : vector<128x128xf32>
    %c0_33 = arith.constant 0 : index
    %c0_34 = arith.constant 0 : index
    %41 = vector.load %arg11[%c0_33, %c0_34] : memref<128x512xf32, #tpu.memory_space<vmem>>, vector<128x128xf32>
    tpu.vector_store %arg11[%c0_33, %c0_34], %40 {strides = array<i32>} : memref<128x512xf32, #tpu.memory_space<vmem>>, vector<128x128xf32>,
    %c0_35 = arith.constant 0 : index
    %c128 = arith.constant 128 : index
    %42 = vector.load %arg11[%c0_35, %c128] : memref<128x512xf32, #tpu.memory_space<vmem>>, vector<128x128xf32>
    %43 = arith.addf %42, %24 : vector<128x128xf32>
    %c0_36 = arith.constant 0 : index
    %c128_37 = arith.constant 128 : index
    %44 = vector.load %arg11[%c0_36, %c128_37] : memref<128x512xf32, #tpu.memory_space<vmem>>, vector<128x128xf32>
    tpu.vector_store %arg11[%c0_36, %c128_37], %43 {strides = array<i32>} : memref<128x512xf32, #tpu.memory_space<vmem>>, vector<128x128xf32>,
    %c0_38 = arith.constant 0 : index
    %c256 = arith.constant 256 : index
    %45 = vector.load %arg11[%c0_38, %c256] : memref<128x512xf32, #tpu.memory_space<vmem>>, vector<128x128xf32>
    %46 = arith.addf %45, %31 : vector<128x128xf32>
    %c0_39 = arith.constant 0 : index
    %c256_40 = arith.constant 256 : index
    %47 = vector.load %arg11[%c0_39, %c256_40] : memref<128x512xf32, #tpu.memory_space<vmem>>, vector<128x128xf32>
    tpu.vector_store %arg11[%c0_39, %c256_40], %46 {strides = array<i32>} : memref<128x512xf32, #tpu.memory_space<vmem>>, vector<128x128xf32>,
    %c0_41 = arith.constant 0 : index
    %c384 = arith.constant 384 : index
    %48 = vector.load %arg11[%c0_41, %c384] : memref<128x512xf32, #tpu.memory_space<vmem>>, vector<128x128xf32>
    %49 = arith.addf %48, %38 : vector<128x128xf32>
    %c0_42 = arith.constant 0 : index
    %c384_43 = arith.constant 384 : index
    %50 = vector.load %arg11[%c0_42, %c384_43] : memref<128x512xf32, #tpu.memory_space<vmem>>, vector<128x128xf32>
    tpu.vector_store %arg11[%c0_42, %c384_43], %49 {strides = array<i32>} : memref<128x512xf32, #tpu.memory_space<vmem>>, vector<128x128xf32>,
    %c0_i32_44 = arith.constant 0 : i32
    %51 = arith.cmpi eq, %arg1, %c0_i32_44 : i32
    %52 = arith.extui %51 : i1 to i32
    %c0_i32_45 = arith.constant 0 : i32
    %53 = arith.cmpi ne, %52, %c0_i32_45 : i32
    scf.if %53 {
      %c0_46 = arith.constant 0 : index
      %c0_47 = arith.constant 0 : index
      %54 = vector.load %arg11[%c0_46, %c0_47] : memref<128x512xf32, #tpu.memory_space<vmem>>, vector<128x512xf32>
      %c0_48 = arith.constant 0 : index
      %c0_49 = arith.constant 0 : index
      %55 = vector.load %arg10[%c0_48, %c0_49] : memref<1x512xf32, #tpu.memory_space<vmem>>, vector<1x512xf32>
      %56 = vector.broadcast %55 : vector<1x512xf32> to vector<128x512xf32>
      %57 = arith.addf %54, %56 : vector<128x512xf32>
      %c0_50 = arith.constant 0 : index
      %c0_51 = arith.constant 0 : index
      %58 = vector.load %arg11[%c0_50, %c0_51] : memref<128x512xf32, #tpu.memory_space<vmem>>, vector<128x512xf32>
      tpu.vector_store %arg11[%c0_50, %c0_51], %57 {strides = array<i32>} : memref<128x512xf32, #tpu.memory_space<vmem>>, vector<128x512xf32>,
    } else {
    }
    return
  }
  func.func @transform_0(%arg0: i32, %arg1: i32) -> (i32, i32) {
    %c0_i32 = arith.constant 0 : i32
    %0 = arith.addi %c0_i32, %arg1 : i32
    %c0_i32_0 = arith.constant 0 : i32
    return %arg0, %0 : i32, i32
  }
  func.func @transform_1(%arg0: i32, %arg1: i32) -> (i32, i32) {
    %c1_i32 = arith.constant 1 : i32
    %0 = arith.addi %c1_i32, %arg1 : i32
    %c0_i32 = arith.constant 0 : i32
    return %arg0, %0 : i32, i32
  }
  func.func @transform_2(%arg0: i32, %arg1: i32) -> (i32, i32) {
    %c2_i32 = arith.constant 2 : i32
    %0 = arith.addi %c2_i32, %arg1 : i32
    %c0_i32 = arith.constant 0 : i32
    return %arg0, %0 : i32, i32
  }
  func.func @transform_3(%arg0: i32, %arg1: i32) -> (i32, i32) {
    %c3_i32 = arith.constant 3 : i32
    %0 = arith.addi %c3_i32, %arg1 : i32
    %c0_i32 = arith.constant 0 : i32
    return %arg0, %0 : i32, i32
  }
  func.func @transform_4(%arg0: i32, %arg1: i32) -> (i32, i32) {
    %c0_i32 = arith.constant 0 : i32
    %c0_i32_0 = arith.constant 0 : i32
    return %arg1, %c0_i32 : i32, i32
  }
  func.func @transform_5(%arg0: i32, %arg1: i32) -> (i32, i32) {
    %c0_i32 = arith.constant 0 : i32
    %c0_i32_0 = arith.constant 0 : i32
    return %arg1, %c0_i32 : i32, i32
  }
  func.func @transform_6(%arg0: i32, %arg1: i32) -> (i32, i32) {
    %c0_i32 = arith.constant 0 : i32
    %c0_i32_0 = arith.constant 0 : i32
    return %arg1, %c0_i32 : i32, i32
  }
  func.func @transform_7(%arg0: i32, %arg1: i32) -> (i32, i32) {
    %c0_i32 = arith.constant 0 : i32
    %c0_i32_0 = arith.constant 0 : i32
    return %arg1, %c0_i32 : i32, i32
  }
  func.func @transform_8(%arg0: i32, %arg1: i32) -> (i32, i32) {
    %c0_i32 = arith.constant 0 : i32
    %c0_i32_0 = arith.constant 0 : i32
    %c0_i32_1 = arith.constant 0 : i32
    return %c0_i32, %c0_i32_0 : i32, i32
  }
  func.func @transform_9(%arg0: i32, %arg1: i32) -> (i32, i32) {
    %c0_i32 = arith.constant 0 : i32
    %c0_i32_0 = arith.constant 0 : i32
    return %arg0, %c0_i32 : i32, i32
  }
}

</mosaic_0001>

<llo_original>
// kernel: quaternion_linear_pallas.1
$region0: #{quaternion_linear_pallas.1}
  #allocation0 [shape = 'u32[]', space=smem, size = 0x4, offset = 0x4, fixed_abs, tag = 'smem constant byte address 0x4 - core index']
  #allocation1 [shape = 'u32[72,128]{1,0:T(1,128)}', space=vmem, size = 0x9000, scoped, tag = 'internal scratch']
  %s0 = inlined_call_operand.vmem [shape: bf16[256,1024], index: 0, kind: input, shape index: {}, may-alias: {0,1,2,3}]
  %s1 = inlined_call_operand.vmem [shape: bf16[256,1024], index: 1, kind: input, shape index: {}, may-alias: {0,1,2,3}]
  %s2 = inlined_call_operand.vmem [shape: bf16[256,1024], index: 2, kind: input, shape index: {}, may-alias: {0,1,2,3}]
  %s3 = inlined_call_operand.vmem [shape: bf16[256,1024], index: 3, kind: input, shape index: {}, may-alias: {0,1,2,3}]
  %s4 = inlined_call_operand.vmem [shape: bf16[256,128], index: 4, kind: input, shape index: {}]
  %s5 = inlined_call_operand.vmem [shape: bf16[256,128], index: 5, kind: input, shape index: {}]
  %s6 = inlined_call_operand.vmem [shape: bf16[256,128], index: 6, kind: input, shape index: {}]
  %s7 = inlined_call_operand.vmem [shape: bf16[256,128], index: 7, kind: input, shape index: {}]
  %s8 = inlined_call_operand.vmem [shape: f32[1,512], index: 8, kind: input, shape index: {}]
  %s9 = inlined_call_operand.hbm [shape: f32[256,512], index: 9, kind: output, shape index: {}]
  %s10 = sld [smem:[#allocation0]]
  $region229: #{quaternion_linear_pallas.1} parent=0
    _
  %s12 = ssub.s32 1, %s10
  %s13 = scalar_select 0, %s12, %s10
  $region1: #{quaternion_linear_pallas.1} parent=0
    #allocation2 [shape = 'u8[131072]{0}', space=vmem, size = 0x20000, scoped, tag = 'input window, operand 0']
    #allocation3 [shape = 'u8[131072]{0}', space=vmem, size = 0x20000, scoped, tag = 'input window, operand 1']
    #allocation4 [shape = 'u8[131072]{0}', space=vmem, size = 0x20000, scoped, tag = 'input window, operand 2']
    #allocation5 [shape = 'u8[131072]{0}', space=vmem, size = 0x20000, scoped, tag = 'input window, operand 3']
    #allocation6 [shape = 'u8[524288]{0}', space=vmem, size = 0x80000, scoped, tag = 'output window, operand 0']
    #allocation7 [shape = 's32[2]{0}', space=sflag, size = 0x8, scoped, tag = 'scoped memory for quaternion_linear_pallas.1']
    %14 = vsyncpa [#allocation7], 0
    %s15 = scalar_lea.sflag [#allocation7], 1
    %16 = vsyncpa %s15, 0
    loop: start=0, step=1, limit=4
    $region2: #{quaternion_linear_pallas.1} parent=1 // loop_pre_header
      _
    $region3: #{quaternion_linear_pallas.1} parent=1 // loop_header
      %s18 = sphi 0, %s22
      %p19 = scmp.ge.s32.totalorder %s18, 4
      %s25 = sphi 0, %s37
      %s26 = sphi 0, %s33
      %s27 = sphi 0, %s25
      %s28 = sphi 0, %s26
      %s29 = sphi 0, %s27
      %s30 = sphi 0, %s28
      %s42 = sphi 0, %s44
      %s45 = sphi 0, %s42
      %s46 = sphi 0, %s45
      %s62 = sphi 0, %s46
      %s72 = sphi 0, %s74
      %s75 = sphi 0, %s72
      %s76 = sphi 0, %s75
      %s92 = sphi 0, %s76
      %s102 = sphi 0, %s104
      %s105 = sphi 0, %s102
      %s106 = sphi 0, %s105
      %s122 = sphi 0, %s106
      %s132 = sphi 0, %s134
      %s135 = sphi 0, %s132
      %s136 = sphi 0, %s135
      %s152 = sphi 0, %s136
      %s158 = sphi 0, %s160
      %s161 = sphi 0, %s158
      %s162 = sphi 0, %s161
      %s178 = sphi 0, %s162
      %s184 = sphi 0, %s186
      %s187 = sphi 0, %s184
      %s188 = sphi 0, %s187
      %s204 = sphi 0, %s188
      %s210 = sphi 0, %s212
      %s213 = sphi 0, %s210
      %s214 = sphi 0, %s213
      %s230 = sphi 0, %s214
      %s236 = sphi 0, %s238
      %s239 = sphi 0, %s236
      %s240 = sphi 0, %s239
      %s256 = sphi 0, %s240
      %s260 = sphi 0, %s260
      %s262 = sphi 0, %s260
      %s263 = sphi 0, %s262
      %s277 = sphi 0, %s263
      %s283 = sphi 0, %s285
      %s286 = sphi 0, %s283
      %s287 = sphi 0, %s286
      %s303 = sphi 0, %s287
    $region4: #{quaternion_linear_pallas.1} parent=1 // loop_header_branch
      %21 = sbr.rel (%p19) target = $region8
    $region5: #{quaternion_linear_pallas.1} parent=1 // loop_body
      %s23 = ssub.s32 %s18, 1
      %s24 = ssub.s32 %s18, 2
      %s31 = sadd.s32 1, %s26
      %p32 = scmp.ge.s32.totalorder %s31, 1
      %s33 = scalar_select %p32, 0, %s31
      %s34 = sadd.s32 1, %s25
      %s35 = scalar_select %p32, %s34, %s25
      %p36 = scmp.ge.s32.totalorder %s35, 2
      %s37 = scalar_select %p36, 0, %s35
      %s38 = ssub.s32 %s25, %s37
      %s39 = ssub.s32 %s26, %s33
      %s40 = sor.u32 %s38, %s39
      %p41 = scmp.eq.s32.totalorder %s40, 0
      %s43 = sadd.s32 %s42, 1
      %s44 = scalar_select %p41, %s42, %s43
      %p47 = pneg %p41
      %p48 = scmp.eq.s32.totalorder %s18, 1
      %p49 = por %p47, %p48
      %p50 = scmp.ne.s32.totalorder %s42, %s45
      %p51 = scmp.eq.s32.totalorder %s18, 0
      %p52 = por %p50, %p51
      %p53 = scmp.ne.s32.totalorder %s42, %s45
      %p54 = scmp.eq.s32.totalorder %s23, 1
      %p55 = por %p53, %p54
      %p56 = scmp.ne.s32.totalorder %s45, %s46
      %p57 = scmp.eq.s32.totalorder %s23, 0
      %p58 = por %p56, %p57
      %p59 = scmp.ne.s32.totalorder %s45, %s46
      %p60 = scmp.eq.s32.totalorder %s24, 1
      %p61 = por %p59, %p60
      %p63 = scmp.ne.s32.totalorder %s46, %s62
      %p64 = scmp.eq.s32.totalorder %s24, 0
      %p65 = por %p63, %p64
      %s66 = sadd.s32 %s26, 1
      %s67 = sadd.s32 %s33, 1
      %s68 = ssub.s32 %s25, %s37
      %s69 = ssub.s32 %s66, %s67
      %s70 = sor.u32 %s68, %s69
      %p71 = scmp.eq.s32.totalorder %s70, 0
      %s73 = sadd.s32 %s72, 1
      %s74 = scalar_select %p71, %s72, %s73
      %p77 = pneg %p71
      %p78 = scmp.eq.s32.totalorder %s18, 1
      %p79 = por %p77, %p78
      %p80 = scmp.ne.s32.totalorder %s72, %s75
      %p81 = scmp.eq.s32.totalorder %s18, 0
      %p82 = por %p80, %p81
      %p83 = scmp.ne.s32.totalorder %s72, %s75
      %p84 = scmp.eq.s32.totalorder %s23, 1
      %p85 = por %p83, %p84
      %p86 = scmp.ne.s32.totalorder %s75, %s76
      %p87 = scmp.eq.s32.totalorder %s23, 0
      %p88 = por %p86, %p87
      %p89 = scmp.ne.s32.totalorder %s75, %s76
      %p90 = scmp.eq.s32.totalorder %s24, 1
      %p91 = por %p89, %p90
      %p93 = scmp.ne.s32.totalorder %s76, %s92
      %p94 = scmp.eq.s32.totalorder %s24, 0
      %p95 = por %p93, %p94
      %s96 = sadd.s32 %s26, 2
      %s97 = sadd.s32 %s33, 2
      %s98 = ssub.s32 %s25, %s37
      %s99 = ssub.s32 %s96, %s97
      %s100 = sor.u32 %s98, %s99
      %p101 = scmp.eq.s32.totalorder %s100, 0
      %s103 = sadd.s32 %s102, 1
      %s104 = scalar_select %p101, %s102, %s103
      %p107 = pneg %p101
      %p108 = scmp.eq.s32.totalorder %s18, 1
      %p109 = por %p107, %p108
      %p110 = scmp.ne.s32.totalorder %s102, %s105
      %p111 = scmp.eq.s32.totalorder %s18, 0
      %p112 = por %p110, %p111
      %p113 = scmp.ne.s32.totalorder %s102, %s105
      %p114 = scmp.eq.s32.totalorder %s23, 1
      %p115 = por %p113, %p114
      %p116 = scmp.ne.s32.totalorder %s105, %s106
      %p117 = scmp.eq.s32.totalorder %s23, 0
      %p118 = por %p116, %p117
      %p119 = scmp.ne.s32.totalorder %s105, %s106
      %p120 = scmp.eq.s32.totalorder %s24, 1
      %p121 = por %p119, %p120
      %p123 = scmp.ne.s32.totalorder %s106, %s122
      %p124 = scmp.eq.s32.totalorder %s24, 0
      %p125 = por %p123, %p124
      %s126 = sadd.s32 %s26, 3
      %s127 = sadd.s32 %s33, 3
      %s128 = ssub.s32 %s25, %s37
      %s129 = ssub.s32 %s126, %s127
      %s130 = sor.u32 %s128, %s129
      %p131 = scmp.eq.s32.totalorder %s130, 0
      %s133 = sadd.s32 %s132, 1
      %s134 = scalar_select %p131, %s132, %s133
      %p137 = pneg %p131
      %p138 = scmp.eq.s32.totalorder %s18, 1
      %p139 = por %p137, %p138
      %p140 = scmp.ne.s32.totalorder %s132, %s135
      %p141 = scmp.eq.s32.totalorder %s18, 0
      %p142 = por %p140, %p141
      %p143 = scmp.ne.s32.totalorder %s132, %s135
      %p144 = scmp.eq.s32.totalorder %s23, 1
      %p145 = por %p143, %p144
      %p146 = scmp.ne.s32.totalorder %s135, %s136
      %p147 = scmp.eq.s32.totalorder %s23, 0
      %p148 = por %p146, %p147
      %p149 = scmp.ne.s32.totalorder %s135, %s136
      %p150 = scmp.eq.s32.totalorder %s24, 1
      %p151 = por %p149, %p150
      %p153 = scmp.ne.s32.totalorder %s136, %s152
      %p154 = scmp.eq.s32.totalorder %s24, 0
      %p155 = por %p153, %p154
      %s156 = ssub.s32 %s26, %s33
      %p157 = scmp.eq.s32.totalorder %s156, 0
      %s159 = sadd.s32 %s158, 1
      %s160 = scalar_select %p157, %s158, %s159
      %p163 = pneg %p157
      %p164 = scmp.eq.s32.totalorder %s18, 1
      %p165 = por %p163, %p164
      %p166 = scmp.ne.s32.totalorder %s158, %s161
      %p167 = scmp.eq.s32.totalorder %s18, 0
      %p168 = por %p166, %p167
      %p169 = scmp.ne.s32.totalorder %s158, %s161
      %p170 = scmp.eq.s32.totalorder %s23, 1
      %p171 = por %p169, %p170
      %p172 = scmp.ne.s32.totalorder %s161, %s162
      %p173 = scmp.eq.s32.totalorder %s23, 0
      %p174 = por %p172, %p173
      %p175 = scmp.ne.s32.totalorder %s161, %s162
      %p176 = scmp.eq.s32.totalorder %s24, 1
      %p177 = por %p175, %p176
      %p179 = scmp.ne.s32.totalorder %s162, %s178
      %p180 = scmp.eq.s32.totalorder %s24, 0
      %p181 = por %p179, %p180
      %s182 = ssub.s32 %s26, %s33
      %p183 = scmp.eq.s32.totalorder %s182, 0
      %s185 = sadd.s32 %s184, 1
      %s186 = scalar_select %p183, %s184, %s185
      %p189 = pneg %p183
      %p190 = scmp.eq.s32.totalorder %s18, 1
      %p191 = por %p189, %p190
      %p192 = scmp.ne.s32.totalorder %s184, %s187
      %p193 = scmp.eq.s32.totalorder %s18, 0
      %p194 = por %p192, %p193
      %p195 = scmp.ne.s32.totalorder %s184, %s187
      %p196 = scmp.eq.s32.totalorder %s23, 1
      %p197 = por %p195, %p196
      %p198 = scmp.ne.s32.totalorder %s187, %s188
      %p199 = scmp.eq.s32.totalorder %s23, 0
      %p200 = por %p198, %p199
      %p201 = scmp.ne.s32.totalorder %s187, %s188
      %p202 = scmp.eq.s32.totalorder %s24, 1
      %p203 = por %p201, %p202
      %p205 = scmp.ne.s32.totalorder %s188, %s204
      %p206 = scmp.eq.s32.totalorder %s24, 0
      %p207 = por %p205, %p206
      %s208 = ssub.s32 %s26, %s33
      %p209 = scmp.eq.s32.totalorder %s208, 0
      %s211 = sadd.s32 %s210, 1
      %s212 = scalar_select %p209, %s210, %s211
      %p215 = pneg %p209
      %p216 = scmp.eq.s32.totalorder %s18, 1
      %p217 = por %p215, %p216
      %p218 = scmp.ne.s32.totalorder %s210, %s213
      %p219 = scmp.eq.s32.totalorder %s18, 0
      %p220 = por %p218, %p219
      %p221 = scmp.ne.s32.totalorder %s210, %s213
      %p222 = scmp.eq.s32.totalorder %s23, 1
      %p223 = por %p221, %p222
      %p224 = scmp.ne.s32.totalorder %s213, %s214
      %p225 = scmp.eq.s32.totalorder %s23, 0
      %p226 = por %p224, %p225
      %p227 = scmp.ne.s32.totalorder %s213, %s214
      %p228 = scmp.eq.s32.totalorder %s24, 1
      %p229 = por %p227, %p228
      %p231 = scmp.ne.s32.totalorder %s214, %s230
      %p232 = scmp.eq.s32.totalorder %s24, 0
      %p233 = por %p231, %p232
      %s234 = ssub.s32 %s26, %s33
      %p235 = scmp.eq.s32.totalorder %s234, 0
      %s237 = sadd.s32 %s236, 1
      %s238 = scalar_select %p235, %s236, %s237
      %p241 = pneg %p235
      %p242 = scmp.eq.s32.totalorder %s18, 1
      %p243 = por %p241, %p242
      %p244 = scmp.ne.s32.totalorder %s236, %s239
      %p245 = scmp.eq.s32.totalorder %s18, 0
      %p246 = por %p244, %p245
      %p247 = scmp.ne.s32.totalorder %s236, %s239
      %p248 = scmp.eq.s32.totalorder %s23, 1
      %p249 = por %p247, %p248
      %p250 = scmp.ne.s32.totalorder %s239, %s240
      %p251 = scmp.eq.s32.totalorder %s23, 0
      %p252 = por %p250, %p251
      %p253 = scmp.ne.s32.totalorder %s239, %s240
      %p254 = scmp.eq.s32.totalorder %s24, 1
      %p255 = por %p253, %p254
      %p257 = scmp.ne.s32.totalorder %s240, %s256
      %p258 = scmp.eq.s32.totalorder %s24, 0
      %p259 = por %p257, %p258
      %s261 = sadd.s32 %s260, 1
      %p264 = scmp.eq.s32.totalorder %s18, 1
      %p265 = scmp.ne.s32.totalorder %s260, %s262
      %p266 = scmp.eq.s32.totalorder %s18, 0
      %p267 = por %p265, %p266
      %p268 = scmp.ne.s32.totalorder %s260, %s262
      %p269 = scmp.eq.s32.totalorder %s23, 1
      %p270 = por %p268, %p269
      %p271 = scmp.ne.s32.totalorder %s262, %s263
      %p272 = scmp.eq.s32.totalorder %s23, 0
      %p273 = por %p271, %p272
      %p274 = scmp.ne.s32.totalorder %s262, %s263
      %p275 = scmp.eq.s32.totalorder %s24, 1
      %p276 = por %p274, %p275
      %p278 = scmp.ne.s32.totalorder %s263, %s277
      %p279 = scmp.eq.s32.totalorder %s24, 0
      %p280 = por %p278, %p279
      %s281 = ssub.s32 %s25, %s37
      %p282 = scmp.eq.s32.totalorder %s281, 0
      %s284 = sadd.s32 %s283, 1
      %s285 = scalar_select %p282, %s283, %s284
      %p288 = pneg %p282
      %p289 = scmp.eq.s32.totalorder %s18, 1
      %p290 = por %p288, %p289
      %p291 = scmp.ne.s32.totalorder %s283, %s286
      %p292 = scmp.eq.s32.totalorder %s18, 0
      %p293 = por %p291, %p292
      %p294 = scmp.ne.s32.totalorder %s283, %s286
      %p295 = scmp.eq.s32.totalorder %s23, 1
      %p296 = por %p294, %p295
      %p297 = scmp.ne.s32.totalorder %s286, %s287
      %p298 = scmp.eq.s32.totalorder %s23, 0
      %p299 = por %p297, %p298
      %p300 = scmp.ne.s32.totalorder %s286, %s287
      %p301 = scmp.eq.s32.totalorder %s24, 1
      %p302 = por %p300, %p301
      %p304 = scmp.ne.s32.totalorder %s287, %s303
      %p305 = scmp.eq.s32.totalorder %s24, 0
      %p306 = por %p304, %p305
      %p307 = scmp.le.s32.totalorder 1, %s18
      %p308 = scmp.lt.s32.totalorder %s18, 3
      %p309 = pnand %p307, %p308
      %p310 = pneg %p309
      // Predicated region
      $region9: #{quaternion_linear_pallas.1} parent=5 // pred_check
        _
      $region10: #{quaternion_linear_pallas.1} parent=5 // pred_check_branch
        %312 = sbr.rel (%p309) target = $region12
      $region11: #{quaternion_linear_pallas.1} parent=5 // pred_region
        %s313 = ssub.s32 %s18, 1
        // Predicated region
        $region13: #{quaternion_linear_pallas.1} parent=11 // pred_check
          %p314 = pneg %p174
        $region14: #{quaternion_linear_pallas.1} parent=11 // pred_check_branch
          %316 = sbr.rel (%p314) target = $region16
        $region15: #{quaternion_linear_pallas.1} parent=11 // pred_region
          %s317 = smul.u32 32, %s28
          %p318 = scmp.lt.s32.totalorder %s317, 31
          %s319 = scalar_select %p318, %s317, 31
          %s320 = smul.addr %s319, 4
          %s321 = scalar_lea.vmem %s4, %s320
          %s322 = smul.u32 32, %s28
        $region16: #{quaternion_linear_pallas.1} parent=11 // pred_fallthru
          _
        // Predicated region
        $region17: #{quaternion_linear_pallas.1} parent=11 // pred_check
          %p323 = pneg %p200
        $region18: #{quaternion_linear_pallas.1} parent=11 // pred_check_branch
          %325 = sbr.rel (%p323) target = $region20
        $region19: #{quaternion_linear_pallas.1} parent=11 // pred_region
          %s326 = smul.u32 32, %s28
          %p327 = scmp.lt.s32.totalorder %s326, 31
          %s328 = scalar_select %p327, %s326, 31
          %s329 = smul.addr %s328, 4
          %s330 = scalar_lea.vmem %s5, %s329
          %s331 = smul.u32 32, %s28
        $region20: #{quaternion_linear_pallas.1} parent=11 // pred_fallthru
          _
        // Predicated region
        $region21: #{quaternion_linear_pallas.1} parent=11 // pred_check
          %p332 = pneg %p226
        $region22: #{quaternion_linear_pallas.1} parent=11 // pred_check_branch
          %334 = sbr.rel (%p332) target = $region24
        $region23: #{quaternion_linear_pallas.1} parent=11 // pred_region
          %s335 = smul.u32 32, %s28
          %p336 = scmp.lt.s32.totalorder %s335, 31
          %s337 = scalar_select %p336, %s335, 31
          %s338 = smul.addr %s337, 4
          %s339 = scalar_lea.vmem %s6, %s338
          %s340 = smul.u32 32, %s28
        $region24: #{quaternion_linear_pallas.1} parent=11 // pred_fallthru
          _
        // Predicated region
        $region25: #{quaternion_linear_pallas.1} parent=11 // pred_check
          %p341 = pneg %p252
        $region26: #{quaternion_linear_pallas.1} parent=11 // pred_check_branch
          %343 = sbr.rel (%p341) target = $region28
        $region27: #{quaternion_linear_pallas.1} parent=11 // pred_region
          %s344 = smul.u32 32, %s28
          %p345 = scmp.lt.s32.totalorder %s344, 31
          %s346 = scalar_select %p345, %s344, 31
          %s347 = smul.addr %s346, 4
          %s348 = scalar_lea.vmem %s7, %s347
          %s349 = smul.u32 32, %s28
        $region28: #{quaternion_linear_pallas.1} parent=11 // pred_fallthru
          _
        // Predicated region
        $region29: #{quaternion_linear_pallas.1} parent=11 // pred_check
          %p350 = pneg %p273
        $region30: #{quaternion_linear_pallas.1} parent=11 // pred_check_branch
          %352 = sbr.rel (%p350) target = $region32
        $region31: #{quaternion_linear_pallas.1} parent=11 // pred_region
          _
        $region32: #{quaternion_linear_pallas.1} parent=11 // pred_fallthru
          _
      $region12: #{quaternion_linear_pallas.1} parent=5 // pred_fallthru
        _
      %p353 = scmp.lt.s32.totalorder %s18, 2
      // Predicated region
      $region33: #{quaternion_linear_pallas.1} parent=5 // pred_check
        %p354 = pneg %p353
      $region34: #{quaternion_linear_pallas.1} parent=5 // pred_check_branch
        %356 = sbr.rel (%p354) target = $region36
      $region35: #{quaternion_linear_pallas.1} parent=5 // pred_region
        // Predicated region
        $region37: #{quaternion_linear_pallas.1} parent=35 // pred_check
          %p357 = pneg %p52
        $region38: #{quaternion_linear_pallas.1} parent=35 // pred_check_branch
          %359 = sbr.rel (%p357) target = $region40
        $region39: #{quaternion_linear_pallas.1} parent=35 // pred_region
          %s360 = sand.u32 %s42, 1
          %s361 = sand.u32 %s42, 1
          %s362 = smul.addr %s361, 128
          %s363 = scalar_lea.vmem [#allocation2], %s362
          %s364 = smul.u32 16, %s25
          %s365 = smul.u32 2, %s26
          %s366 = smul.addr %s364, 8
          %s367 = sadd.s32 %s365, %s366
          %s368 = smul.addr %s367, 4
          %s369 = scalar_lea.vmem %s0, %s368
          // Predicated region
          $region41: #{quaternion_linear_pallas.1} parent=39 // pred_check
            _
          $region42: #{quaternion_linear_pallas.1} parent=39 // pred_check_branch
            %371 = sbr.rel (0) target = $region44
          $region43: #{quaternion_linear_pallas.1} parent=39 // pred_region
            // Predicated region
            $region45: #{quaternion_linear_pallas.1} parent=43 // pred_check
              _
            $region46: #{quaternion_linear_pallas.1} parent=43 // pred_check_branch
              %373 = sbr.rel (0) target = $region48
            $region47: #{quaternion_linear_pallas.1} parent=43 // pred_region
              // Predicated region
              $region60: #{quaternion_linear_pallas.1} parent=47 // pred_check
                _
              $region61: #{quaternion_linear_pallas.1} parent=47 // pred_check_branch
                %419 = sbr.rel (0) target = $region63
              $region62: #{quaternion_linear_pallas.1} parent=47 // pred_region
                loop: start=0, step=1, limit=1
                $region64: #{quaternion_linear_pallas.1} parent=62 // loop_pre_header
                  _
                $region65: #{quaternion_linear_pallas.1} parent=62 // loop_header
                  %s421 = sphi 0, %s425
                  %p422 = scmp.ge.s32.totalorder %s421, 1
                  %s426 = sphi %s369, %s369
                  %s427 = sphi %s363, %s363
                $region66: #{quaternion_linear_pallas.1} parent=62 // loop_header_branch
                  %424 = sbr.rel (%p422) target = $region70
                $region67: #{quaternion_linear_pallas.1} parent=62 // loop_body
                  %v428 = vld [vmem:[%s426] sm:$0xff]
                  %429 = vst [vmem:[%s427] sm:$0xff] %v428
                  %v430 = vld [vmem:[%s426 + $0x20] sm:$0xff]
                  %431 = vst [vmem:[%s427 + $0x8] sm:$0xff] %v430
                  %v432 = vld [vmem:[%s426 + $0x40] sm:$0xff]
                  %433 = vst [vmem:[%s427 + $0x10] sm:$0xff] %v432
                  %v434 = vld [vmem:[%s426 + $0x60] sm:$0xff]
                  %435 = vst [vmem:[%s427 + $0x18] sm:$0xff] %v434
                  %v436 = vld [vmem:[%s426 + $0x80] sm:$0xff]
                  %437 = vst [vmem:[%s427 + $0x20] sm:$0xff] %v436
                  %v438 = vld [vmem:[%s426 + $0xa0] sm:$0xff]
                  %439 = vst [vmem:[%s427 + $0x28] sm:$0xff] %v438
                  %v440 = vld [vmem:[%s426 + $0xc0] sm:$0xff]
                  %441 = vst [vmem:[%s427 + $0x30] sm:$0xff] %v440
                  %v442 = vld [vmem:[%s426 + $0xe0] sm:$0xff]
                  %443 = vst [vmem:[%s427 + $0x38] sm:$0xff] %v442
                  %v444 = vld [vmem:[%s426 + $0x100] sm:$0xff]
                  %445 = vst [vmem:[%s427 + $0x40] sm:$0xff] %v444
                  %v446 = vld [vmem:[%s426 + $0x120] sm:$0xff]
                  %447 = vst [vmem:[%s427 + $0x48] sm:$0xff] %v446
                  %v448 = vld [vmem:[%s426 + $0x140] sm:$0xff]
                  %449 = vst [vmem:[%s427 + $0x50] sm:$0xff] %v448
                  %v450 = vld [vmem:[%s426 + $0x160] sm:$0xff]
                  %451 = vst [vmem:[%s427 + $0x58] sm:$0xff] %v450
                  %v452 = vld [vmem:[%s426 + $0x180] sm:$0xff]
                  %453 = vst [vmem:[%s427 + $0x60] sm:$0xff] %v452
                  %v454 = vld [vmem:[%s426 + $0x1a0] sm:$0xff]
                  %455 = vst [vmem:[%s427 + $0x68] sm:$0xff] %v454
                  %v456 = vld [vmem:[%s426 + $0x1c0] sm:$0xff]
                  %457 = vst [vmem:[%s427 + $0x70] sm:$0xff] %v456
                  %v458 = vld [vmem:[%s426 + $0x1e0] sm:$0xff]
                  %459 = vst [vmem:[%s427 + $0x78] sm:$0xff] %v458
                $region68: #{quaternion_linear_pallas.1} parent=62 // loop_footer
                  %s425 = sadd.s32 1, %s421
                $region69: #{quaternion_linear_pallas.1} parent=62 // loop_footer_branch
                  %420 = sbr.rel target = $region65
                $region70: #{quaternion_linear_pallas.1} parent=62 // loop_exit
                  _
              $region63: #{quaternion_linear_pallas.1} parent=47 // pred_fallthru
                _
              // Predicated region
              $region71: #{quaternion_linear_pallas.1} parent=47 // pred_check
                _
              $region72: #{quaternion_linear_pallas.1} parent=47 // pred_check_branch
                %461 = sbr.rel target = $region74
              $region73: #{quaternion_linear_pallas.1} parent=47 // pred_region
                _
              $region74: #{quaternion_linear_pallas.1} parent=47 // pred_fallthru
                _
            $region48: #{quaternion_linear_pallas.1} parent=43 // pred_fallthru
              _
            // Predicated region
            $region49: #{quaternion_linear_pallas.1} parent=43 // pred_check
              _
            $region50: #{quaternion_linear_pallas.1} parent=43 // pred_check_branch
              %375 = sbr.rel target = $region52
            $region51: #{quaternion_linear_pallas.1} parent=43 // pred_region
              %s377 = ssub.s32 256, 1
              loop: start=0, step=1, limit=1
              $region53: #{quaternion_linear_pallas.1} parent=51 // loop_pre_header
                _
              $region54: #{quaternion_linear_pallas.1} parent=51 // loop_header
                %s379 = sphi 0, %s383
                %p380 = scmp.ge.s32.totalorder %s379, 1
                %s384 = sphi %s369, %s369
                %s385 = sphi %s363, %s363
              $region55: #{quaternion_linear_pallas.1} parent=51 // loop_header_branch
                %382 = sbr.rel (%p380) target = $region59
              $region56: #{quaternion_linear_pallas.1} parent=51 // loop_body
                %v386 = vld [vmem:[%s384] sm:%s377]
                %387 = vst [vmem:[%s385] sm:%s377] %v386
                %v388 = vld [vmem:[%s384 + $0x20] sm:%s377]
                %389 = vst [vmem:[%s385 + $0x8] sm:%s377] %v388
                %v390 = vld [vmem:[%s384 + $0x40] sm:%s377]
                %391 = vst [vmem:[%s385 + $0x10] sm:%s377] %v390
                %v392 = vld [vmem:[%s384 + $0x60] sm:%s377]
                %393 = vst [vmem:[%s385 + $0x18] sm:%s377] %v392
                %v394 = vld [vmem:[%s384 + $0x80] sm:%s377]
                %395 = vst [vmem:[%s385 + $0x20] sm:%s377] %v394
                %v396 = vld [vmem:[%s384 + $0xa0] sm:%s377]
                %397 = vst [vmem:[%s385 + $0x28] sm:%s377] %v396
                %v398 = vld [vmem:[%s384 + $0xc0] sm:%s377]
                %399 = vst [vmem:[%s385 + $0x30] sm:%s377] %v398
                %v400 = vld [vmem:[%s384 + $0xe0] sm:%s377]
                %401 = vst [vmem:[%s385 + $0x38] sm:%s377] %v400
                %v402 = vld [vmem:[%s384 + $0x100] sm:%s377]
                %403 = vst [vmem:[%s385 + $0x40] sm:%s377] %v402
                %v404 = vld [vmem:[%s384 + $0x120] sm:%s377]
                %405 = vst [vmem:[%s385 + $0x48] sm:%s377] %v404
                %v406 = vld [vmem:[%s384 + $0x140] sm:%s377]
                %407 = vst [vmem:[%s385 + $0x50] sm:%s377] %v406
                %v408 = vld [vmem:[%s384 + $0x160] sm:%s377]
                %409 = vst [vmem:[%s385 + $0x58] sm:%s377] %v408
                %v410 = vld [vmem:[%s384 + $0x180] sm:%s377]
                %411 = vst [vmem:[%s385 + $0x60] sm:%s377] %v410
                %v412 = vld [vmem:[%s384 + $0x1a0] sm:%s377]
                %413 = vst [vmem:[%s385 + $0x68] sm:%s377] %v412
                %v414 = vld [vmem:[%s384 + $0x1c0] sm:%s377]
                %415 = vst [vmem:[%s385 + $0x70] sm:%s377] %v414
                %v416 = vld [vmem:[%s384 + $0x1e0] sm:%s377]
                %417 = vst [vmem:[%s385 + $0x78] sm:%s377] %v416
              $region57: #{quaternion_linear_pallas.1} parent=51 // loop_footer
                %s383 = sadd.s32 1, %s379
              $region58: #{quaternion_linear_pallas.1} parent=51 // loop_footer_branch
                %378 = sbr.rel target = $region54
              $region59: #{quaternion_linear_pallas.1} parent=51 // loop_exit
                _
            $region52: #{quaternion_linear_pallas.1} parent=43 // pred_fallthru
              _
          $region44: #{quaternion_linear_pallas.1} parent=39 // pred_fallthru
            _
          %462 = vnop
        $region40: #{quaternion_linear_pallas.1} parent=35 // pred_fallthru
          _
        // Predicated region
        $region75: #{quaternion_linear_pallas.1} parent=35 // pred_check
          %p463 = pneg %p82
        $region76: #{quaternion_linear_pallas.1} parent=35 // pred_check_branch
          %465 = sbr.rel (%p463) target = $region78
        $region77: #{quaternion_linear_pallas.1} parent=35 // pred_region
          %s466 = sand.u32 %s72, 1
          %s467 = sand.u32 %s72, 1
          %s468 = smul.addr %s467, 128
          %s469 = scalar_lea.vmem [#allocation3], %s468
          %s470 = sadd.s32 %s26, 1
          %s471 = smul.u32 16, %s25
          %s472 = smul.u32 2, %s470
          %s473 = smul.addr %s471, 8
          %s474 = sadd.s32 %s472, %s473
          %s475 = smul.addr %s474, 4
          %s476 = scalar_lea.vmem %s1, %s475
          // Predicated region
          $region79: #{quaternion_linear_pallas.1} parent=77 // pred_check
            _
          $region80: #{quaternion_linear_pallas.1} parent=77 // pred_check_branch
            %478 = sbr.rel (0) target = $region82
          $region81: #{quaternion_linear_pallas.1} parent=77 // pred_region
            // Predicated region
            $region83: #{quaternion_linear_pallas.1} parent=81 // pred_check
              _
            $region84: #{quaternion_linear_pallas.1} parent=81 // pred_check_branch
              %480 = sbr.rel (0) target = $region86
            $region85: #{quaternion_linear_pallas.1} parent=81 // pred_region
              // Predicated region
              $region98: #{quaternion_linear_pallas.1} parent=85 // pred_check
                _
              $region99: #{quaternion_linear_pallas.1} parent=85 // pred_check_branch
                %526 = sbr.rel (0) target = $region101
              $region100: #{quaternion_linear_pallas.1} parent=85 // pred_region
                loop: start=0, step=1, limit=1
                $region102: #{quaternion_linear_pallas.1} parent=100 // loop_pre_header
                  _
                $region103: #{quaternion_linear_pallas.1} parent=100 // loop_header
                  %s528 = sphi 0, %s532
                  %p529 = scmp.ge.s32.totalorder %s528, 1
                  %s533 = sphi %s476, %s476
                  %s534 = sphi %s469, %s469
                $region104: #{quaternion_linear_pallas.1} parent=100 // loop_header_branch
                  %531 = sbr.rel (%p529) target = $region108
                $region105: #{quaternion_linear_pallas.1} parent=100 // loop_body
                  %v535 = vld [vmem:[%s533] sm:$0xff]
                  %536 = vst [vmem:[%s534] sm:$0xff] %v535
                  %v537 = vld [vmem:[%s533 + $0x20] sm:$0xff]
                  %538 = vst [vmem:[%s534 + $0x8] sm:$0xff] %v537
                  %v539 = vld [vmem:[%s533 + $0x40] sm:$0xff]
                  %540 = vst [vmem:[%s534 + $0x10] sm:$0xff] %v539
                  %v541 = vld [vmem:[%s533 + $0x60] sm:$0xff]
                  %542 = vst [vmem:[%s534 + $0x18] sm:$0xff] %v541
                  %v543 = vld [vmem:[%s533 + $0x80] sm:$0xff]
                  %544 = vst [vmem:[%s534 + $0x20] sm:$0xff] %v543
                  %v545 = vld [vmem:[%s533 + $0xa0] sm:$0xff]
                  %546 = vst [vmem:[%s534 + $0x28] sm:$0xff] %v545
                  %v547 = vld [vmem:[%s533 + $0xc0] sm:$0xff]
                  %548 = vst [vmem:[%s534 + $0x30] sm:$0xff] %v547
                  %v549 = vld [vmem:[%s533 + $0xe0] sm:$0xff]
                  %550 = vst [vmem:[%s534 + $0x38] sm:$0xff] %v549
                  %v551 = vld [vmem:[%s533 + $0x100] sm:$0xff]
                  %552 = vst [vmem:[%s534 + $0x40] sm:$0xff] %v551
                  %v553 = vld [vmem:[%s533 + $0x120] sm:$0xff]
                  %554 = vst [vmem:[%s534 + $0x48] sm:$0xff] %v553
                  %v555 = vld [vmem:[%s533 + $0x140] sm:$0xff]
                  %556 = vst [vmem:[%s534 + $0x50] sm:$0xff] %v555
                  %v557 = vld [vmem:[%s533 + $0x160] sm:$0xff]
                  %558 = vst [vmem:[%s534 + $0x58] sm:$0xff] %v557
                  %v559 = vld [vmem:[%s533 + $0x180] sm:$0xff]
                  %560 = vst [vmem:[%s534 + $0x60] sm:$0xff] %v559
                  %v561 = vld [vmem:[%s533 + $0x1a0] sm:$0xff]
                  %562 = vst [vmem:[%s534 + $0x68] sm:$0xff] %v561
                  %v563 = vld [vmem:[%s533 + $0x1c0] sm:$0xff]
                  %564 = vst [vmem:[%s534 + $0x70] sm:$0xff] %v563
                  %v565 = vld [vmem:[%s533 + $0x1e0] sm:$0xff]
                  %566 = vst [vmem:[%s534 + $0x78] sm:$0xff] %v565
                $region106: #{quaternion_linear_pallas.1} parent=100 // loop_footer
                  %s532 = sadd.s32 1, %s528
                $region107: #{quaternion_linear_pallas.1} parent=100 // loop_footer_branch
                  %527 = sbr.rel target = $region103
                $region108: #{quaternion_linear_pallas.1} parent=100 // loop_exit
                  _
              $region101: #{quaternion_linear_pallas.1} parent=85 // pred_fallthru
                _
              // Predicated region
              $region109: #{quaternion_linear_pallas.1} parent=85 // pred_check
                _
              $region110: #{quaternion_linear_pallas.1} parent=85 // pred_check_branch
                %568 = sbr.rel target = $region112
              $region111: #{quaternion_linear_pallas.1} parent=85 // pred_region
                _
              $region112: #{quaternion_linear_pallas.1} parent=85 // pred_fallthru
                _
            $region86: #{quaternion_linear_pallas.1} parent=81 // pred_fallthru
              _
            // Predicated region
            $region87: #{quaternion_linear_pallas.1} parent=81 // pred_check
              _
            $region88: #{quaternion_linear_pallas.1} parent=81 // pred_check_branch
              %482 = sbr.rel target = $region90
            $region89: #{quaternion_linear_pallas.1} parent=81 // pred_region
              %s484 = ssub.s32 256, 1
              loop: start=0, step=1, limit=1
              $region91: #{quaternion_linear_pallas.1} parent=89 // loop_pre_header
                _
              $region92: #{quaternion_linear_pallas.1} parent=89 // loop_header
                %s486 = sphi 0, %s490
                %p487 = scmp.ge.s32.totalorder %s486, 1
                %s491 = sphi %s476, %s476
                %s492 = sphi %s469, %s469
              $region93: #{quaternion_linear_pallas.1} parent=89 // loop_header_branch
                %489 = sbr.rel (%p487) target = $region97
              $region94: #{quaternion_linear_pallas.1} parent=89 // loop_body
                %v493 = vld [vmem:[%s491] sm:%s484]
                %494 = vst [vmem:[%s492] sm:%s484] %v493
                %v495 = vld [vmem:[%s491 + $0x20] sm:%s484]
                %496 = vst [vmem:[%s492 + $0x8] sm:%s484] %v495
                %v497 = vld [vmem:[%s491 + $0x40] sm:%s484]
                %498 = vst [vmem:[%s492 + $0x10] sm:%s484] %v497
                %v499 = vld [vmem:[%s491 + $0x60] sm:%s484]
                %500 = vst [vmem:[%s492 + $0x18] sm:%s484] %v499
                %v501 = vld [vmem:[%s491 + $0x80] sm:%s484]
                %502 = vst [vmem:[%s492 + $0x20] sm:%s484] %v501
                %v503 = vld [vmem:[%s491 + $0xa0] sm:%s484]
                %504 = vst [vmem:[%s492 + $0x28] sm:%s484] %v503
                %v505 = vld [vmem:[%s491 + $0xc0] sm:%s484]
                %506 = vst [vmem:[%s492 + $0x30] sm:%s484] %v505
                %v507 = vld [vmem:[%s491 + $0xe0] sm:%s484]
                %508 = vst [vmem:[%s492 + $0x38] sm:%s484] %v507
                %v509 = vld [vmem:[%s491 + $0x100] sm:%s484]
                %510 = vst [vmem:[%s492 + $0x40] sm:%s484] %v509
                %v511 = vld [vmem:[%s491 + $0x120] sm:%s484]
                %512 = vst [vmem:[%s492 + $0x48] sm:%s484] %v511
                %v513 = vld [vmem:[%s491 + $0x140] sm:%s484]
                %514 = vst [vmem:[%s492 + $0x50] sm:%s484] %v513
                %v515 = vld [vmem:[%s491 + $0x160] sm:%s484]
                %516 = vst [vmem:[%s492 + $0x58] sm:%s484] %v515
                %v517 = vld [vmem:[%s491 + $0x180] sm:%s484]
                %518 = vst [vmem:[%s492 + $0x60] sm:%s484] %v517
                %v519 = vld [vmem:[%s491 + $0x1a0] sm:%s484]
                %520 = vst [vmem:[%s492 + $0x68] sm:%s484] %v519
                %v521 = vld [vmem:[%s491 + $0x1c0] sm:%s484]
                %522 = vst [vmem:[%s492 + $0x70] sm:%s484] %v521
                %v523 = vld [vmem:[%s491 + $0x1e0] sm:%s484]
                %524 = vst [vmem:[%s492 + $0x78] sm:%s484] %v523
              $region95: #{quaternion_linear_pallas.1} parent=89 // loop_footer
                %s490 = sadd.s32 1, %s486
              $region96: #{quaternion_linear_pallas.1} parent=89 // loop_footer_branch
                %485 = sbr.rel target = $region92
              $region97: #{quaternion_linear_pallas.1} parent=89 // loop_exit
                _
            $region90: #{quaternion_linear_pallas.1} parent=81 // pred_fallthru
              _
          $region82: #{quaternion_linear_pallas.1} parent=77 // pred_fallthru
            _
          %569 = vnop
        $region78: #{quaternion_linear_pallas.1} parent=35 // pred_fallthru
          _
        // Predicated region
        $region113: #{quaternion_linear_pallas.1} parent=35 // pred_check
          %p570 = pneg %p112
        $region114: #{quaternion_linear_pallas.1} parent=35 // pred_check_branch
          %572 = sbr.rel (%p570) target = $region116
        $region115: #{quaternion_linear_pallas.1} parent=35 // pred_region
          %s573 = sand.u32 %s102, 1
          %s574 = sand.u32 %s102, 1
          %s575 = smul.addr %s574, 128
          %s576 = scalar_lea.vmem [#allocation4], %s575
          %s577 = sadd.s32 %s26, 2
          %s578 = smul.u32 16, %s25
          %s579 = smul.u32 2, %s577
          %s580 = smul.addr %s578, 8
          %s581 = sadd.s32 %s579, %s580
          %s582 = smul.addr %s581, 4
          %s583 = scalar_lea.vmem %s2, %s582
          // Predicated region
          $region117: #{quaternion_linear_pallas.1} parent=115 // pred_check
            _
          $region118: #{quaternion_linear_pallas.1} parent=115 // pred_check_branch
            %585 = sbr.rel (0) target = $region120
          $region119: #{quaternion_linear_pallas.1} parent=115 // pred_region
            // Predicated region
            $region121: #{quaternion_linear_pallas.1} parent=119 // pred_check
              _
            $region122: #{quaternion_linear_pallas.1} parent=119 // pred_check_branch
              %587 = sbr.rel (0) target = $region124
            $region123: #{quaternion_linear_pallas.1} parent=119 // pred_region
              // Predicated region
              $region136: #{quaternion_linear_pallas.1} parent=123 // pred_check
                _
              $region137: #{quaternion_linear_pallas.1} parent=123 // pred_check_branch
                %633 = sbr.rel (0) target = $region139
              $region138: #{quaternion_linear_pallas.1} parent=123 // pred_region
                loop: start=0, step=1, limit=1
                $region140: #{quaternion_linear_pallas.1} parent=138 // loop_pre_header
                  _
                $region141: #{quaternion_linear_pallas.1} parent=138 // loop_header
                  %s635 = sphi 0, %s639
                  %p636 = scmp.ge.s32.totalorder %s635, 1
                  %s640 = sphi %s583, %s583
                  %s641 = sphi %s576, %s576
                $region142: #{quaternion_linear_pallas.1} parent=138 // loop_header_branch
                  %638 = sbr.rel (%p636) target = $region146
                $region143: #{quaternion_linear_pallas.1} parent=138 // loop_body
                  %v642 = vld [vmem:[%s640] sm:$0xff]
                  %643 = vst [vmem:[%s641] sm:$0xff] %v642
                  %v644 = vld [vmem:[%s640 + $0x20] sm:$0xff]
                  %645 = vst [vmem:[%s641 + $0x8] sm:$0xff] %v644
                  %v646 = vld [vmem:[%s640 + $0x40] sm:$0xff]
                  %647 = vst [vmem:[%s641 + $0x10] sm:$0xff] %v646
                  %v648 = vld [vmem:[%s640 + $0x60] sm:$0xff]
                  %649 = vst [vmem:[%s641 + $0x18] sm:$0xff] %v648
                  %v650 = vld [vmem:[%s640 + $0x80] sm:$0xff]
                  %651 = vst [vmem:[%s641 + $0x20] sm:$0xff] %v650
                  %v652 = vld [vmem:[%s640 + $0xa0] sm:$0xff]
                  %653 = vst [vmem:[%s641 + $0x28] sm:$0xff] %v652
                  %v654 = vld [vmem:[%s640 + $0xc0] sm:$0xff]
                  %655 = vst [vmem:[%s641 + $0x30] sm:$0xff] %v654
                  %v656 = vld [vmem:[%s640 + $0xe0] sm:$0xff]
                  %657 = vst [vmem:[%s641 + $0x38] sm:$0xff] %v656
                  %v658 = vld [vmem:[%s640 + $0x100] sm:$0xff]
                  %659 = vst [vmem:[%s641 + $0x40] sm:$0xff] %v658
                  %v660 = vld [vmem:[%s640 + $0x120] sm:$0xff]
                  %661 = vst [vmem:[%s641 + $0x48] sm:$0xff] %v660
                  %v662 = vld [vmem:[%s640 + $0x140] sm:$0xff]
                  %663 = vst [vmem:[%s641 + $0x50] sm:$0xff] %v662
                  %v664 = vld [vmem:[%s640 + $0x160] sm:$0xff]
                  %665 = vst [vmem:[%s641 + $0x58] sm:$0xff] %v664
                  %v666 = vld [vmem:[%s640 + $0x180] sm:$0xff]
                  %667 = vst [vmem:[%s641 + $0x60] sm:$0xff] %v666
                  %v668 = vld [vmem:[%s640 + $0x1a0] sm:$0xff]
                  %669 = vst [vmem:[%s641 + $0x68] sm:$0xff] %v668
                  %v670 = vld [vmem:[%s640 + $0x1c0] sm:$0xff]
                  %671 = vst [vmem:[%s641 + $0x70] sm:$0xff] %v670
                  %v672 = vld [vmem:[%s640 + $0x1e0] sm:$0xff]
                  %673 = vst [vmem:[%s641 + $0x78] sm:$0xff] %v672
                $region144: #{quaternion_linear_pallas.1} parent=138 // loop_footer
                  %s639 = sadd.s32 1, %s635
                $region145: #{quaternion_linear_pallas.1} parent=138 // loop_footer_branch
                  %634 = sbr.rel target = $region141
                $region146: #{quaternion_linear_pallas.1} parent=138 // loop_exit
                  _
              $region139: #{quaternion_linear_pallas.1} parent=123 // pred_fallthru
                _
              // Predicated region
              $region147: #{quaternion_linear_pallas.1} parent=123 // pred_check
                _
              $region148: #{quaternion_linear_pallas.1} parent=123 // pred_check_branch
                %675 = sbr.rel target = $region150
              $region149: #{quaternion_linear_pallas.1} parent=123 // pred_region
                _
              $region150: #{quaternion_linear_pallas.1} parent=123 // pred_fallthru
                _
            $region124: #{quaternion_linear_pallas.1} parent=119 // pred_fallthru
              _
            // Predicated region
            $region125: #{quaternion_linear_pallas.1} parent=119 // pred_check
              _
            $region126: #{quaternion_linear_pallas.1} parent=119 // pred_check_branch
              %589 = sbr.rel target = $region128
            $region127: #{quaternion_linear_pallas.1} parent=119 // pred_region
              %s591 = ssub.s32 256, 1
              loop: start=0, step=1, limit=1
              $region129: #{quaternion_linear_pallas.1} parent=127 // loop_pre_header
                _
              $region130: #{quaternion_linear_pallas.1} parent=127 // loop_header
                %s593 = sphi 0, %s597
                %p594 = scmp.ge.s32.totalorder %s593, 1
                %s598 = sphi %s583, %s583
                %s599 = sphi %s576, %s576
              $region131: #{quaternion_linear_pallas.1} parent=127 // loop_header_branch
                %596 = sbr.rel (%p594) target = $region135
              $region132: #{quaternion_linear_pallas.1} parent=127 // loop_body
                %v600 = vld [vmem:[%s598] sm:%s591]
                %601 = vst [vmem:[%s599] sm:%s591] %v600
                %v602 = vld [vmem:[%s598 + $0x20] sm:%s591]
                %603 = vst [vmem:[%s599 + $0x8] sm:%s591] %v602
                %v604 = vld [vmem:[%s598 + $0x40] sm:%s591]
                %605 = vst [vmem:[%s599 + $0x10] sm:%s591] %v604
                %v606 = vld [vmem:[%s598 + $0x60] sm:%s591]
                %607 = vst [vmem:[%s599 + $0x18] sm:%s591] %v606
                %v608 = vld [vmem:[%s598 + $0x80] sm:%s591]
                %609 = vst [vmem:[%s599 + $0x20] sm:%s591] %v608
                %v610 = vld [vmem:[%s598 + $0xa0] sm:%s591]
                %611 = vst [vmem:[%s599 + $0x28] sm:%s591] %v610
                %v612 = vld [vmem:[%s598 + $0xc0] sm:%s591]
                %613 = vst [vmem:[%s599 + $0x30] sm:%s591] %v612
                %v614 = vld [vmem:[%s598 + $0xe0] sm:%s591]
                %615 = vst [vmem:[%s599 + $0x38] sm:%s591] %v614
                %v616 = vld [vmem:[%s598 + $0x100] sm:%s591]
                %617 = vst [vmem:[%s599 + $0x40] sm:%s591] %v616
                %v618 = vld [vmem:[%s598 + $0x120] sm:%s591]
                %619 = vst [vmem:[%s599 + $0x48] sm:%s591] %v618
                %v620 = vld [vmem:[%s598 + $0x140] sm:%s591]
                %621 = vst [vmem:[%s599 + $0x50] sm:%s591] %v620
                %v622 = vld [vmem:[%s598 + $0x160] sm:%s591]
                %623 = vst [vmem:[%s599 + $0x58] sm:%s591] %v622
                %v624 = vld [vmem:[%s598 + $0x180] sm:%s591]
                %625 = vst [vmem:[%s599 + $0x60] sm:%s591] %v624
                %v626 = vld [vmem:[%s598 + $0x1a0] sm:%s591]
                %627 = vst [vmem:[%s599 + $0x68] sm:%s591] %v626
                %v628 = vld [vmem:[%s598 + $0x1c0] sm:%s591]
                %629 = vst [vmem:[%s599 + $0x70] sm:%s591] %v628
                %v630 = vld [vmem:[%s598 + $0x1e0] sm:%s591]
                %631 = vst [vmem:[%s599 + $0x78] sm:%s591] %v630
              $region133: #{quaternion_linear_pallas.1} parent=127 // loop_footer
                %s597 = sadd.s32 1, %s593
              $region134: #{quaternion_linear_pallas.1} parent=127 // loop_footer_branch
                %592 = sbr.rel target = $region130
              $region135: #{quaternion_linear_pallas.1} parent=127 // loop_exit
                _
            $region128: #{quaternion_linear_pallas.1} parent=119 // pred_fallthru
              _
          $region120: #{quaternion_linear_pallas.1} parent=115 // pred_fallthru
            _
          %676 = vnop
        $region116: #{quaternion_linear_pallas.1} parent=35 // pred_fallthru
          _
        // Predicated region
        $region151: #{quaternion_linear_pallas.1} parent=35 // pred_check
          %p677 = pneg %p142
        $region152: #{quaternion_linear_pallas.1} parent=35 // pred_check_branch
          %679 = sbr.rel (%p677) target = $region154
        $region153: #{quaternion_linear_pallas.1} parent=35 // pred_region
          %s680 = sand.u32 %s132, 1
          %s681 = sand.u32 %s132, 1
          %s682 = smul.addr %s681, 128
          %s683 = scalar_lea.vmem [#allocation5], %s682
          %s684 = sadd.s32 %s26, 3
          %s685 = smul.u32 16, %s25
          %s686 = smul.u32 2, %s684
          %s687 = smul.addr %s685, 8
          %s688 = sadd.s32 %s686, %s687
          %s689 = smul.addr %s688, 4
          %s690 = scalar_lea.vmem %s3, %s689
          // Predicated region
          $region155: #{quaternion_linear_pallas.1} parent=153 // pred_check
            _
          $region156: #{quaternion_linear_pallas.1} parent=153 // pred_check_branch
            %692 = sbr.rel (0) target = $region158
          $region157: #{quaternion_linear_pallas.1} parent=153 // pred_region
            // Predicated region
            $region159: #{quaternion_linear_pallas.1} parent=157 // pred_check
              _
            $region160: #{quaternion_linear_pallas.1} parent=157 // pred_check_branch
              %694 = sbr.rel (0) target = $region162
            $region161: #{quaternion_linear_pallas.1} parent=157 // pred_region
              // Predicated region
              $region174: #{quaternion_linear_pallas.1} parent=161 // pred_check
                _
              $region175: #{quaternion_linear_pallas.1} parent=161 // pred_check_branch
                %740 = sbr.rel (0) target = $region177
              $region176: #{quaternion_linear_pallas.1} parent=161 // pred_region
                loop: start=0, step=1, limit=1
                $region178: #{quaternion_linear_pallas.1} parent=176 // loop_pre_header
                  _
                $region179: #{quaternion_linear_pallas.1} parent=176 // loop_header
                  %s742 = sphi 0, %s746
                  %p743 = scmp.ge.s32.totalorder %s742, 1
                  %s747 = sphi %s690, %s690
                  %s748 = sphi %s683, %s683
                $region180: #{quaternion_linear_pallas.1} parent=176 // loop_header_branch
                  %745 = sbr.rel (%p743) target = $region184
                $region181: #{quaternion_linear_pallas.1} parent=176 // loop_body
                  %v749 = vld [vmem:[%s747] sm:$0xff]
                  %750 = vst [vmem:[%s748] sm:$0xff] %v749
                  %v751 = vld [vmem:[%s747 + $0x20] sm:$0xff]
                  %752 = vst [vmem:[%s748 + $0x8] sm:$0xff] %v751
                  %v753 = vld [vmem:[%s747 + $0x40] sm:$0xff]
                  %754 = vst [vmem:[%s748 + $0x10] sm:$0xff] %v753
                  %v755 = vld [vmem:[%s747 + $0x60] sm:$0xff]
                  %756 = vst [vmem:[%s748 + $0x18] sm:$0xff] %v755
                  %v757 = vld [vmem:[%s747 + $0x80] sm:$0xff]
                  %758 = vst [vmem:[%s748 + $0x20] sm:$0xff] %v757
                  %v759 = vld [vmem:[%s747 + $0xa0] sm:$0xff]
                  %760 = vst [vmem:[%s748 + $0x28] sm:$0xff] %v759
                  %v761 = vld [vmem:[%s747 + $0xc0] sm:$0xff]
                  %762 = vst [vmem:[%s748 + $0x30] sm:$0xff] %v761
                  %v763 = vld [vmem:[%s747 + $0xe0] sm:$0xff]
                  %764 = vst [vmem:[%s748 + $0x38] sm:$0xff] %v763
                  %v765 = vld [vmem:[%s747 + $0x100] sm:$0xff]
                  %766 = vst [vmem:[%s748 + $0x40] sm:$0xff] %v765
                  %v767 = vld [vmem:[%s747 + $0x120] sm:$0xff]
                  %768 = vst [vmem:[%s748 + $0x48] sm:$0xff] %v767
                  %v769 = vld [vmem:[%s747 + $0x140] sm:$0xff]
                  %770 = vst [vmem:[%s748 + $0x50] sm:$0xff] %v769
                  %v771 = vld [vmem:[%s747 + $0x160] sm:$0xff]
                  %772 = vst [vmem:[%s748 + $0x58] sm:$0xff] %v771
                  %v773 = vld [vmem:[%s747 + $0x180] sm:$0xff]
                  %774 = vst [vmem:[%s748 + $0x60] sm:$0xff] %v773
                  %v775 = vld [vmem:[%s747 + $0x1a0] sm:$0xff]
                  %776 = vst [vmem:[%s748 + $0x68] sm:$0xff] %v775
                  %v777 = vld [vmem:[%s747 + $0x1c0] sm:$0xff]
                  %778 = vst [vmem:[%s748 + $0x70] sm:$0xff] %v777
                  %v779 = vld [vmem:[%s747 + $0x1e0] sm:$0xff]
                  %780 = vst [vmem:[%s748 + $0x78] sm:$0xff] %v779
                $region182: #{quaternion_linear_pallas.1} parent=176 // loop_footer
                  %s746 = sadd.s32 1, %s742
                $region183: #{quaternion_linear_pallas.1} parent=176 // loop_footer_branch
                  %741 = sbr.rel target = $region179
                $region184: #{quaternion_linear_pallas.1} parent=176 // loop_exit
                  _
              $region177: #{quaternion_linear_pallas.1} parent=161 // pred_fallthru
                _
              // Predicated region
              $region185: #{quaternion_linear_pallas.1} parent=161 // pred_check
                _
              $region186: #{quaternion_linear_pallas.1} parent=161 // pred_check_branch
                %782 = sbr.rel target = $region188
              $region187: #{quaternion_linear_pallas.1} parent=161 // pred_region
                _
              $region188: #{quaternion_linear_pallas.1} parent=161 // pred_fallthru
                _
            $region162: #{quaternion_linear_pallas.1} parent=157 // pred_fallthru
              _
            // Predicated region
            $region163: #{quaternion_linear_pallas.1} parent=157 // pred_check
              _
            $region164: #{quaternion_linear_pallas.1} parent=157 // pred_check_branch
              %696 = sbr.rel target = $region166
            $region165: #{quaternion_linear_pallas.1} parent=157 // pred_region
              %s698 = ssub.s32 256, 1
              loop: start=0, step=1, limit=1
              $region167: #{quaternion_linear_pallas.1} parent=165 // loop_pre_header
                _
              $region168: #{quaternion_linear_pallas.1} parent=165 // loop_header
                %s700 = sphi 0, %s704
                %p701 = scmp.ge.s32.totalorder %s700, 1
                %s705 = sphi %s690, %s690
                %s706 = sphi %s683, %s683
              $region169: #{quaternion_linear_pallas.1} parent=165 // loop_header_branch
                %703 = sbr.rel (%p701) target = $region173
              $region170: #{quaternion_linear_pallas.1} parent=165 // loop_body
                %v707 = vld [vmem:[%s705] sm:%s698]
                %708 = vst [vmem:[%s706] sm:%s698] %v707
                %v709 = vld [vmem:[%s705 + $0x20] sm:%s698]
                %710 = vst [vmem:[%s706 + $0x8] sm:%s698] %v709
                %v711 = vld [vmem:[%s705 + $0x40] sm:%s698]
                %712 = vst [vmem:[%s706 + $0x10] sm:%s698] %v711
                %v713 = vld [vmem:[%s705 + $0x60] sm:%s698]
                %714 = vst [vmem:[%s706 + $0x18] sm:%s698] %v713
                %v715 = vld [vmem:[%s705 + $0x80] sm:%s698]
                %716 = vst [vmem:[%s706 + $0x20] sm:%s698] %v715
                %v717 = vld [vmem:[%s705 + $0xa0] sm:%s698]
                %718 = vst [vmem:[%s706 + $0x28] sm:%s698] %v717
                %v719 = vld [vmem:[%s705 + $0xc0] sm:%s698]
                %720 = vst [vmem:[%s706 + $0x30] sm:%s698] %v719
                %v721 = vld [vmem:[%s705 + $0xe0] sm:%s698]
                %722 = vst [vmem:[%s706 + $0x38] sm:%s698] %v721
                %v723 = vld [vmem:[%s705 + $0x100] sm:%s698]
                %724 = vst [vmem:[%s706 + $0x40] sm:%s698] %v723
                %v725 = vld [vmem:[%s705 + $0x120] sm:%s698]
                %726 = vst [vmem:[%s706 + $0x48] sm:%s698] %v725
                %v727 = vld [vmem:[%s705 + $0x140] sm:%s698]
                %728 = vst [vmem:[%s706 + $0x50] sm:%s698] %v727
                %v729 = vld [vmem:[%s705 + $0x160] sm:%s698]
                %730 = vst [vmem:[%s706 + $0x58] sm:%s698] %v729
                %v731 = vld [vmem:[%s705 + $0x180] sm:%s698]
                %732 = vst [vmem:[%s706 + $0x60] sm:%s698] %v731
                %v733 = vld [vmem:[%s705 + $0x1a0] sm:%s698]
                %734 = vst [vmem:[%s706 + $0x68] sm:%s698] %v733
                %v735 = vld [vmem:[%s705 + $0x1c0] sm:%s698]
                %736 = vst [vmem:[%s706 + $0x70] sm:%s698] %v735
                %v737 = vld [vmem:[%s705 + $0x1e0] sm:%s698]
                %738 = vst [vmem:[%s706 + $0x78] sm:%s698] %v737
              $region171: #{quaternion_linear_pallas.1} parent=165 // loop_footer
                %s704 = sadd.s32 1, %s700
              $region172: #{quaternion_linear_pallas.1} parent=165 // loop_footer_branch
                %699 = sbr.rel target = $region168
              $region173: #{quaternion_linear_pallas.1} parent=165 // loop_exit
                _
            $region166: #{quaternion_linear_pallas.1} parent=157 // pred_fallthru
              _
          $region158: #{quaternion_linear_pallas.1} parent=153 // pred_fallthru
            _
          %783 = vnop
        $region154: #{quaternion_linear_pallas.1} parent=35 // pred_fallthru
          _
      $region36: #{quaternion_linear_pallas.1} parent=5 // pred_fallthru
        _
      %p784 = scmp.le.s32.totalorder 1, %s18
      %p785 = scmp.lt.s32.totalorder %s18, 3
      %p786 = pnand %p784, %p785
      %p787 = pneg %p786
      // Predicated region
      $region189: #{quaternion_linear_pallas.1} parent=5 // pred_check
        _
      $region190: #{quaternion_linear_pallas.1} parent=5 // pred_check_branch
        %789 = sbr.rel (%p786) target = $region192
      $region191: #{quaternion_linear_pallas.1} parent=5 // pred_region
        %s790 = ssub.s32 %s18, 1
        %s791 = sand.u32 %s45, 1
        %s792 = sand.u32 %s45, 1
        %s793 = smul.addr %s792, 128
        %s794 = scalar_lea.vmem [#allocation2], %s793
        // Predicated region
        $region193: #{quaternion_linear_pallas.1} parent=191 // pred_check
          %p795 = pneg %p58
        $region194: #{quaternion_linear_pallas.1} parent=191 // pred_check_branch
          %797 = sbr.rel (%p795) target = $region196
        $region195: #{quaternion_linear_pallas.1} parent=191 // pred_region
          _
        $region196: #{quaternion_linear_pallas.1} parent=191 // pred_fallthru
          _
        %s798 = sand.u32 %s75, 1
        %s799 = sand.u32 %s75, 1
        %s800 = smul.addr %s799, 128
        %s801 = scalar_lea.vmem [#allocation3], %s800
        // Predicated region
        $region197: #{quaternion_linear_pallas.1} parent=191 // pred_check
          %p802 = pneg %p88
        $region198: #{quaternion_linear_pallas.1} parent=191 // pred_check_branch
          %804 = sbr.rel (%p802) target = $region200
        $region199: #{quaternion_linear_pallas.1} parent=191 // pred_region
          _
        $region200: #{quaternion_linear_pallas.1} parent=191 // pred_fallthru
          _
        %s805 = sand.u32 %s105, 1
        %s806 = sand.u32 %s105, 1
        %s807 = smul.addr %s806, 128
        %s808 = scalar_lea.vmem [#allocation4], %s807
        // Predicated region
        $region201: #{quaternion_linear_pallas.1} parent=191 // pred_check
          %p809 = pneg %p118
        $region202: #{quaternion_linear_pallas.1} parent=191 // pred_check_branch
          %811 = sbr.rel (%p809) target = $region204
        $region203: #{quaternion_linear_pallas.1} parent=191 // pred_region
          _
        $region204: #{quaternion_linear_pallas.1} parent=191 // pred_fallthru
          _
        %s812 = sand.u32 %s135, 1
        %s813 = sand.u32 %s135, 1
        %s814 = smul.addr %s813, 128
        %s815 = scalar_lea.vmem [#allocation5], %s814
        // Predicated region
        $region205: #{quaternion_linear_pallas.1} parent=191 // pred_check
          %p816 = pneg %p148
        $region206: #{quaternion_linear_pallas.1} parent=191 // pred_check_branch
          %818 = sbr.rel (%p816) target = $region208
        $region207: #{quaternion_linear_pallas.1} parent=191 // pred_region
          _
        $region208: #{quaternion_linear_pallas.1} parent=191 // pred_fallthru
          _
        %s819 = sand.u32 %s45, 1
        %s820 = sand.u32 %s45, 1
        %s821 = smul.addr %s820, 128
        %s822 = scalar_lea.vmem [#allocation2], %s821
        %p823 = pneg %p58
        %p824 = pneg %p55
        %s825 = sand.u32 %s75, 1
        %s826 = sand.u32 %s75, 1
        %s827 = smul.addr %s826, 128
        %s828 = scalar_lea.vmem [#allocation3], %s827
        %p829 = pneg %p88
        %p830 = pneg %p85
        %s831 = sand.u32 %s105, 1
        %s832 = sand.u32 %s105, 1
        %s833 = smul.addr %s832, 128
        %s834 = scalar_lea.vmem [#allocation4], %s833
        %p835 = pneg %p118
        %p836 = pneg %p115
        %s837 = sand.u32 %s135, 1
        %s838 = sand.u32 %s135, 1
        %s839 = smul.addr %s838, 128
        %s840 = scalar_lea.vmem [#allocation5], %s839
        %p841 = pneg %p148
        %p842 = pneg %p145
        %s843 = smul.u32 32, %s28
        %p844 = scmp.lt.s32.totalorder %s843, 31
        %s845 = scalar_select %p844, %s843, 31
        %s846 = smul.addr %s845, 4
        %s847 = scalar_lea.vmem %s4, %s846
        %p848 = pneg %p174
        %p849 = pneg %p171
        %s850 = smul.u32 32, %s28
        %p851 = scmp.lt.s32.totalorder %s850, 31
        %s852 = scalar_select %p851, %s850, 31
        %s853 = smul.addr %s852, 4
        %s854 = scalar_lea.vmem %s5, %s853
        %p855 = pneg %p200
        %p856 = pneg %p197
        %s857 = smul.u32 32, %s28
        %p858 = scmp.lt.s32.totalorder %s857, 31
        %s859 = scalar_select %p858, %s857, 31
        %s860 = smul.addr %s859, 4
        %s861 = scalar_lea.vmem %s6, %s860
        %p862 = pneg %p226
        %p863 = pneg %p223
        %s864 = smul.u32 32, %s28
        %p865 = scmp.lt.s32.totalorder %s864, 31
        %s866 = scalar_select %p865, %s864, 31
        %s867 = smul.addr %s866, 4
        %s868 = scalar_lea.vmem %s7, %s867
        %p869 = pneg %p252
        %p870 = pneg %p249
        %p871 = pneg %p273
        %p872 = pneg %p270
        %p873 = pneg %p299
        %p874 = pneg %p296
        %s875 = sand.u32 %s286, 1
        %s876 = scalar_lea.sflag [#allocation7], %s875
        %s877 = sand.u32 %s286, 1
        %s878 = smul.addr %s877, 512
        %s879 = scalar_lea.vmem [#allocation6], %s878
        %s880 = smul.u32 16, %s27
        %s881 = smul.u32 2, %s28
        %s882 = sadd.s32 %s28, 1
        %s883 = smul.u32 16, %s27
        %s884 = smul.u32 2, %s882
        %s885 = sadd.s32 %s28, 2
        %s886 = smul.u32 16, %s27
        %s887 = smul.u32 2, %s885
        %s888 = sadd.s32 %s28, 3
        %s889 = smul.u32 16, %s27
        %s890 = smul.u32 2, %s888
        %s891 = smul.u32 32, %s28
        %p892 = scmp.lt.s32.totalorder %s891, 31
        %s893 = scalar_select %p892, %s891, 31
        %s894 = smul.addr %s893, 4
        %s895 = scalar_lea.vmem %s4, %s894
        %s896 = smul.u32 32, %s28
        %s897 = smul.u32 32, %s28
        %p898 = scmp.lt.s32.totalorder %s897, 31
        %s899 = scalar_select %p898, %s897, 31
        %s900 = smul.addr %s899, 4
        %s901 = scalar_lea.vmem %s5, %s900
        %s902 = smul.u32 32, %s28
        %s903 = smul.u32 32, %s28
        %p904 = scmp.lt.s32.totalorder %s903, 31
        %s905 = scalar_select %p904, %s903, 31
        %s906 = smul.addr %s905, 4
        %s907 = scalar_lea.vmem %s6, %s906
        %s908 = smul.u32 32, %s28
        %s909 = smul.u32 32, %s28
        %p910 = scmp.lt.s32.totalorder %s909, 31
        %s911 = scalar_select %p910, %s909, 31
        %s912 = smul.addr %s911, 4
        %s913 = scalar_lea.vmem %s7, %s912
        %s914 = smul.u32 32, %s28
        %s915 = smul.u32 16, %s27
        %p916 = scmp.eq.s32.totalorder %s28, 0
        // Predicated region
        $region209: #{quaternion_linear_pallas.1} parent=191 // pred_check
          %p917 = pneg %p916
        $region210: #{quaternion_linear_pallas.1} parent=191 // pred_check_branch
          %919 = sbr.rel (%p917) target = $region212
        $region211: #{quaternion_linear_pallas.1} parent=191 // pred_region
          %920 = vst [vmem:[%s879] sm:$0xff] 0.0
          %921 = vst [vmem:[%s879 + $0x8] sm:$0xff] 0.0
          %922 = vst [vmem:[%s879 + $0x10] sm:$0xff] 0.0
          %923 = vst [vmem:[%s879 + $0x18] sm:$0xff] 0.0
          %924 = vst [vmem:[%s879 + $0x20] sm:$0xff] 0.0
          %925 = vst [vmem:[%s879 + $0x28] sm:$0xff] 0.0
          %926 = vst [vmem:[%s879 + $0x30] sm:$0xff] 0.0
          %927 = vst [vmem:[%s879 + $0x38] sm:$0xff] 0.0
          %928 = vst [vmem:[%s879 + $0x40] sm:$0xff] 0.0
          %929 = vst [vmem:[%s879 + $0x48] sm:$0xff] 0.0
          %930 = vst [vmem:[%s879 + $0x50] sm:$0xff] 0.0
          %931 = vst [vmem:[%s879 + $0x58] sm:$0xff] 0.0
          %932 = vst [vmem:[%s879 + $0x60] sm:$0xff] 0.0
          %933 = vst [vmem:[%s879 + $0x68] sm:$0xff] 0.0
          %934 = vst [vmem:[%s879 + $0x70] sm:$0xff] 0.0
          %935 = vst [vmem:[%s879 + $0x78] sm:$0xff] 0.0
          %936 = vst [vmem:[%s879 + $0x80] sm:$0xff] 0.0
          %937 = vst [vmem:[%s879 + $0x88] sm:$0xff] 0.0
          %938 = vst [vmem:[%s879 + $0x90] sm:$0xff] 0.0
          %939 = vst [vmem:[%s879 + $0x98] sm:$0xff] 0.0
          %940 = vst [vmem:[%s879 + $0xa0] sm:$0xff] 0.0
          %941 = vst [vmem:[%s879 + $0xa8] sm:$0xff] 0.0
          %942 = vst [vmem:[%s879 + $0xb0] sm:$0xff] 0.0
          %943 = vst [vmem:[%s879 + $0xb8] sm:$0xff] 0.0
          %944 = vst [vmem:[%s879 + $0xc0] sm:$0xff] 0.0
          %945 = vst [vmem:[%s879 + $0xc8] sm:$0xff] 0.0
          %946 = vst [vmem:[%s879 + $0xd0] sm:$0xff] 0.0
          %947 = vst [vmem:[%s879 + $0xd8] sm:$0xff] 0.0
          %948 = vst [vmem:[%s879 + $0xe0] sm:$0xff] 0.0
          %949 = vst [vmem:[%s879 + $0xe8] sm:$0xff] 0.0
          %950 = vst [vmem:[%s879 + $0xf0] sm:$0xff] 0.0
          %951 = vst [vmem:[%s879 + $0xf8] sm:$0xff] 0.0
          %952 = vst [vmem:[%s879 + $0x100] sm:$0xff] 0.0
          %953 = vst [vmem:[%s879 + $0x108] sm:$0xff] 0.0
          %954 = vst [vmem:[%s879 + $0x110] sm:$0xff] 0.0
          %955 = vst [vmem:[%s879 + $0x118] sm:$0xff] 0.0
          %956 = vst [vmem:[%s879 + $0x120] sm:$0xff] 0.0
          %957 = vst [vmem:[%s879 + $0x128] sm:$0xff] 0.0
          %958 = vst [vmem:[%s879 + $0x130] sm:$0xff] 0.0
          %959 = vst [vmem:[%s879 + $0x138] sm:$0xff] 0.0
          %960 = vst [vmem:[%s879 + $0x140] sm:$0xff] 0.0
          %961 = vst [vmem:[%s879 + $0x148] sm:$0xff] 0.0
          %962 = vst [vmem:[%s879 + $0x150] sm:$0xff] 0.0
          %963 = vst [vmem:[%s879 + $0x158] sm:$0xff] 0.0
          %964 = vst [vmem:[%s879 + $0x160] sm:$0xff] 0.0
          %965 = vst [vmem:[%s879 + $0x168] sm:$0xff] 0.0
          %966 = vst [vmem:[%s879 + $0x170] sm:$0xff] 0.0
          %967 = vst [vmem:[%s879 + $0x178] sm:$0xff] 0.0
          %968 = vst [vmem:[%s879 + $0x180] sm:$0xff] 0.0
          %969 = vst [vmem:[%s879 + $0x188] sm:$0xff] 0.0
          %970 = vst [vmem:[%s879 + $0x190] sm:$0xff] 0.0
          %971 = vst [vmem:[%s879 + $0x198] sm:$0xff] 0.0
          %972 = vst [vmem:[%s879 + $0x1a0] sm:$0xff] 0.0
          %973 = vst [vmem:[%s879 + $0x1a8] sm:$0xff] 0.0
          %974 = vst [vmem:[%s879 + $0x1b0] sm:$0xff] 0.0
          %975 = vst [vmem:[%s879 + $0x1b8] sm:$0xff] 0.0
          %976 = vst [vmem:[%s879 + $0x1c0] sm:$0xff] 0.0
          %977 = vst [vmem:[%s879 + $0x1c8] sm:$0xff] 0.0
          %978 = vst [vmem:[%s879 + $0x1d0] sm:$0xff] 0.0
          %979 = vst [vmem:[%s879 + $0x1d8] sm:$0xff] 0.0
          %980 = vst [vmem:[%s879 + $0x1e0] sm:$0xff] 0.0
          %981 = vst [vmem:[%s879 + $0x1e8] sm:$0xff] 0.0
          %982 = vst [vmem:[%s879 + $0x1f0] sm:$0xff] 0.0
          %983 = vst [vmem:[%s879 + $0x1f8] sm:$0xff] 0.0
        $region212: #{quaternion_linear_pallas.1} parent=191 // pred_fallthru
          _
        %v984 = vld [vmem:[%s794] sm:$0xff]
        %v985 = vld [vmem:[%s794 + $0x8] sm:$0xff]
        %v986 = vld [vmem:[%s794 + $0x10] sm:$0xff]
        %v987 = vld [vmem:[%s794 + $0x18] sm:$0xff]
        %v988 = vld [vmem:[%s794 + $0x20] sm:$0xff]
        %v989 = vld [vmem:[%s794 + $0x28] sm:$0xff]
        %v990 = vld [vmem:[%s794 + $0x30] sm:$0xff]
        %v991 = vld [vmem:[%s794 + $0x38] sm:$0xff]
        %v992 = vld [vmem:[%s794 + $0x40] sm:$0xff]
        %v993 = vld [vmem:[%s794 + $0x48] sm:$0xff]
        %v994 = vld [vmem:[%s794 + $0x50] sm:$0xff]
        %v995 = vld [vmem:[%s794 + $0x58] sm:$0xff]
        %v996 = vld [vmem:[%s794 + $0x60] sm:$0xff]
        %v997 = vld [vmem:[%s794 + $0x68] sm:$0xff]
        %v998 = vld [vmem:[%s794 + $0x70] sm:$0xff]
        %v999 = vld [vmem:[%s794 + $0x78] sm:$0xff]
        %v1000 = vld [vmem:[%s801] sm:$0xff]
        %v1001 = vld [vmem:[%s801 + $0x8] sm:$0xff]
        %v1002 = vld [vmem:[%s801 + $0x10] sm:$0xff]
        %v1003 = vld [vmem:[%s801 + $0x18] sm:$0xff]
        %v1004 = vld [vmem:[%s801 + $0x20] sm:$0xff]
        %v1005 = vld [vmem:[%s801 + $0x28] sm:$0xff]
        %v1006 = vld [vmem:[%s801 + $0x30] sm:$0xff]
        %v1007 = vld [vmem:[%s801 + $0x38] sm:$0xff]
        %v1008 = vld [vmem:[%s801 + $0x40] sm:$0xff]
        %v1009 = vld [vmem:[%s801 + $0x48] sm:$0xff]
        %v1010 = vld [vmem:[%s801 + $0x50] sm:$0xff]
        %v1011 = vld [vmem:[%s801 + $0x58] sm:$0xff]
        %v1012 = vld [vmem:[%s801 + $0x60] sm:$0xff]
        %v1013 = vld [vmem:[%s801 + $0x68] sm:$0xff]
        %v1014 = vld [vmem:[%s801 + $0x70] sm:$0xff]
        %v1015 = vld [vmem:[%s801 + $0x78] sm:$0xff]
        %v1016 = vld [vmem:[%s808] sm:$0xff]
        %v1017 = vld [vmem:[%s808 + $0x8] sm:$0xff]
        %v1018 = vld [vmem:[%s808 + $0x10] sm:$0xff]
        %v1019 = vld [vmem:[%s808 + $0x18] sm:$0xff]
        %v1020 = vld [vmem:[%s808 + $0x20] sm:$0xff]
        %v1021 = vld [vmem:[%s808 + $0x28] sm:$0xff]
        %v1022 = vld [vmem:[%s808 + $0x30] sm:$0xff]
        %v1023 = vld [vmem:[%s808 + $0x38] sm:$0xff]
        %v1024 = vld [vmem:[%s808 + $0x40] sm:$0xff]
        %v1025 = vld [vmem:[%s808 + $0x48] sm:$0xff]
        %v1026 = vld [vmem:[%s808 + $0x50] sm:$0xff]
        %v1027 = vld [vmem:[%s808 + $0x58] sm:$0xff]
        %v1028 = vld [vmem:[%s808 + $0x60] sm:$0xff]
        %v1029 = vld [vmem:[%s808 + $0x68] sm:$0xff]
        %v1030 = vld [vmem:[%s808 + $0x70] sm:$0xff]
        %v1031 = vld [vmem:[%s808 + $0x78] sm:$0xff]
        %v1032 = vld [vmem:[%s815] sm:$0xff]
        %v1033 = vld [vmem:[%s815 + $0x8] sm:$0xff]
        %v1034 = vld [vmem:[%s815 + $0x10] sm:$0xff]
        %v1035 = vld [vmem:[%s815 + $0x18] sm:$0xff]
        %v1036 = vld [vmem:[%s815 + $0x20] sm:$0xff]
        %v1037 = vld [vmem:[%s815 + $0x28] sm:$0xff]
        %v1038 = vld [vmem:[%s815 + $0x30] sm:$0xff]
        %v1039 = vld [vmem:[%s815 + $0x38] sm:$0xff]
        %v1040 = vld [vmem:[%s815 + $0x40] sm:$0xff]
        %v1041 = vld [vmem:[%s815 + $0x48] sm:$0xff]
        %v1042 = vld [vmem:[%s815 + $0x50] sm:$0xff]
        %v1043 = vld [vmem:[%s815 + $0x58] sm:$0xff]
        %v1044 = vld [vmem:[%s815 + $0x60] sm:$0xff]
        %v1045 = vld [vmem:[%s815 + $0x68] sm:$0xff]
        %v1046 = vld [vmem:[%s815 + $0x70] sm:$0xff]
        %v1047 = vld [vmem:[%s815 + $0x78] sm:$0xff]
        %v1048 = vld [vmem:[%s895] sm:$0xf]
        %v1049 = vld [vmem:[%s895 + $0x4] sm:$0xf]
        %v1050 = vld [vmem:[%s895 + $0x8] sm:$0xf]
        %v1051 = vld [vmem:[%s895 + $0xc] sm:$0xf]
        %v1052 = vld [vmem:[%s895 + $0x10] sm:$0xf]
        %v1053 = vld [vmem:[%s895 + $0x14] sm:$0xf]
        %v1054 = vld [vmem:[%s895 + $0x18] sm:$0xf]
        %v1055 = vld [vmem:[%s895 + $0x1c] sm:$0xf]
        %v1056 = vld [vmem:[%s895 + $0x20] sm:$0xf]
        %v1057 = vld [vmem:[%s895 + $0x24] sm:$0xf]
        %v1058 = vld [vmem:[%s895 + $0x28] sm:$0xf]
        %v1059 = vld [vmem:[%s895 + $0x2c] sm:$0xf]
        %v1060 = vld [vmem:[%s895 + $0x30] sm:$0xf]
        %v1061 = vld [vmem:[%s895 + $0x34] sm:$0xf]
        %v1062 = vld [vmem:[%s895 + $0x38] sm:$0xf]
        %v1063 = vld [vmem:[%s895 + $0x3c] sm:$0xf]
        %v1064 = vld [vmem:[%s895 + $0x40] sm:$0xf]
        %v1065 = vld [vmem:[%s895 + $0x44] sm:$0xf]
        %v1066 = vld [vmem:[%s895 + $0x48] sm:$0xf]
        %v1067 = vld [vmem:[%s895 + $0x4c] sm:$0xf]
        %v1068 = vld [vmem:[%s895 + $0x50] sm:$0xf]
        %v1069 = vld [vmem:[%s895 + $0x54] sm:$0xf]
        %v1070 = vld [vmem:[%s895 + $0x58] sm:$0xf]
        %v1071 = vld [vmem:[%s895 + $0x5c] sm:$0xf]
        %v1072 = vld [vmem:[%s895 + $0x60] sm:$0xf]
        %v1073 = vld [vmem:[%s895 + $0x64] sm:$0xf]
        %v1074 = vld [vmem:[%s895 + $0x68] sm:$0xf]
        %v1075 = vld [vmem:[%s895 + $0x6c] sm:$0xf]
        %v1076 = vld [vmem:[%s895 + $0x70] sm:$0xf]
        %v1077 = vld [vmem:[%s895 + $0x74] sm:$0xf]
        %v1078 = vld [vmem:[%s895 + $0x78] sm:$0xf]
        %v1079 = vld [vmem:[%s895 + $0x7c] sm:$0xf]
        %v1080 = vld [vmem:[%s901] sm:$0xf]
        %v1081 = vld [vmem:[%s901 + $0x4] sm:$0xf]
        %v1082 = vld [vmem:[%s901 + $0x8] sm:$0xf]
        %v1083 = vld [vmem:[%s901 + $0xc] sm:$0xf]
        %v1084 = vld [vmem:[%s901 + $0x10] sm:$0xf]
        %v1085 = vld [vmem:[%s901 + $0x14] sm:$0xf]
        %v1086 = vld [vmem:[%s901 + $0x18] sm:$0xf]
        %v1087 = vld [vmem:[%s901 + $0x1c] sm:$0xf]
        %v1088 = vld [vmem:[%s901 + $0x20] sm:$0xf]
        %v1089 = vld [vmem:[%s901 + $0x24] sm:$0xf]
        %v1090 = vld [vmem:[%s901 + $0x28] sm:$0xf]
        %v1091 = vld [vmem:[%s901 + $0x2c] sm:$0xf]
        %v1092 = vld [vmem:[%s901 + $0x30] sm:$0xf]
        %v1093 = vld [vmem:[%s901 + $0x34] sm:$0xf]
        %v1094 = vld [vmem:[%s901 + $0x38] sm:$0xf]
        %v1095 = vld [vmem:[%s901 + $0x3c] sm:$0xf]
        %v1096 = vld [vmem:[%s901 + $0x40] sm:$0xf]
        %v1097 = vld [vmem:[%s901 + $0x44] sm:$0xf]
        %v1098 = vld [vmem:[%s901 + $0x48] sm:$0xf]
        %v1099 = vld [vmem:[%s901 + $0x4c] sm:$0xf]
        %v1100 = vld [vmem:[%s901 + $0x50] sm:$0xf]
        %v1101 = vld [vmem:[%s901 + $0x54] sm:$0xf]
        %v1102 = vld [vmem:[%s901 + $0x58] sm:$0xf]
        %v1103 = vld [vmem:[%s901 + $0x5c] sm:$0xf]
        %v1104 = vld [vmem:[%s901 + $0x60] sm:$0xf]
        %v1105 = vld [vmem:[%s901 + $0x64] sm:$0xf]
        %v1106 = vld [vmem:[%s901 + $0x68] sm:$0xf]
        %v1107 = vld [vmem:[%s901 + $0x6c] sm:$0xf]
        %v1108 = vld [vmem:[%s901 + $0x70] sm:$0xf]
        %v1109 = vld [vmem:[%s901 + $0x74] sm:$0xf]
        %v1110 = vld [vmem:[%s901 + $0x78] sm:$0xf]
        %v1111 = vld [vmem:[%s901 + $0x7c] sm:$0xf]
        %v1112 = vld [vmem:[%s907] sm:$0xf]
        %v1113 = vld [vmem:[%s907 + $0x4] sm:$0xf]
        %v1114 = vld [vmem:[%s907 + $0x8] sm:$0xf]
        %v1115 = vld [vmem:[%s907 + $0xc] sm:$0xf]
        %v1116 = vld [vmem:[%s907 + $0x10] sm:$0xf]
        %v1117 = vld [vmem:[%s907 + $0x14] sm:$0xf]
        %v1118 = vld [vmem:[%s907 + $0x18] sm:$0xf]
        %v1119 = vld [vmem:[%s907 + $0x1c] sm:$0xf]
        %v1120 = vld [vmem:[%s907 + $0x20] sm:$0xf]
        %v1121 = vld [vmem:[%s907 + $0x24] sm:$0xf]
        %v1122 = vld [vmem:[%s907 + $0x28] sm:$0xf]
        %v1123 = vld [vmem:[%s907 + $0x2c] sm:$0xf]
        %v1124 = vld [vmem:[%s907 + $0x30] sm:$0xf]
        %v1125 = vld [vmem:[%s907 + $0x34] sm:$0xf]
        %v1126 = vld [vmem:[%s907 + $0x38] sm:$0xf]
        %v1127 = vld [vmem:[%s907 + $0x3c] sm:$0xf]
        %v1128 = vld [vmem:[%s907 + $0x40] sm:$0xf]
        %v1129 = vld [vmem:[%s907 + $0x44] sm:$0xf]
        %v1130 = vld [vmem:[%s907 + $0x48] sm:$0xf]
        %v1131 = vld [vmem:[%s907 + $0x4c] sm:$0xf]
        %v1132 = vld [vmem:[%s907 + $0x50] sm:$0xf]
        %v1133 = vld [vmem:[%s907 + $0x54] sm:$0xf]
        %v1134 = vld [vmem:[%s907 + $0x58] sm:$0xf]
        %v1135 = vld [vmem:[%s907 + $0x5c] sm:$0xf]
        %v1136 = vld [vmem:[%s907 + $0x60] sm:$0xf]
        %v1137 = vld [vmem:[%s907 + $0x64] sm:$0xf]
        %v1138 = vld [vmem:[%s907 + $0x68] sm:$0xf]
        %v1139 = vld [vmem:[%s907 + $0x6c] sm:$0xf]
        %v1140 = vld [vmem:[%s907 + $0x70] sm:$0xf]
        %v1141 = vld [vmem:[%s907 + $0x74] sm:$0xf]
        %v1142 = vld [vmem:[%s907 + $0x78] sm:$0xf]
        %v1143 = vld [vmem:[%s907 + $0x7c] sm:$0xf]
        %v1144 = vld [vmem:[%s913] sm:$0xf]
        %v1145 = vld [vmem:[%s913 + $0x4] sm:$0xf]
        %v1146 = vld [vmem:[%s913 + $0x8] sm:$0xf]
        %v1147 = vld [vmem:[%s913 + $0xc] sm:$0xf]
        %v1148 = vld [vmem:[%s913 + $0x10] sm:$0xf]
        %v1149 = vld [vmem:[%s913 + $0x14] sm:$0xf]
        %v1150 = vld [vmem:[%s913 + $0x18] sm:$0xf]
        %v1151 = vld [vmem:[%s913 + $0x1c] sm:$0xf]
        %v1152 = vld [vmem:[%s913 + $0x20] sm:$0xf]
        %v1153 = vld [vmem:[%s913 + $0x24] sm:$0xf]
        %v1154 = vld [vmem:[%s913 + $0x28] sm:$0xf]
        %v1155 = vld [vmem:[%s913 + $0x2c] sm:$0xf]
        %v1156 = vld [vmem:[%s913 + $0x30] sm:$0xf]
        %v1157 = vld [vmem:[%s913 + $0x34] sm:$0xf]
        %v1158 = vld [vmem:[%s913 + $0x38] sm:$0xf]
        %v1159 = vld [vmem:[%s913 + $0x3c] sm:$0xf]
        %v1160 = vld [vmem:[%s913 + $0x40] sm:$0xf]
        %v1161 = vld [vmem:[%s913 + $0x44] sm:$0xf]
        %v1162 = vld [vmem:[%s913 + $0x48] sm:$0xf]
        %v1163 = vld [vmem:[%s913 + $0x4c] sm:$0xf]
        %v1164 = vld [vmem:[%s913 + $0x50] sm:$0xf]
        %v1165 = vld [vmem:[%s913 + $0x54] sm:$0xf]
        %v1166 = vld [vmem:[%s913 + $0x58] sm:$0xf]
        %v1167 = vld [vmem:[%s913 + $0x5c] sm:$0xf]
        %v1168 = vld [vmem:[%s913 + $0x60] sm:$0xf]
        %v1169 = vld [vmem:[%s913 + $0x64] sm:$0xf]
        %v1170 = vld [vmem:[%s913 + $0x68] sm:$0xf]
        %v1171 = vld [vmem:[%s913 + $0x6c] sm:$0xf]
        %v1172 = vld [vmem:[%s913 + $0x70] sm:$0xf]
        %v1173 = vld [vmem:[%s913 + $0x74] sm:$0xf]
        %v1174 = vld [vmem:[%s913 + $0x78] sm:$0xf]
        %v1175 = vld [vmem:[%s913 + $0x7c] sm:$0xf]
        %v1192 = vunpack.c.l.b16 %v984
        %v1193 = vunpack.c.h.b16 %v984
        %v1194 = vunpack.c.l.b16 %v985
        %v1195 = vunpack.c.h.b16 %v985
        %v1196 = vunpack.c.l.b16 %v986
        %v1197 = vunpack.c.h.b16 %v986
        %v1198 = vunpack.c.l.b16 %v987
        %v1199 = vunpack.c.h.b16 %v987
        %v1200 = vunpack.c.l.b16 %v988
        %v1201 = vunpack.c.h.b16 %v988
        %v1202 = vunpack.c.l.b16 %v989
        %v1203 = vunpack.c.h.b16 %v989
        %v1204 = vunpack.c.l.b16 %v990
        %v1205 = vunpack.c.h.b16 %v990
        %v1206 = vunpack.c.l.b16 %v991
        %v1207 = vunpack.c.h.b16 %v991
        %v1208 = vunpack.c.l.b16 %v992
        %v1209 = vunpack.c.h.b16 %v992
        %v1210 = vunpack.c.l.b16 %v993
        %v1211 = vunpack.c.h.b16 %v993
        %v1212 = vunpack.c.l.b16 %v994
        %v1213 = vunpack.c.h.b16 %v994
        %v1214 = vunpack.c.l.b16 %v995
        %v1215 = vunpack.c.h.b16 %v995
        %v1216 = vunpack.c.l.b16 %v996
        %v1217 = vunpack.c.h.b16 %v996
        %v1218 = vunpack.c.l.b16 %v997
        %v1219 = vunpack.c.h.b16 %v997
        %v1220 = vunpack.c.l.b16 %v998
        %v1221 = vunpack.c.h.b16 %v998
        %v1222 = vunpack.c.l.b16 %v999
        %v1223 = vunpack.c.h.b16 %v999
        %v1224 = vpack.c.b16 %v1194, %v1192
        %v1225 = vpack.c.b16 %v1195, %v1193
        %v1226 = vpack.c.b16 %v1198, %v1196
        %v1227 = vpack.c.b16 %v1199, %v1197
        %v1228 = vpack.c.b16 %v1202, %v1200
        %v1229 = vpack.c.b16 %v1203, %v1201
        %v1230 = vpack.c.b16 %v1206, %v1204
        %v1231 = vpack.c.b16 %v1207, %v1205
        %v1232 = vpack.c.b16 %v1210, %v1208
        %v1233 = vpack.c.b16 %v1211, %v1209
        %v1234 = vpack.c.b16 %v1214, %v1212
        %v1235 = vpack.c.b16 %v1215, %v1213
        %v1236 = vpack.c.b16 %v1218, %v1216
        %v1237 = vpack.c.b16 %v1219, %v1217
        %v1238 = vpack.c.b16 %v1222, %v1220
        %v1239 = vpack.c.b16 %v1223, %v1221
        %v1288 = vunpack.c.l.b16 %v1048
        %v1289 = vunpack.c.l.b16 %v1049
        %v1290 = vunpack.c.l.b16 %v1050
        %v1291 = vunpack.c.l.b16 %v1051
        %v1292 = vunpack.c.l.b16 %v1052
        %v1293 = vunpack.c.l.b16 %v1053
        %v1294 = vunpack.c.l.b16 %v1054
        %v1295 = vunpack.c.l.b16 %v1055
        %v1296 = vunpack.c.l.b16 %v1056
        %v1297 = vunpack.c.l.b16 %v1057
        %v1298 = vunpack.c.l.b16 %v1058
        %v1299 = vunpack.c.l.b16 %v1059
        %v1300 = vunpack.c.l.b16 %v1060
        %v1301 = vunpack.c.l.b16 %v1061
        %v1302 = vunpack.c.l.b16 %v1062
        %v1303 = vunpack.c.l.b16 %v1063
        %v1304 = vunpack.c.l.b16 %v1064
        %v1305 = vunpack.c.l.b16 %v1065
        %v1306 = vunpack.c.l.b16 %v1066
        %v1307 = vunpack.c.l.b16 %v1067
        %v1308 = vunpack.c.l.b16 %v1068
        %v1309 = vunpack.c.l.b16 %v1069
        %v1310 = vunpack.c.l.b16 %v1070
        %v1311 = vunpack.c.l.b16 %v1071
        %v1312 = vunpack.c.l.b16 %v1072
        %v1313 = vunpack.c.l.b16 %v1073
        %v1314 = vunpack.c.l.b16 %v1074
        %v1315 = vunpack.c.l.b16 %v1075
        %v1316 = vunpack.c.l.b16 %v1076
        %v1317 = vunpack.c.l.b16 %v1077
        %v1318 = vunpack.c.l.b16 %v1078
        %v1319 = vunpack.c.l.b16 %v1079
        %v1320 = vpack.c.b16 %v1289, %v1288
        %v1321 = vpack.c.b16 %v1291, %v1290
        %v1322 = vpack.c.b16 %v1293, %v1292
        %v1323 = vpack.c.b16 %v1295, %v1294
        %v1324 = vpack.c.b16 %v1297, %v1296
        %v1325 = vpack.c.b16 %v1299, %v1298
        %v1326 = vpack.c.b16 %v1301, %v1300
        %v1327 = vpack.c.b16 %v1303, %v1302
        %v1328 = vpack.c.b16 %v1305, %v1304
        %v1329 = vpack.c.b16 %v1307, %v1306
        %v1330 = vpack.c.b16 %v1309, %v1308
        %v1331 = vpack.c.b16 %v1311, %v1310
        %v1332 = vpack.c.b16 %v1313, %v1312
        %v1333 = vpack.c.b16 %v1315, %v1314
        %v1334 = vpack.c.b16 %v1317, %v1316
        %v1335 = vpack.c.b16 %v1319, %v1318
        %1352 = vmatpush.bf16.msra.mxu0 %v1327
        %1353 = vmatpush.bf16.msra.mxu0 %v1326
        %1354 = vmatpush.bf16.msra.mxu0 %v1325
        %1355 = vmatpush.bf16.msra.mxu0 %v1324
        %1356 = vmatpush.bf16.msra.mxu0 %v1323
        %1357 = vmatpush.bf16.msra.mxu0 %v1322
        %1358 = vmatpush.bf16.msra.mxu0 %v1321
        %1359 = vmatpush.bf16.msra.mxu0 %v1320
        %1360 = vmatmul.bf16.gmra.mxu0 %v1224
        %v1361 = vpop.f32.mrf.mxu0
        %v1362 = vadd.f32 0.0, %v1361
        %v1363 = vpop.f32.mrf.mxu0
        %v1364 = vadd.f32 0.0, %v1363
        %1365 = vmatmul.bf16.gmra.mxu0 %v1226
        %v1366 = vpop.f32.mrf.mxu0
        %v1367 = vadd.f32 0.0, %v1366
        %v1368 = vpop.f32.mrf.mxu0
        %v1369 = vadd.f32 0.0, %v1368
        %1370 = vmatmul.bf16.gmra.mxu0 %v1228
        %v1371 = vpop.f32.mrf.mxu0
        %v1372 = vadd.f32 0.0, %v1371
        %v1373 = vpop.f32.mrf.mxu0
        %v1374 = vadd.f32 0.0, %v1373
        %1375 = vmatmul.bf16.gmra.mxu0 %v1230
        %v1376 = vpop.f32.mrf.mxu0
        %v1377 = vadd.f32 0.0, %v1376
        %v1378 = vpop.f32.mrf.mxu0
        %v1379 = vadd.f32 0.0, %v1378
        %1380 = vmatmul.bf16.gmra.mxu0 %v1232
        %v1381 = vpop.f32.mrf.mxu0
        %v1382 = vadd.f32 0.0, %v1381
        %v1383 = vpop.f32.mrf.mxu0
        %v1384 = vadd.f32 0.0, %v1383
        %1385 = vmatmul.bf16.gmra.mxu0 %v1234
        %v1386 = vpop.f32.mrf.mxu0
        %v1387 = vadd.f32 0.0, %v1386
        %v1388 = vpop.f32.mrf.mxu0
        %v1389 = vadd.f32 0.0, %v1388
        %1390 = vmatmul.bf16.gmra.mxu0 %v1236
        %v1391 = vpop.f32.mrf.mxu0
        %v1392 = vadd.f32 0.0, %v1391
        %v1393 = vpop.f32.mrf.mxu0
        %v1394 = vadd.f32 0.0, %v1393
        %1395 = vmatmul.bf16.gmra.mxu0 %v1238
        %v1396 = vpop.f32.mrf.mxu0
        %v1397 = vadd.f32 0.0, %v1396
        %v1398 = vpop.f32.mrf.mxu0
        %v1399 = vadd.f32 0.0, %v1398
        %1400 = vdwg.mxu0
        %1401 = vmatpush.bf16.msra.mxu0 %v1335
        %1402 = vmatpush.bf16.msra.mxu0 %v1334
        %1403 = vmatpush.bf16.msra.mxu0 %v1333
        %1404 = vmatpush.bf16.msra.mxu0 %v1332
        %1405 = vmatpush.bf16.msra.mxu0 %v1331
        %1406 = vmatpush.bf16.msra.mxu0 %v1330
        %1407 = vmatpush.bf16.msra.mxu0 %v1329
        %1408 = vmatpush.bf16.msra.mxu0 %v1328
        %1409 = vmatmul.bf16.gmra.mxu0 %v1225
        %v1410 = vpop.f32.mrf.mxu0
        %v1411 = vadd.f32 %v1362, %v1410
        %v1412 = vpop.f32.mrf.mxu0
        %v1413 = vadd.f32 %v1364, %v1412
        %1414 = vmatmul.bf16.gmra.mxu0 %v1227
        %v1415 = vpop.f32.mrf.mxu0
        %v1416 = vadd.f32 %v1367, %v1415
        %v1417 = vpop.f32.mrf.mxu0
        %v1418 = vadd.f32 %v1369, %v1417
        %1419 = vmatmul.bf16.gmra.mxu0 %v1229
        %v1420 = vpop.f32.mrf.mxu0
        %v1421 = vadd.f32 %v1372, %v1420
        %v1422 = vpop.f32.mrf.mxu0
        %v1423 = vadd.f32 %v1374, %v1422
        %1424 = vmatmul.bf16.gmra.mxu0 %v1231
        %v1425 = vpop.f32.mrf.mxu0
        %v1426 = vadd.f32 %v1377, %v1425
        %v1427 = vpop.f32.mrf.mxu0
        %v1428 = vadd.f32 %v1379, %v1427
        %1429 = vmatmul.bf16.gmra.mxu0 %v1233
        %v1430 = vpop.f32.mrf.mxu0
        %v1431 = vadd.f32 %v1382, %v1430
        %v1432 = vpop.f32.mrf.mxu0
        %v1433 = vadd.f32 %v1384, %v1432
        %1434 = vmatmul.bf16.gmra.mxu0 %v1235
        %v1435 = vpop.f32.mrf.mxu0
        %v1436 = vadd.f32 %v1387, %v1435
        %v1437 = vpop.f32.mrf.mxu0
        %v1438 = vadd.f32 %v1389, %v1437
        %1439 = vmatmul.bf16.gmra.mxu0 %v1237
        %v1440 = vpop.f32.mrf.mxu0
        %v1441 = vadd.f32 %v1392, %v1440
        %v1442 = vpop.f32.mrf.mxu0
        %v1443 = vadd.f32 %v1394, %v1442
        %1444 = vmatmul.bf16.gmra.mxu0 %v1239
        %v1445 = vpop.f32.mrf.mxu0
        %v1446 = vadd.f32 %v1397, %v1445
        %v1447 = vpop.f32.mrf.mxu0
        %v1448 = vadd.f32 %v1399, %v1447
        %1449 = vdwg.mxu0
        %v1466 = vunpack.c.l.b16 %v1000
        %v1467 = vunpack.c.h.b16 %v1000
        %v1468 = vunpack.c.l.b16 %v1001
        %v1469 = vunpack.c.h.b16 %v1001
        %v1470 = vunpack.c.l.b16 %v1002
        %v1471 = vunpack.c.h.b16 %v1002
        %v1472 = vunpack.c.l.b16 %v1003
        %v1473 = vunpack.c.h.b16 %v1003
        %v1474 = vunpack.c.l.b16 %v1004
        %v1475 = vunpack.c.h.b16 %v1004
        %v1476 = vunpack.c.l.b16 %v1005
        %v1477 = vunpack.c.h.b16 %v1005
        %v1478 = vunpack.c.l.b16 %v1006
        %v1479 = vunpack.c.h.b16 %v1006
        %v1480 = vunpack.c.l.b16 %v1007
        %v1481 = vunpack.c.h.b16 %v1007
        %v1482 = vunpack.c.l.b16 %v1008
        %v1483 = vunpack.c.h.b16 %v1008
        %v1484 = vunpack.c.l.b16 %v1009
        %v1485 = vunpack.c.h.b16 %v1009
        %v1486 = vunpack.c.l.b16 %v1010
        %v1487 = vunpack.c.h.b16 %v1010
        %v1488 = vunpack.c.l.b16 %v1011
        %v1489 = vunpack.c.h.b16 %v1011
        %v1490 = vunpack.c.l.b16 %v1012
        %v1491 = vunpack.c.h.b16 %v1012
        %v1492 = vunpack.c.l.b16 %v1013
        %v1493 = vunpack.c.h.b16 %v1013
        %v1494 = vunpack.c.l.b16 %v1014
        %v1495 = vunpack.c.h.b16 %v1014
        %v1496 = vunpack.c.l.b16 %v1015
        %v1497 = vunpack.c.h.b16 %v1015
        %v1498 = vpack.c.b16 %v1468, %v1466
        %v1499 = vpack.c.b16 %v1469, %v1467
        %v1500 = vpack.c.b16 %v1472, %v1470
        %v1501 = vpack.c.b16 %v1473, %v1471
        %v1502 = vpack.c.b16 %v1476, %v1474
        %v1503 = vpack.c.b16 %v1477, %v1475
        %v1504 = vpack.c.b16 %v1480, %v1478
        %v1505 = vpack.c.b16 %v1481, %v1479
        %v1506 = vpack.c.b16 %v1484, %v1482
        %v1507 = vpack.c.b16 %v1485, %v1483
        %v1508 = vpack.c.b16 %v1488, %v1486
        %v1509 = vpack.c.b16 %v1489, %v1487
        %v1510 = vpack.c.b16 %v1492, %v1490
        %v1511 = vpack.c.b16 %v1493, %v1491
        %v1512 = vpack.c.b16 %v1496, %v1494
        %v1513 = vpack.c.b16 %v1497, %v1495
        %v1562 = vunpack.c.l.b16 %v1080
        %v1563 = vunpack.c.l.b16 %v1081
        %v1564 = vunpack.c.l.b16 %v1082
        %v1565 = vunpack.c.l.b16 %v1083
        %v1566 = vunpack.c.l.b16 %v1084
        %v1567 = vunpack.c.l.b16 %v1085
        %v1568 = vunpack.c.l.b16 %v1086
        %v1569 = vunpack.c.l.b16 %v1087
        %v1570 = vunpack.c.l.b16 %v1088
        %v1571 = vunpack.c.l.b16 %v1089
        %v1572 = vunpack.c.l.b16 %v1090
        %v1573 = vunpack.c.l.b16 %v1091
        %v1574 = vunpack.c.l.b16 %v1092
        %v1575 = vunpack.c.l.b16 %v1093
        %v1576 = vunpack.c.l.b16 %v1094
        %v1577 = vunpack.c.l.b16 %v1095
        %v1578 = vunpack.c.l.b16 %v1096
        %v1579 = vunpack.c.l.b16 %v1097
        %v1580 = vunpack.c.l.b16 %v1098
        %v1581 = vunpack.c.l.b16 %v1099
        %v1582 = vunpack.c.l.b16 %v1100
        %v1583 = vunpack.c.l.b16 %v1101
        %v1584 = vunpack.c.l.b16 %v1102
        %v1585 = vunpack.c.l.b16 %v1103
        %v1586 = vunpack.c.l.b16 %v1104
        %v1587 = vunpack.c.l.b16 %v1105
        %v1588 = vunpack.c.l.b16 %v1106
        %v1589 = vunpack.c.l.b16 %v1107
        %v1590 = vunpack.c.l.b16 %v1108
        %v1591 = vunpack.c.l.b16 %v1109
        %v1592 = vunpack.c.l.b16 %v1110
        %v1593 = vunpack.c.l.b16 %v1111
        %v1594 = vpack.c.b16 %v1563, %v1562
        %v1595 = vpack.c.b16 %v1565, %v1564
        %v1596 = vpack.c.b16 %v1567, %v1566
        %v1597 = vpack.c.b16 %v1569, %v1568
        %v1598 = vpack.c.b16 %v1571, %v1570
        %v1599 = vpack.c.b16 %v1573, %v1572
        %v1600 = vpack.c.b16 %v1575, %v1574
        %v1601 = vpack.c.b16 %v1577, %v1576
        %v1602 = vpack.c.b16 %v1579, %v1578
        %v1603 = vpack.c.b16 %v1581, %v1580
        %v1604 = vpack.c.b16 %v1583, %v1582
        %v1605 = vpack.c.b16 %v1585, %v1584
        %v1606 = vpack.c.b16 %v1587, %v1586
        %v1607 = vpack.c.b16 %v1589, %v1588
        %v1608 = vpack.c.b16 %v1591, %v1590
        %v1609 = vpack.c.b16 %v1593, %v1592
        %1626 = vmatpush.bf16.msra.mxu0 %v1601
        %1627 = vmatpush.bf16.msra.mxu0 %v1600
        %1628 = vmatpush.bf16.msra.mxu0 %v1599
        %1629 = vmatpush.bf16.msra.mxu0 %v1598
        %1630 = vmatpush.bf16.msra.mxu0 %v1597
        %1631 = vmatpush.bf16.msra.mxu0 %v1596
        %1632 = vmatpush.bf16.msra.mxu0 %v1595
        %1633 = vmatpush.bf16.msra.mxu0 %v1594
        %1634 = vmatmul.bf16.gmra.mxu0 %v1498
        %v1635 = vpop.f32.mrf.mxu0
        %v1636 = vadd.f32 0.0, %v1635
        %v1637 = vpop.f32.mrf.mxu0
        %v1638 = vadd.f32 0.0, %v1637
        %1639 = vmatmul.bf16.gmra.mxu0 %v1500
        %v1640 = vpop.f32.mrf.mxu0
        %v1641 = vadd.f32 0.0, %v1640
        %v1642 = vpop.f32.mrf.mxu0
        %v1643 = vadd.f32 0.0, %v1642
        %1644 = vmatmul.bf16.gmra.mxu0 %v1502
        %v1645 = vpop.f32.mrf.mxu0
        %v1646 = vadd.f32 0.0, %v1645
        %v1647 = vpop.f32.mrf.mxu0
        %v1648 = vadd.f32 0.0, %v1647
        %1649 = vmatmul.bf16.gmra.mxu0 %v1504
        %v1650 = vpop.f32.mrf.mxu0
        %v1651 = vadd.f32 0.0, %v1650
        %v1652 = vpop.f32.mrf.mxu0
        %v1653 = vadd.f32 0.0, %v1652
        %1654 = vmatmul.bf16.gmra.mxu0 %v1506
        %v1655 = vpop.f32.mrf.mxu0
        %v1656 = vadd.f32 0.0, %v1655
        %v1657 = vpop.f32.mrf.mxu0
        %v1658 = vadd.f32 0.0, %v1657
        %1659 = vmatmul.bf16.gmra.mxu0 %v1508
        %v1660 = vpop.f32.mrf.mxu0
        %v1661 = vadd.f32 0.0, %v1660
        %v1662 = vpop.f32.mrf.mxu0
        %v1663 = vadd.f32 0.0, %v1662
        %1664 = vmatmul.bf16.gmra.mxu0 %v1510
        %v1665 = vpop.f32.mrf.mxu0
        %v1666 = vadd.f32 0.0, %v1665
        %v1667 = vpop.f32.mrf.mxu0
        %v1668 = vadd.f32 0.0, %v1667
        %1669 = vmatmul.bf16.gmra.mxu0 %v1512
        %v1670 = vpop.f32.mrf.mxu0
        %v1671 = vadd.f32 0.0, %v1670
        %v1672 = vpop.f32.mrf.mxu0
        %v1673 = vadd.f32 0.0, %v1672
        %1674 = vdwg.mxu0
        %1675 = vmatpush.bf16.msra.mxu0 %v1609
        %1676 = vmatpush.bf16.msra.mxu0 %v1608
        %1677 = vmatpush.bf16.msra.mxu0 %v1607
        %1678 = vmatpush.bf16.msra.mxu0 %v1606
        %1679 = vmatpush.bf16.msra.mxu0 %v1605
        %1680 = vmatpush.bf16.msra.mxu0 %v1604
        %1681 = vmatpush.bf16.msra.mxu0 %v1603
        %1682 = vmatpush.bf16.msra.mxu0 %v1602
        %1683 = vmatmul.bf16.gmra.mxu0 %v1499
        %v1684 = vpop.f32.mrf.mxu0
        %v1685 = vadd.f32 %v1636, %v1684
        %v1686 = vpop.f32.mrf.mxu0
        %v1687 = vadd.f32 %v1638, %v1686
        %1688 = vmatmul.bf16.gmra.mxu0 %v1501
        %v1689 = vpop.f32.mrf.mxu0
        %v1690 = vadd.f32 %v1641, %v1689
        %v1691 = vpop.f32.mrf.mxu0
        %v1692 = vadd.f32 %v1643, %v1691
        %1693 = vmatmul.bf16.gmra.mxu0 %v1503
        %v1694 = vpop.f32.mrf.mxu0
        %v1695 = vadd.f32 %v1646, %v1694
        %v1696 = vpop.f32.mrf.mxu0
        %v1697 = vadd.f32 %v1648, %v1696
        %1698 = vmatmul.bf16.gmra.mxu0 %v1505
        %v1699 = vpop.f32.mrf.mxu0
        %v1700 = vadd.f32 %v1651, %v1699
        %v1701 = vpop.f32.mrf.mxu0
        %v1702 = vadd.f32 %v1653, %v1701
        %1703 = vmatmul.bf16.gmra.mxu0 %v1507
        %v1704 = vpop.f32.mrf.mxu0
        %v1705 = vadd.f32 %v1656, %v1704
        %v1706 = vpop.f32.mrf.mxu0
        %v1707 = vadd.f32 %v1658, %v1706
        %1708 = vmatmul.bf16.gmra.mxu0 %v1509
        %v1709 = vpop.f32.mrf.mxu0
        %v1710 = vadd.f32 %v1661, %v1709
        %v1711 = vpop.f32.mrf.mxu0
        %v1712 = vadd.f32 %v1663, %v1711
        %1713 = vmatmul.bf16.gmra.mxu0 %v1511
        %v1714 = vpop.f32.mrf.mxu0
        %v1715 = vadd.f32 %v1666, %v1714
        %v1716 = vpop.f32.mrf.mxu0
        %v1717 = vadd.f32 %v1668, %v1716
        %1718 = vmatmul.bf16.gmra.mxu0 %v1513
        %v1719 = vpop.f32.mrf.mxu0
        %v1720 = vadd.f32 %v1671, %v1719
        %v1721 = vpop.f32.mrf.mxu0
        %v1722 = vadd.f32 %v1673, %v1721
        %1723 = vdwg.mxu0
        %v1724 = vsub.f32 %v1411, %v1685
        %v1725 = vsub.f32 %v1413, %v1687
        %v1726 = vsub.f32 %v1416, %v1690
        %v1727 = vsub.f32 %v1418, %v1692
        %v1728 = vsub.f32 %v1421, %v1695
        %v1729 = vsub.f32 %v1423, %v1697
        %v1730 = vsub.f32 %v1426, %v1700
        %v1731 = vsub.f32 %v1428, %v1702
        %v1732 = vsub.f32 %v1431, %v1705
        %v1733 = vsub.f32 %v1433, %v1707
        %v1734 = vsub.f32 %v1436, %v1710
        %v1735 = vsub.f32 %v1438, %v1712
        %v1736 = vsub.f32 %v1441, %v1715
        %v1737 = vsub.f32 %v1443, %v1717
        %v1738 = vsub.f32 %v1446, %v1720
        %v1739 = vsub.f32 %v1448, %v1722
        %v1756 = vunpack.c.l.b16 %v1016
        %v1757 = vunpack.c.h.b16 %v1016
        %v1758 = vunpack.c.l.b16 %v1017
        %v1759 = vunpack.c.h.b16 %v1017
        %v1760 = vunpack.c.l.b16 %v1018
        %v1761 = vunpack.c.h.b16 %v1018
        %v1762 = vunpack.c.l.b16 %v1019
        %v1763 = vunpack.c.h.b16 %v1019
        %v1764 = vunpack.c.l.b16 %v1020
        %v1765 = vunpack.c.h.b16 %v1020
        %v1766 = vunpack.c.l.b16 %v1021
        %v1767 = vunpack.c.h.b16 %v1021
        %v1768 = vunpack.c.l.b16 %v1022
        %v1769 = vunpack.c.h.b16 %v1022
        %v1770 = vunpack.c.l.b16 %v1023
        %v1771 = vunpack.c.h.b16 %v1023
        %v1772 = vunpack.c.l.b16 %v1024
        %v1773 = vunpack.c.h.b16 %v1024
        %v1774 = vunpack.c.l.b16 %v1025
        %v1775 = vunpack.c.h.b16 %v1025
        %v1776 = vunpack.c.l.b16 %v1026
        %v1777 = vunpack.c.h.b16 %v1026
        %v1778 = vunpack.c.l.b16 %v1027
        %v1779 = vunpack.c.h.b16 %v1027
        %v1780 = vunpack.c.l.b16 %v1028
        %v1781 = vunpack.c.h.b16 %v1028
        %v1782 = vunpack.c.l.b16 %v1029
        %v1783 = vunpack.c.h.b16 %v1029
        %v1784 = vunpack.c.l.b16 %v1030
        %v1785 = vunpack.c.h.b16 %v1030
        %v1786 = vunpack.c.l.b16 %v1031
        %v1787 = vunpack.c.h.b16 %v1031
        %v1788 = vpack.c.b16 %v1758, %v1756
        %v1789 = vpack.c.b16 %v1759, %v1757
        %v1790 = vpack.c.b16 %v1762, %v1760
        %v1791 = vpack.c.b16 %v1763, %v1761
        %v1792 = vpack.c.b16 %v1766, %v1764
        %v1793 = vpack.c.b16 %v1767, %v1765
        %v1794 = vpack.c.b16 %v1770, %v1768
        %v1795 = vpack.c.b16 %v1771, %v1769
        %v1796 = vpack.c.b16 %v1774, %v1772
        %v1797 = vpack.c.b16 %v1775, %v1773
        %v1798 = vpack.c.b16 %v1778, %v1776
        %v1799 = vpack.c.b16 %v1779, %v1777
        %v1800 = vpack.c.b16 %v1782, %v1780
        %v1801 = vpack.c.b16 %v1783, %v1781
        %v1802 = vpack.c.b16 %v1786, %v1784
        %v1803 = vpack.c.b16 %v1787, %v1785
        %v1852 = vunpack.c.l.b16 %v1112
        %v1853 = vunpack.c.l.b16 %v1113
        %v1854 = vunpack.c.l.b16 %v1114
        %v1855 = vunpack.c.l.b16 %v1115
        %v1856 = vunpack.c.l.b16 %v1116
        %v1857 = vunpack.c.l.b16 %v1117
        %v1858 = vunpack.c.l.b16 %v1118
        %v1859 = vunpack.c.l.b16 %v1119
        %v1860 = vunpack.c.l.b16 %v1120
        %v1861 = vunpack.c.l.b16 %v1121
        %v1862 = vunpack.c.l.b16 %v1122
        %v1863 = vunpack.c.l.b16 %v1123
        %v1864 = vunpack.c.l.b16 %v1124
        %v1865 = vunpack.c.l.b16 %v1125
        %v1866 = vunpack.c.l.b16 %v1126
        %v1867 = vunpack.c.l.b16 %v1127
        %v1868 = vunpack.c.l.b16 %v1128
        %v1869 = vunpack.c.l.b16 %v1129
        %v1870 = vunpack.c.l.b16 %v1130
        %v1871 = vunpack.c.l.b16 %v1131
        %v1872 = vunpack.c.l.b16 %v1132
        %v1873 = vunpack.c.l.b16 %v1133
        %v1874 = vunpack.c.l.b16 %v1134
        %v1875 = vunpack.c.l.b16 %v1135
        %v1876 = vunpack.c.l.b16 %v1136
        %v1877 = vunpack.c.l.b16 %v1137
        %v1878 = vunpack.c.l.b16 %v1138
        %v1879 = vunpack.c.l.b16 %v1139
        %v1880 = vunpack.c.l.b16 %v1140
        %v1881 = vunpack.c.l.b16 %v1141
        %v1882 = vunpack.c.l.b16 %v1142
        %v1883 = vunpack.c.l.b16 %v1143
        %v1884 = vpack.c.b16 %v1853, %v1852
        %v1885 = vpack.c.b16 %v1855, %v1854
        %v1886 = vpack.c.b16 %v1857, %v1856
        %v1887 = vpack.c.b16 %v1859, %v1858
        %v1888 = vpack.c.b16 %v1861, %v1860
        %v1889 = vpack.c.b16 %v1863, %v1862
        %v1890 = vpack.c.b16 %v1865, %v1864
        %v1891 = vpack.c.b16 %v1867, %v1866
        %v1892 = vpack.c.b16 %v1869, %v1868
        %v1893 = vpack.c.b16 %v1871, %v1870
        %v1894 = vpack.c.b16 %v1873, %v1872
        %v1895 = vpack.c.b16 %v1875, %v1874
        %v1896 = vpack.c.b16 %v1877, %v1876
        %v1897 = vpack.c.b16 %v1879, %v1878
        %v1898 = vpack.c.b16 %v1881, %v1880
        %v1899 = vpack.c.b16 %v1883, %v1882
        %1916 = vmatpush.bf16.msra.mxu0 %v1891
        %1917 = vmatpush.bf16.msra.mxu0 %v1890
        %1918 = vmatpush.bf16.msra.mxu0 %v1889
        %1919 = vmatpush.bf16.msra.mxu0 %v1888
        %1920 = vmatpush.bf16.msra.mxu0 %v1887
        %1921 = vmatpush.bf16.msra.mxu0 %v1886
        %1922 = vmatpush.bf16.msra.mxu0 %v1885
        %1923 = vmatpush.bf16.msra.mxu0 %v1884
        %1924 = vmatmul.bf16.gmra.mxu0 %v1788
        %v1925 = vpop.f32.mrf.mxu0
        %v1926 = vadd.f32 0.0, %v1925
        %v1927 = vpop.f32.mrf.mxu0
        %v1928 = vadd.f32 0.0, %v1927
        %1929 = vmatmul.bf16.gmra.mxu0 %v1790
        %v1930 = vpop.f32.mrf.mxu0
        %v1931 = vadd.f32 0.0, %v1930
        %v1932 = vpop.f32.mrf.mxu0
        %v1933 = vadd.f32 0.0, %v1932
        %1934 = vmatmul.bf16.gmra.mxu0 %v1792
        %v1935 = vpop.f32.mrf.mxu0
        %v1936 = vadd.f32 0.0, %v1935
        %v1937 = vpop.f32.mrf.mxu0
        %v1938 = vadd.f32 0.0, %v1937
        %1939 = vmatmul.bf16.gmra.mxu0 %v1794
        %v1940 = vpop.f32.mrf.mxu0
        %v1941 = vadd.f32 0.0, %v1940
        %v1942 = vpop.f32.mrf.mxu0
        %v1943 = vadd.f32 0.0, %v1942
        %1944 = vmatmul.bf16.gmra.mxu0 %v1796
        %v1945 = vpop.f32.mrf.mxu0
        %v1946 = vadd.f32 0.0, %v1945
        %v1947 = vpop.f32.mrf.mxu0
        %v1948 = vadd.f32 0.0, %v1947
        %1949 = vmatmul.bf16.gmra.mxu0 %v1798
        %v1950 = vpop.f32.mrf.mxu0
        %v1951 = vadd.f32 0.0, %v1950
        %v1952 = vpop.f32.mrf.mxu0
        %v1953 = vadd.f32 0.0, %v1952
        %1954 = vmatmul.bf16.gmra.mxu0 %v1800
        %v1955 = vpop.f32.mrf.mxu0
        %v1956 = vadd.f32 0.0, %v1955
        %v1957 = vpop.f32.mrf.mxu0
        %v1958 = vadd.f32 0.0, %v1957
        %1959 = vmatmul.bf16.gmra.mxu0 %v1802
        %v1960 = vpop.f32.mrf.mxu0
        %v1961 = vadd.f32 0.0, %v1960
        %v1962 = vpop.f32.mrf.mxu0
        %v1963 = vadd.f32 0.0, %v1962
        %1964 = vdwg.mxu0
        %1965 = vmatpush.bf16.msra.mxu0 %v1899
        %1966 = vmatpush.bf16.msra.mxu0 %v1898
        %1967 = vmatpush.bf16.msra.mxu0 %v1897
        %1968 = vmatpush.bf16.msra.mxu0 %v1896
        %1969 = vmatpush.bf16.msra.mxu0 %v1895
        %1970 = vmatpush.bf16.msra.mxu0 %v1894
        %1971 = vmatpush.bf16.msra.mxu0 %v1893
        %1972 = vmatpush.bf16.msra.mxu0 %v1892
        %1973 = vmatmul.bf16.gmra.mxu0 %v1789
        %v1974 = vpop.f32.mrf.mxu0
        %v1975 = vadd.f32 %v1926, %v1974
        %v1976 = vpop.f32.mrf.mxu0
        %v1977 = vadd.f32 %v1928, %v1976
        %1978 = vmatmul.bf16.gmra.mxu0 %v1791
        %v1979 = vpop.f32.mrf.mxu0
        %v1980 = vadd.f32 %v1931, %v1979
        %v1981 = vpop.f32.mrf.mxu0
        %v1982 = vadd.f32 %v1933, %v1981
        %1983 = vmatmul.bf16.gmra.mxu0 %v1793
        %v1984 = vpop.f32.mrf.mxu0
        %v1985 = vadd.f32 %v1936, %v1984
        %v1986 = vpop.f32.mrf.mxu0
        %v1987 = vadd.f32 %v1938, %v1986
        %1988 = vmatmul.bf16.gmra.mxu0 %v1795
        %v1989 = vpop.f32.mrf.mxu0
        %v1990 = vadd.f32 %v1941, %v1989
        %v1991 = vpop.f32.mrf.mxu0
        %v1992 = vadd.f32 %v1943, %v1991
        %1993 = vmatmul.bf16.gmra.mxu0 %v1797
        %v1994 = vpop.f32.mrf.mxu0
        %v1995 = vadd.f32 %v1946, %v1994
        %v1996 = vpop.f32.mrf.mxu0
        %v1997 = vadd.f32 %v1948, %v1996
        %1998 = vmatmul.bf16.gmra.mxu0 %v1799
        %v1999 = vpop.f32.mrf.mxu0
        %v2000 = vadd.f32 %v1951, %v1999
        %v2001 = vpop.f32.mrf.mxu0
        %v2002 = vadd.f32 %v1953, %v2001
        %2003 = vmatmul.bf16.gmra.mxu0 %v1801
        %v2004 = vpop.f32.mrf.mxu0
        %v2005 = vadd.f32 %v1956, %v2004
        %v2006 = vpop.f32.mrf.mxu0
        %v2007 = vadd.f32 %v1958, %v2006
        %2008 = vmatmul.bf16.gmra.mxu0 %v1803
        %v2009 = vpop.f32.mrf.mxu0
        %v2010 = vadd.f32 %v1961, %v2009
        %v2011 = vpop.f32.mrf.mxu0
        %v2012 = vadd.f32 %v1963, %v2011
        %2013 = vdwg.mxu0
        %v2014 = vsub.f32 %v1724, %v1975
        %v2015 = vsub.f32 %v1725, %v1977
        %v2016 = vsub.f32 %v1726, %v1980
        %v2017 = vsub.f32 %v1727, %v1982
        %v2018 = vsub.f32 %v1728, %v1985
        %v2019 = vsub.f32 %v1729, %v1987
        %v2020 = vsub.f32 %v1730, %v1990
        %v2021 = vsub.f32 %v1731, %v1992
        %v2022 = vsub.f32 %v1732, %v1995
        %v2023 = vsub.f32 %v1733, %v1997
        %v2024 = vsub.f32 %v1734, %v2000
        %v2025 = vsub.f32 %v1735, %v2002
        %v2026 = vsub.f32 %v1736, %v2005
        %v2027 = vsub.f32 %v1737, %v2007
        %v2028 = vsub.f32 %v1738, %v2010
        %v2029 = vsub.f32 %v1739, %v2012
        %v2046 = vunpack.c.l.b16 %v1032
        %v2047 = vunpack.c.h.b16 %v1032
        %v2048 = vunpack.c.l.b16 %v1033
        %v2049 = vunpack.c.h.b16 %v1033
        %v2050 = vunpack.c.l.b16 %v1034
        %v2051 = vunpack.c.h.b16 %v1034
        %v2052 = vunpack.c.l.b16 %v1035
        %v2053 = vunpack.c.h.b16 %v1035
        %v2054 = vunpack.c.l.b16 %v1036
        %v2055 = vunpack.c.h.b16 %v1036
        %v2056 = vunpack.c.l.b16 %v1037
        %v2057 = vunpack.c.h.b16 %v1037
        %v2058 = vunpack.c.l.b16 %v1038
        %v2059 = vunpack.c.h.b16 %v1038
        %v2060 = vunpack.c.l.b16 %v1039
        %v2061 = vunpack.c.h.b16 %v1039
        %v2062 = vunpack.c.l.b16 %v1040
        %v2063 = vunpack.c.h.b16 %v1040
        %v2064 = vunpack.c.l.b16 %v1041
        %v2065 = vunpack.c.h.b16 %v1041
        %v2066 = vunpack.c.l.b16 %v1042
        %v2067 = vunpack.c.h.b16 %v1042
        %v2068 = vunpack.c.l.b16 %v1043
        %v2069 = vunpack.c.h.b16 %v1043
        %v2070 = vunpack.c.l.b16 %v1044
        %v2071 = vunpack.c.h.b16 %v1044
        %v2072 = vunpack.c.l.b16 %v1045
        %v2073 = vunpack.c.h.b16 %v1045
        %v2074 = vunpack.c.l.b16 %v1046
        %v2075 = vunpack.c.h.b16 %v1046
        %v2076 = vunpack.c.l.b16 %v1047
        %v2077 = vunpack.c.h.b16 %v1047
        %v2078 = vpack.c.b16 %v2048, %v2046
        %v2079 = vpack.c.b16 %v2049, %v2047
        %v2080 = vpack.c.b16 %v2052, %v2050
        %v2081 = vpack.c.b16 %v2053, %v2051
        %v2082 = vpack.c.b16 %v2056, %v2054
        %v2083 = vpack.c.b16 %v2057, %v2055
        %v2084 = vpack.c.b16 %v2060, %v2058
        %v2085 = vpack.c.b16 %v2061, %v2059
        %v2086 = vpack.c.b16 %v2064, %v2062
        %v2087 = vpack.c.b16 %v2065, %v2063
        %v2088 = vpack.c.b16 %v2068, %v2066
        %v2089 = vpack.c.b16 %v2069, %v2067
        %v2090 = vpack.c.b16 %v2072, %v2070
        %v2091 = vpack.c.b16 %v2073, %v2071
        %v2092 = vpack.c.b16 %v2076, %v2074
        %v2093 = vpack.c.b16 %v2077, %v2075
        %v2142 = vunpack.c.l.b16 %v1144
        %v2143 = vunpack.c.l.b16 %v1145
        %v2144 = vunpack.c.l.b16 %v1146
        %v2145 = vunpack.c.l.b16 %v1147
        %v2146 = vunpack.c.l.b16 %v1148
        %v2147 = vunpack.c.l.b16 %v1149
        %v2148 = vunpack.c.l.b16 %v1150
        %v2149 = vunpack.c.l.b16 %v1151
        %v2150 = vunpack.c.l.b16 %v1152
        %v2151 = vunpack.c.l.b16 %v1153
        %v2152 = vunpack.c.l.b16 %v1154
        %v2153 = vunpack.c.l.b16 %v1155
        %v2154 = vunpack.c.l.b16 %v1156
        %v2155 = vunpack.c.l.b16 %v1157
        %v2156 = vunpack.c.l.b16 %v1158
        %v2157 = vunpack.c.l.b16 %v1159
        %v2158 = vunpack.c.l.b16 %v1160
        %v2159 = vunpack.c.l.b16 %v1161
        %v2160 = vunpack.c.l.b16 %v1162
        %v2161 = vunpack.c.l.b16 %v1163
        %v2162 = vunpack.c.l.b16 %v1164
        %v2163 = vunpack.c.l.b16 %v1165
        %v2164 = vunpack.c.l.b16 %v1166
        %v2165 = vunpack.c.l.b16 %v1167
        %v2166 = vunpack.c.l.b16 %v1168
        %v2167 = vunpack.c.l.b16 %v1169
        %v2168 = vunpack.c.l.b16 %v1170
        %v2169 = vunpack.c.l.b16 %v1171
        %v2170 = vunpack.c.l.b16 %v1172
        %v2171 = vunpack.c.l.b16 %v1173
        %v2172 = vunpack.c.l.b16 %v1174
        %v2173 = vunpack.c.l.b16 %v1175
        %v2174 = vpack.c.b16 %v2143, %v2142
        %v2175 = vpack.c.b16 %v2145, %v2144
        %v2176 = vpack.c.b16 %v2147, %v2146
        %v2177 = vpack.c.b16 %v2149, %v2148
        %v2178 = vpack.c.b16 %v2151, %v2150
        %v2179 = vpack.c.b16 %v2153, %v2152
        %v2180 = vpack.c.b16 %v2155, %v2154
        %v2181 = vpack.c.b16 %v2157, %v2156
        %v2182 = vpack.c.b16 %v2159, %v2158
        %v2183 = vpack.c.b16 %v2161, %v2160
        %v2184 = vpack.c.b16 %v2163, %v2162
        %v2185 = vpack.c.b16 %v2165, %v2164
        %v2186 = vpack.c.b16 %v2167, %v2166
        %v2187 = vpack.c.b16 %v2169, %v2168
        %v2188 = vpack.c.b16 %v2171, %v2170
        %v2189 = vpack.c.b16 %v2173, %v2172
        %2206 = vmatpush.bf16.msra.mxu0 %v2181
        %2207 = vmatpush.bf16.msra.mxu0 %v2180
        %2208 = vmatpush.bf16.msra.mxu0 %v2179
        %2209 = vmatpush.bf16.msra.mxu0 %v2178
        %2210 = vmatpush.bf16.msra.mxu0 %v2177
        %2211 = vmatpush.bf16.msra.mxu0 %v2176
        %2212 = vmatpush.bf16.msra.mxu0 %v2175
        %2213 = vmatpush.bf16.msra.mxu0 %v2174
        %2214 = vmatmul.bf16.gmra.mxu0 %v2078
        %v2215 = vpop.f32.mrf.mxu0
        %v2216 = vadd.f32 0.0, %v2215
        %v2217 = vpop.f32.mrf.mxu0
        %v2218 = vadd.f32 0.0, %v2217
        %2219 = vmatmul.bf16.gmra.mxu0 %v2080
        %v2220 = vpop.f32.mrf.mxu0
        %v2221 = vadd.f32 0.0, %v2220
        %v2222 = vpop.f32.mrf.mxu0
        %v2223 = vadd.f32 0.0, %v2222
        %2224 = vmatmul.bf16.gmra.mxu0 %v2082
        %v2225 = vpop.f32.mrf.mxu0
        %v2226 = vadd.f32 0.0, %v2225
        %v2227 = vpop.f32.mrf.mxu0
        %v2228 = vadd.f32 0.0, %v2227
        %2229 = vmatmul.bf16.gmra.mxu0 %v2084
        %v2230 = vpop.f32.mrf.mxu0
        %v2231 = vadd.f32 0.0, %v2230
        %v2232 = vpop.f32.mrf.mxu0
        %v2233 = vadd.f32 0.0, %v2232
        %2234 = vmatmul.bf16.gmra.mxu0 %v2086
        %v2235 = vpop.f32.mrf.mxu0
        %v2236 = vadd.f32 0.0, %v2235
        %v2237 = vpop.f32.mrf.mxu0
        %v2238 = vadd.f32 0.0, %v2237
        %2239 = vmatmul.bf16.gmra.mxu0 %v2088
        %v2240 = vpop.f32.mrf.mxu0
        %v2241 = vadd.f32 0.0, %v2240
        %v2242 = vpop.f32.mrf.mxu0
        %v2243 = vadd.f32 0.0, %v2242
        %2244 = vmatmul.bf16.gmra.mxu0 %v2090
        %v2245 = vpop.f32.mrf.mxu0
        %v2246 = vadd.f32 0.0, %v2245
        %v2247 = vpop.f32.mrf.mxu0
        %v2248 = vadd.f32 0.0, %v2247
        %2249 = vmatmul.bf16.gmra.mxu0 %v2092
        %v2250 = vpop.f32.mrf.mxu0
        %v2251 = vadd.f32 0.0, %v2250
        %v2252 = vpop.f32.mrf.mxu0
        %v2253 = vadd.f32 0.0, %v2252
        %2254 = vdwg.mxu0
        %2255 = vmatpush.bf16.msra.mxu0 %v2189
        %2256 = vmatpush.bf16.msra.mxu0 %v2188
        %2257 = vmatpush.bf16.msra.mxu0 %v2187
        %2258 = vmatpush.bf16.msra.mxu0 %v2186
        %2259 = vmatpush.bf16.msra.mxu0 %v2185
        %2260 = vmatpush.bf16.msra.mxu0 %v2184
        %2261 = vmatpush.bf16.msra.mxu0 %v2183
        %2262 = vmatpush.bf16.msra.mxu0 %v2182
        %2263 = vmatmul.bf16.gmra.mxu0 %v2079
        %v2264 = vpop.f32.mrf.mxu0
        %v2265 = vadd.f32 %v2216, %v2264
        %v2266 = vpop.f32.mrf.mxu0
        %v2267 = vadd.f32 %v2218, %v2266
        %2268 = vmatmul.bf16.gmra.mxu0 %v2081
        %v2269 = vpop.f32.mrf.mxu0
        %v2270 = vadd.f32 %v2221, %v2269
        %v2271 = vpop.f32.mrf.mxu0
        %v2272 = vadd.f32 %v2223, %v2271
        %2273 = vmatmul.bf16.gmra.mxu0 %v2083
        %v2274 = vpop.f32.mrf.mxu0
        %v2275 = vadd.f32 %v2226, %v2274
        %v2276 = vpop.f32.mrf.mxu0
        %v2277 = vadd.f32 %v2228, %v2276
        %2278 = vmatmul.bf16.gmra.mxu0 %v2085
        %v2279 = vpop.f32.mrf.mxu0
        %v2280 = vadd.f32 %v2231, %v2279
        %v2281 = vpop.f32.mrf.mxu0
        %v2282 = vadd.f32 %v2233, %v2281
        %2283 = vmatmul.bf16.gmra.mxu0 %v2087
        %v2284 = vpop.f32.mrf.mxu0
        %v2285 = vadd.f32 %v2236, %v2284
        %v2286 = vpop.f32.mrf.mxu0
        %v2287 = vadd.f32 %v2238, %v2286
        %2288 = vmatmul.bf16.gmra.mxu0 %v2089
        %v2289 = vpop.f32.mrf.mxu0
        %v2290 = vadd.f32 %v2241, %v2289
        %v2291 = vpop.f32.mrf.mxu0
        %v2292 = vadd.f32 %v2243, %v2291
        %2293 = vmatmul.bf16.gmra.mxu0 %v2091
        %v2294 = vpop.f32.mrf.mxu0
        %v2295 = vadd.f32 %v2246, %v2294
        %v2296 = vpop.f32.mrf.mxu0
        %v2297 = vadd.f32 %v2248, %v2296
        %2298 = vmatmul.bf16.gmra.mxu0 %v2093
        %v2299 = vpop.f32.mrf.mxu0
        %v2300 = vadd.f32 %v2251, %v2299
        %v2301 = vpop.f32.mrf.mxu0
        %v2302 = vadd.f32 %v2253, %v2301
        %2303 = vdwg.mxu0
        %v2304 = vsub.f32 %v2014, %v2265
        %v2305 = vsub.f32 %v2015, %v2267
        %v2306 = vsub.f32 %v2016, %v2270
        %v2307 = vsub.f32 %v2017, %v2272
        %v2308 = vsub.f32 %v2018, %v2275
        %v2309 = vsub.f32 %v2019, %v2277
        %v2310 = vsub.f32 %v2020, %v2280
        %v2311 = vsub.f32 %v2021, %v2282
        %v2312 = vsub.f32 %v2022, %v2285
        %v2313 = vsub.f32 %v2023, %v2287
        %v2314 = vsub.f32 %v2024, %v2290
        %v2315 = vsub.f32 %v2025, %v2292
        %v2316 = vsub.f32 %v2026, %v2295
        %v2317 = vsub.f32 %v2027, %v2297
        %v2318 = vsub.f32 %v2028, %v2300
        %v2319 = vsub.f32 %v2029, %v2302
        %2320 = vmatpush.bf16.msra.mxu0 %v1327
        %2321 = vmatpush.bf16.msra.mxu0 %v1326
        %2322 = vmatpush.bf16.msra.mxu0 %v1325
        %2323 = vmatpush.bf16.msra.mxu0 %v1324
        %2324 = vmatpush.bf16.msra.mxu0 %v1323
        %2325 = vmatpush.bf16.msra.mxu0 %v1322
        %2326 = vmatpush.bf16.msra.mxu0 %v1321
        %2327 = vmatpush.bf16.msra.mxu0 %v1320
        %2328 = vmatmul.bf16.gmra.mxu0 %v1498
        %v2329 = vpop.f32.mrf.mxu0
        %v2330 = vadd.f32 0.0, %v2329
        %v2331 = vpop.f32.mrf.mxu0
        %v2332 = vadd.f32 0.0, %v2331
        %2333 = vmatmul.bf16.gmra.mxu0 %v1500
        %v2334 = vpop.f32.mrf.mxu0
        %v2335 = vadd.f32 0.0, %v2334
        %v2336 = vpop.f32.mrf.mxu0
        %v2337 = vadd.f32 0.0, %v2336
        %2338 = vmatmul.bf16.gmra.mxu0 %v1502
        %v2339 = vpop.f32.mrf.mxu0
        %v2340 = vadd.f32 0.0, %v2339
        %v2341 = vpop.f32.mrf.mxu0
        %v2342 = vadd.f32 0.0, %v2341
        %2343 = vmatmul.bf16.gmra.mxu0 %v1504
        %v2344 = vpop.f32.mrf.mxu0
        %v2345 = vadd.f32 0.0, %v2344
        %v2346 = vpop.f32.mrf.mxu0
        %v2347 = vadd.f32 0.0, %v2346
        %2348 = vmatmul.bf16.gmra.mxu0 %v1506
        %v2349 = vpop.f32.mrf.mxu0
        %v2350 = vadd.f32 0.0, %v2349
        %v2351 = vpop.f32.mrf.mxu0
        %v2352 = vadd.f32 0.0, %v2351
        %2353 = vmatmul.bf16.gmra.mxu0 %v1508
        %v2354 = vpop.f32.mrf.mxu0
        %v2355 = vadd.f32 0.0, %v2354
        %v2356 = vpop.f32.mrf.mxu0
        %v2357 = vadd.f32 0.0, %v2356
        %2358 = vmatmul.bf16.gmra.mxu0 %v1510
        %v2359 = vpop.f32.mrf.mxu0
        %v2360 = vadd.f32 0.0, %v2359
        %v2361 = vpop.f32.mrf.mxu0
        %v2362 = vadd.f32 0.0, %v2361
        %2363 = vmatmul.bf16.gmra.mxu0 %v1512
        %v2364 = vpop.f32.mrf.mxu0
        %v2365 = vadd.f32 0.0, %v2364
        %v2366 = vpop.f32.mrf.mxu0
        %v2367 = vadd.f32 0.0, %v2366
        %2368 = vdwg.mxu0
        %2369 = vmatpush.bf16.msra.mxu0 %v1335
        %2370 = vmatpush.bf16.msra.mxu0 %v1334
        %2371 = vmatpush.bf16.msra.mxu0 %v1333
        %2372 = vmatpush.bf16.msra.mxu0 %v1332
        %2373 = vmatpush.bf16.msra.mxu0 %v1331
        %2374 = vmatpush.bf16.msra.mxu0 %v1330
        %2375 = vmatpush.bf16.msra.mxu0 %v1329
        %2376 = vmatpush.bf16.msra.mxu0 %v1328
        %2377 = vmatmul.bf16.gmra.mxu0 %v1499
        %v2378 = vpop.f32.mrf.mxu0
        %v2379 = vadd.f32 %v2330, %v2378
        %v2380 = vpop.f32.mrf.mxu0
        %v2381 = vadd.f32 %v2332, %v2380
        %2382 = vmatmul.bf16.gmra.mxu0 %v1501
        %v2383 = vpop.f32.mrf.mxu0
        %v2384 = vadd.f32 %v2335, %v2383
        %v2385 = vpop.f32.mrf.mxu0
        %v2386 = vadd.f32 %v2337, %v2385
        %2387 = vmatmul.bf16.gmra.mxu0 %v1503
        %v2388 = vpop.f32.mrf.mxu0
        %v2389 = vadd.f32 %v2340, %v2388
        %v2390 = vpop.f32.mrf.mxu0
        %v2391 = vadd.f32 %v2342, %v2390
        %2392 = vmatmul.bf16.gmra.mxu0 %v1505
        %v2393 = vpop.f32.mrf.mxu0
        %v2394 = vadd.f32 %v2345, %v2393
        %v2395 = vpop.f32.mrf.mxu0
        %v2396 = vadd.f32 %v2347, %v2395
        %2397 = vmatmul.bf16.gmra.mxu0 %v1507
        %v2398 = vpop.f32.mrf.mxu0
        %v2399 = vadd.f32 %v2350, %v2398
        %v2400 = vpop.f32.mrf.mxu0
        %v2401 = vadd.f32 %v2352, %v2400
        %2402 = vmatmul.bf16.gmra.mxu0 %v1509
        %v2403 = vpop.f32.mrf.mxu0
        %v2404 = vadd.f32 %v2355, %v2403
        %v2405 = vpop.f32.mrf.mxu0
        %v2406 = vadd.f32 %v2357, %v2405
        %2407 = vmatmul.bf16.gmra.mxu0 %v1511
        %v2408 = vpop.f32.mrf.mxu0
        %v2409 = vadd.f32 %v2360, %v2408
        %v2410 = vpop.f32.mrf.mxu0
        %v2411 = vadd.f32 %v2362, %v2410
        %2412 = vmatmul.bf16.gmra.mxu0 %v1513
        %v2413 = vpop.f32.mrf.mxu0
        %v2414 = vadd.f32 %v2365, %v2413
        %v2415 = vpop.f32.mrf.mxu0
        %v2416 = vadd.f32 %v2367, %v2415
        %2417 = vdwg.mxu0
        %2418 = vmatpush.bf16.msra.mxu0 %v1601
        %2419 = vmatpush.bf16.msra.mxu0 %v1600
        %2420 = vmatpush.bf16.msra.mxu0 %v1599
        %2421 = vmatpush.bf16.msra.mxu0 %v1598
        %2422 = vmatpush.bf16.msra.mxu0 %v1597
        %2423 = vmatpush.bf16.msra.mxu0 %v1596
        %2424 = vmatpush.bf16.msra.mxu0 %v1595
        %2425 = vmatpush.bf16.msra.mxu0 %v1594
        %2426 = vmatmul.bf16.gmra.mxu0 %v1224
        %v2427 = vpop.f32.mrf.mxu0
        %v2428 = vadd.f32 %v2379, %v2427
        %v2429 = vpop.f32.mrf.mxu0
        %v2430 = vadd.f32 %v2381, %v2429
        %2431 = vmatmul.bf16.gmra.mxu0 %v1226
        %v2432 = vpop.f32.mrf.mxu0
        %v2433 = vadd.f32 %v2384, %v2432
        %v2434 = vpop.f32.mrf.mxu0
        %v2435 = vadd.f32 %v2386, %v2434
        %2436 = vmatmul.bf16.gmra.mxu0 %v1228
        %v2437 = vpop.f32.mrf.mxu0
        %v2438 = vadd.f32 %v2389, %v2437
        %v2439 = vpop.f32.mrf.mxu0
        %v2440 = vadd.f32 %v2391, %v2439
        %2441 = vmatmul.bf16.gmra.mxu0 %v1230
        %v2442 = vpop.f32.mrf.mxu0
        %v2443 = vadd.f32 %v2394, %v2442
        %v2444 = vpop.f32.mrf.mxu0
        %v2445 = vadd.f32 %v2396, %v2444
        %2446 = vmatmul.bf16.gmra.mxu0 %v1232
        %v2447 = vpop.f32.mrf.mxu0
        %v2448 = vadd.f32 %v2399, %v2447
        %v2449 = vpop.f32.mrf.mxu0
        %v2450 = vadd.f32 %v2401, %v2449
        %2451 = vmatmul.bf16.gmra.mxu0 %v1234
        %v2452 = vpop.f32.mrf.mxu0
        %v2453 = vadd.f32 %v2404, %v2452
        %v2454 = vpop.f32.mrf.mxu0
        %v2455 = vadd.f32 %v2406, %v2454
        %2456 = vmatmul.bf16.gmra.mxu0 %v1236
        %v2457 = vpop.f32.mrf.mxu0
        %v2458 = vadd.f32 %v2409, %v2457
        %v2459 = vpop.f32.mrf.mxu0
        %v2460 = vadd.f32 %v2411, %v2459
        %2461 = vmatmul.bf16.gmra.mxu0 %v1238
        %v2462 = vpop.f32.mrf.mxu0
        %v2463 = vadd.f32 %v2414, %v2462
        %v2464 = vpop.f32.mrf.mxu0
        %v2465 = vadd.f32 %v2416, %v2464
        %2466 = vdwg.mxu0
        %2467 = vmatpush.bf16.msra.mxu0 %v1609
        %2468 = vmatpush.bf16.msra.mxu0 %v1608
        %2469 = vmatpush.bf16.msra.mxu0 %v1607
        %2470 = vmatpush.bf16.msra.mxu0 %v1606
        %2471 = vmatpush.bf16.msra.mxu0 %v1605
        %2472 = vmatpush.bf16.msra.mxu0 %v1604
        %2473 = vmatpush.bf16.msra.mxu0 %v1603
        %2474 = vmatpush.bf16.msra.mxu0 %v1602
        %2475 = vmatmul.bf16.gmra.mxu0 %v1225
        %v2476 = vpop.f32.mrf.mxu0
        %v2477 = vadd.f32 %v2428, %v2476
        %v2478 = vpop.f32.mrf.mxu0
        %v2479 = vadd.f32 %v2430, %v2478
        %2480 = vmatmul.bf16.gmra.mxu0 %v1227
        %v2481 = vpop.f32.mrf.mxu0
        %v2482 = vadd.f32 %v2433, %v2481
        %v2483 = vpop.f32.mrf.mxu0
        %v2484 = vadd.f32 %v2435, %v2483
        %2485 = vmatmul.bf16.gmra.mxu0 %v1229
        %v2486 = vpop.f32.mrf.mxu0
        %v2487 = vadd.f32 %v2438, %v2486
        %v2488 = vpop.f32.mrf.mxu0
        %v2489 = vadd.f32 %v2440, %v2488
        %2490 = vmatmul.bf16.gmra.mxu0 %v1231
        %v2491 = vpop.f32.mrf.mxu0
        %v2492 = vadd.f32 %v2443, %v2491
        %v2493 = vpop.f32.mrf.mxu0
        %v2494 = vadd.f32 %v2445, %v2493
        %2495 = vmatmul.bf16.gmra.mxu0 %v1233
        %v2496 = vpop.f32.mrf.mxu0
        %v2497 = vadd.f32 %v2448, %v2496
        %v2498 = vpop.f32.mrf.mxu0
        %v2499 = vadd.f32 %v2450, %v2498
        %2500 = vmatmul.bf16.gmra.mxu0 %v1235
        %v2501 = vpop.f32.mrf.mxu0
        %v2502 = vadd.f32 %v2453, %v2501
        %v2503 = vpop.f32.mrf.mxu0
        %v2504 = vadd.f32 %v2455, %v2503
        %2505 = vmatmul.bf16.gmra.mxu0 %v1237
        %v2506 = vpop.f32.mrf.mxu0
        %v2507 = vadd.f32 %v2458, %v2506
        %v2508 = vpop.f32.mrf.mxu0
        %v2509 = vadd.f32 %v2460, %v2508
        %2510 = vmatmul.bf16.gmra.mxu0 %v1239
        %v2511 = vpop.f32.mrf.mxu0
        %v2512 = vadd.f32 %v2463, %v2511
        %v2513 = vpop.f32.mrf.mxu0
        %v2514 = vadd.f32 %v2465, %v2513
        %2515 = vdwg.mxu0
        %2516 = vmatpush.bf16.msra.mxu0 %v2181
        %2517 = vmatpush.bf16.msra.mxu0 %v2180
        %2518 = vmatpush.bf16.msra.mxu0 %v2179
        %2519 = vmatpush.bf16.msra.mxu0 %v2178
        %2520 = vmatpush.bf16.msra.mxu0 %v2177
        %2521 = vmatpush.bf16.msra.mxu0 %v2176
        %2522 = vmatpush.bf16.msra.mxu0 %v2175
        %2523 = vmatpush.bf16.msra.mxu0 %v2174
        %2524 = vmatmul.bf16.gmra.mxu0 %v1788
        %v2525 = vpop.f32.mrf.mxu0
        %v2526 = vadd.f32 0.0, %v2525
        %v2527 = vpop.f32.mrf.mxu0
        %v2528 = vadd.f32 0.0, %v2527
        %2529 = vmatmul.bf16.gmra.mxu0 %v1790
        %v2530 = vpop.f32.mrf.mxu0
        %v2531 = vadd.f32 0.0, %v2530
        %v2532 = vpop.f32.mrf.mxu0
        %v2533 = vadd.f32 0.0, %v2532
        %2534 = vmatmul.bf16.gmra.mxu0 %v1792
        %v2535 = vpop.f32.mrf.mxu0
        %v2536 = vadd.f32 0.0, %v2535
        %v2537 = vpop.f32.mrf.mxu0
        %v2538 = vadd.f32 0.0, %v2537
        %2539 = vmatmul.bf16.gmra.mxu0 %v1794
        %v2540 = vpop.f32.mrf.mxu0
        %v2541 = vadd.f32 0.0, %v2540
        %v2542 = vpop.f32.mrf.mxu0
        %v2543 = vadd.f32 0.0, %v2542
        %2544 = vmatmul.bf16.gmra.mxu0 %v1796
        %v2545 = vpop.f32.mrf.mxu0
        %v2546 = vadd.f32 0.0, %v2545
        %v2547 = vpop.f32.mrf.mxu0
        %v2548 = vadd.f32 0.0, %v2547
        %2549 = vmatmul.bf16.gmra.mxu0 %v1798
        %v2550 = vpop.f32.mrf.mxu0
        %v2551 = vadd.f32 0.0, %v2550
        %v2552 = vpop.f32.mrf.mxu0
        %v2553 = vadd.f32 0.0, %v2552
        %2554 = vmatmul.bf16.gmra.mxu0 %v1800
        %v2555 = vpop.f32.mrf.mxu0
        %v2556 = vadd.f32 0.0, %v2555
        %v2557 = vpop.f32.mrf.mxu0
        %v2558 = vadd.f32 0.0, %v2557
        %2559 = vmatmul.bf16.gmra.mxu0 %v1802
        %v2560 = vpop.f32.mrf.mxu0
        %v2561 = vadd.f32 0.0, %v2560
        %v2562 = vpop.f32.mrf.mxu0
        %v2563 = vadd.f32 0.0, %v2562
        %2564 = vdwg.mxu0
        %2565 = vmatpush.bf16.msra.mxu0 %v2189
        %2566 = vmatpush.bf16.msra.mxu0 %v2188
        %2567 = vmatpush.bf16.msra.mxu0 %v2187
        %2568 = vmatpush.bf16.msra.mxu0 %v2186
        %2569 = vmatpush.bf16.msra.mxu0 %v2185
        %2570 = vmatpush.bf16.msra.mxu0 %v2184
        %2571 = vmatpush.bf16.msra.mxu0 %v2183
        %2572 = vmatpush.bf16.msra.mxu0 %v2182
        %2573 = vmatmul.bf16.gmra.mxu0 %v1789
        %v2574 = vpop.f32.mrf.mxu0
        %v2575 = vadd.f32 %v2526, %v2574
        %v2576 = vpop.f32.mrf.mxu0
        %v2577 = vadd.f32 %v2528, %v2576
        %2578 = vmatmul.bf16.gmra.mxu0 %v1791
        %v2579 = vpop.f32.mrf.mxu0
        %v2580 = vadd.f32 %v2531, %v2579
        %v2581 = vpop.f32.mrf.mxu0
        %v2582 = vadd.f32 %v2533, %v2581
        %2583 = vmatmul.bf16.gmra.mxu0 %v1793
        %v2584 = vpop.f32.mrf.mxu0
        %v2585 = vadd.f32 %v2536, %v2584
        %v2586 = vpop.f32.mrf.mxu0
        %v2587 = vadd.f32 %v2538, %v2586
        %2588 = vmatmul.bf16.gmra.mxu0 %v1795
        %v2589 = vpop.f32.mrf.mxu0
        %v2590 = vadd.f32 %v2541, %v2589
        %v2591 = vpop.f32.mrf.mxu0
        %v2592 = vadd.f32 %v2543, %v2591
        %2593 = vmatmul.bf16.gmra.mxu0 %v1797
        %v2594 = vpop.f32.mrf.mxu0
        %v2595 = vadd.f32 %v2546, %v2594
        %v2596 = vpop.f32.mrf.mxu0
        %v2597 = vadd.f32 %v2548, %v2596
        %2598 = vmatmul.bf16.gmra.mxu0 %v1799
        %v2599 = vpop.f32.mrf.mxu0
        %v2600 = vadd.f32 %v2551, %v2599
        %v2601 = vpop.f32.mrf.mxu0
        %v2602 = vadd.f32 %v2553, %v2601
        %2603 = vmatmul.bf16.gmra.mxu0 %v1801
        %v2604 = vpop.f32.mrf.mxu0
        %v2605 = vadd.f32 %v2556, %v2604
        %v2606 = vpop.f32.mrf.mxu0
        %v2607 = vadd.f32 %v2558, %v2606
        %2608 = vmatmul.bf16.gmra.mxu0 %v1803
        %v2609 = vpop.f32.mrf.mxu0
        %v2610 = vadd.f32 %v2561, %v2609
        %v2611 = vpop.f32.mrf.mxu0
        %v2612 = vadd.f32 %v2563, %v2611
        %2613 = vdwg.mxu0
        %v2614 = vsub.f32 %v2477, %v2575
        %v2615 = vsub.f32 %v2479, %v2577
        %v2616 = vsub.f32 %v2482, %v2580
        %v2617 = vsub.f32 %v2484, %v2582
        %v2618 = vsub.f32 %v2487, %v2585
        %v2619 = vsub.f32 %v2489, %v2587
        %v2620 = vsub.f32 %v2492, %v2590
        %v2621 = vsub.f32 %v2494, %v2592
        %v2622 = vsub.f32 %v2497, %v2595
        %v2623 = vsub.f32 %v2499, %v2597
        %v2624 = vsub.f32 %v2502, %v2600
        %v2625 = vsub.f32 %v2504, %v2602
        %v2626 = vsub.f32 %v2507, %v2605
        %v2627 = vsub.f32 %v2509, %v2607
        %v2628 = vsub.f32 %v2512, %v2610
        %v2629 = vsub.f32 %v2514, %v2612
        %2630 = vmatpush.bf16.msra.mxu0 %v1891
        %2631 = vmatpush.bf16.msra.mxu0 %v1890
        %2632 = vmatpush.bf16.msra.mxu0 %v1889
        %2633 = vmatpush.bf16.msra.mxu0 %v1888
        %2634 = vmatpush.bf16.msra.mxu0 %v1887
        %2635 = vmatpush.bf16.msra.mxu0 %v1886
        %2636 = vmatpush.bf16.msra.mxu0 %v1885
        %2637 = vmatpush.bf16.msra.mxu0 %v1884
        %2638 = vmatmul.bf16.gmra.mxu0 %v2078
        %v2639 = vpop.f32.mrf.mxu0
        %v2640 = vadd.f32 0.0, %v2639
        %v2641 = vpop.f32.mrf.mxu0
        %v2642 = vadd.f32 0.0, %v2641
        %2643 = vmatmul.bf16.gmra.mxu0 %v2080
        %v2644 = vpop.f32.mrf.mxu0
        %v2645 = vadd.f32 0.0, %v2644
        %v2646 = vpop.f32.mrf.mxu0
        %v2647 = vadd.f32 0.0, %v2646
        %2648 = vmatmul.bf16.gmra.mxu0 %v2082
        %v2649 = vpop.f32.mrf.mxu0
        %v2650 = vadd.f32 0.0, %v2649
        %v2651 = vpop.f32.mrf.mxu0
        %v2652 = vadd.f32 0.0, %v2651
        %2653 = vmatmul.bf16.gmra.mxu0 %v2084
        %v2654 = vpop.f32.mrf.mxu0
        %v2655 = vadd.f32 0.0, %v2654
        %v2656 = vpop.f32.mrf.mxu0
        %v2657 = vadd.f32 0.0, %v2656
        %2658 = vmatmul.bf16.gmra.mxu0 %v2086
        %v2659 = vpop.f32.mrf.mxu0
        %v2660 = vadd.f32 0.0, %v2659
        %v2661 = vpop.f32.mrf.mxu0
        %v2662 = vadd.f32 0.0, %v2661
        %2663 = vmatmul.bf16.gmra.mxu0 %v2088
        %v2664 = vpop.f32.mrf.mxu0
        %v2665 = vadd.f32 0.0, %v2664
        %v2666 = vpop.f32.mrf.mxu0
        %v2667 = vadd.f32 0.0, %v2666
        %2668 = vmatmul.bf16.gmra.mxu0 %v2090
        %v2669 = vpop.f32.mrf.mxu0
        %v2670 = vadd.f32 0.0, %v2669
        %v2671 = vpop.f32.mrf.mxu0
        %v2672 = vadd.f32 0.0, %v2671
        %2673 = vmatmul.bf16.gmra.mxu0 %v2092
        %v2674 = vpop.f32.mrf.mxu0
        %v2675 = vadd.f32 0.0, %v2674
        %v2676 = vpop.f32.mrf.mxu0
        %v2677 = vadd.f32 0.0, %v2676
        %2678 = vdwg.mxu0
        %2679 = vmatpush.bf16.msra.mxu0 %v1899
        %2680 = vmatpush.bf16.msra.mxu0 %v1898
        %2681 = vmatpush.bf16.msra.mxu0 %v1897
        %2682 = vmatpush.bf16.msra.mxu0 %v1896
        %2683 = vmatpush.bf16.msra.mxu0 %v1895
        %2684 = vmatpush.bf16.msra.mxu0 %v1894
        %2685 = vmatpush.bf16.msra.mxu0 %v1893
        %2686 = vmatpush.bf16.msra.mxu0 %v1892
        %2687 = vmatmul.bf16.gmra.mxu0 %v2079
        %v2688 = vpop.f32.mrf.mxu0
        %v2689 = vadd.f32 %v2640, %v2688
        %v2690 = vpop.f32.mrf.mxu0
        %v2691 = vadd.f32 %v2642, %v2690
        %2692 = vmatmul.bf16.gmra.mxu0 %v2081
        %v2693 = vpop.f32.mrf.mxu0
        %v2694 = vadd.f32 %v2645, %v2693
        %v2695 = vpop.f32.mrf.mxu0
        %v2696 = vadd.f32 %v2647, %v2695
        %2697 = vmatmul.bf16.gmra.mxu0 %v2083
        %v2698 = vpop.f32.mrf.mxu0
        %v2699 = vadd.f32 %v2650, %v2698
        %v2700 = vpop.f32.mrf.mxu0
        %v2701 = vadd.f32 %v2652, %v2700
        %2702 = vmatmul.bf16.gmra.mxu0 %v2085
        %v2703 = vpop.f32.mrf.mxu0
        %v2704 = vadd.f32 %v2655, %v2703
        %v2705 = vpop.f32.mrf.mxu0
        %v2706 = vadd.f32 %v2657, %v2705
        %2707 = vmatmul.bf16.gmra.mxu0 %v2087
        %v2708 = vpop.f32.mrf.mxu0
        %v2709 = vadd.f32 %v2660, %v2708
        %v2710 = vpop.f32.mrf.mxu0
        %v2711 = vadd.f32 %v2662, %v2710
        %2712 = vmatmul.bf16.gmra.mxu0 %v2089
        %v2713 = vpop.f32.mrf.mxu0
        %v2714 = vadd.f32 %v2665, %v2713
        %v2715 = vpop.f32.mrf.mxu0
        %v2716 = vadd.f32 %v2667, %v2715
        %2717 = vmatmul.bf16.gmra.mxu0 %v2091
        %v2718 = vpop.f32.mrf.mxu0
        %v2719 = vadd.f32 %v2670, %v2718
        %v2720 = vpop.f32.mrf.mxu0
        %v2721 = vadd.f32 %v2672, %v2720
        %2722 = vmatmul.bf16.gmra.mxu0 %v2093
        %v2723 = vpop.f32.mrf.mxu0
        %v2724 = vadd.f32 %v2675, %v2723
        %v2725 = vpop.f32.mrf.mxu0
        %v2726 = vadd.f32 %v2677, %v2725
        %2727 = vdwg.mxu0
        %v2728 = vadd.f32 %v2614, %v2689
        %v2729 = vadd.f32 %v2615, %v2691
        %v2730 = vadd.f32 %v2616, %v2694
        %v2731 = vadd.f32 %v2617, %v2696
        %v2732 = vadd.f32 %v2618, %v2699
        %v2733 = vadd.f32 %v2619, %v2701
        %v2734 = vadd.f32 %v2620, %v2704
        %v2735 = vadd.f32 %v2621, %v2706
        %v2736 = vadd.f32 %v2622, %v2709
        %v2737 = vadd.f32 %v2623, %v2711
        %v2738 = vadd.f32 %v2624, %v2714
        %v2739 = vadd.f32 %v2625, %v2716
        %v2740 = vadd.f32 %v2626, %v2719
        %v2741 = vadd.f32 %v2627, %v2721
        %v2742 = vadd.f32 %v2628, %v2724
        %v2743 = vadd.f32 %v2629, %v2726
        %2744 = vmatpush.bf16.msra.mxu0 %v2181
        %2745 = vmatpush.bf16.msra.mxu0 %v2180
        %2746 = vmatpush.bf16.msra.mxu0 %v2179
        %2747 = vmatpush.bf16.msra.mxu0 %v2178
        %2748 = vmatpush.bf16.msra.mxu0 %v2177
        %2749 = vmatpush.bf16.msra.mxu0 %v2176
        %2750 = vmatpush.bf16.msra.mxu0 %v2175
        %2751 = vmatpush.bf16.msra.mxu0 %v2174
        %2752 = vmatmul.bf16.gmra.mxu0 %v1498
        %v2753 = vpop.f32.mrf.mxu0
        %v2754 = vadd.f32 0.0, %v2753
        %v2755 = vpop.f32.mrf.mxu0
        %v2756 = vadd.f32 0.0, %v2755
        %2757 = vmatmul.bf16.gmra.mxu0 %v1500
        %v2758 = vpop.f32.mrf.mxu0
        %v2759 = vadd.f32 0.0, %v2758
        %v2760 = vpop.f32.mrf.mxu0
        %v2761 = vadd.f32 0.0, %v2760
        %2762 = vmatmul.bf16.gmra.mxu0 %v1502
        %v2763 = vpop.f32.mrf.mxu0
        %v2764 = vadd.f32 0.0, %v2763
        %v2765 = vpop.f32.mrf.mxu0
        %v2766 = vadd.f32 0.0, %v2765
        %2767 = vmatmul.bf16.gmra.mxu0 %v1504
        %v2768 = vpop.f32.mrf.mxu0
        %v2769 = vadd.f32 0.0, %v2768
        %v2770 = vpop.f32.mrf.mxu0
        %v2771 = vadd.f32 0.0, %v2770
        %2772 = vmatmul.bf16.gmra.mxu0 %v1506
        %v2773 = vpop.f32.mrf.mxu0
        %v2774 = vadd.f32 0.0, %v2773
        %v2775 = vpop.f32.mrf.mxu0
        %v2776 = vadd.f32 0.0, %v2775
        %2777 = vmatmul.bf16.gmra.mxu0 %v1508
        %v2778 = vpop.f32.mrf.mxu0
        %v2779 = vadd.f32 0.0, %v2778
        %v2780 = vpop.f32.mrf.mxu0
        %v2781 = vadd.f32 0.0, %v2780
        %2782 = vmatmul.bf16.gmra.mxu0 %v1510
        %v2783 = vpop.f32.mrf.mxu0
        %v2784 = vadd.f32 0.0, %v2783
        %v2785 = vpop.f32.mrf.mxu0
        %v2786 = vadd.f32 0.0, %v2785
        %2787 = vmatmul.bf16.gmra.mxu0 %v1512
        %v2788 = vpop.f32.mrf.mxu0
        %v2789 = vadd.f32 0.0, %v2788
        %v2790 = vpop.f32.mrf.mxu0
        %v2791 = vadd.f32 0.0, %v2790
        %2792 = vdwg.mxu0
        %2793 = vmatpush.bf16.msra.mxu0 %v2189
        %2794 = vmatpush.bf16.msra.mxu0 %v2188
        %2795 = vmatpush.bf16.msra.mxu0 %v2187
        %2796 = vmatpush.bf16.msra.mxu0 %v2186
        %2797 = vmatpush.bf16.msra.mxu0 %v2185
        %2798 = vmatpush.bf16.msra.mxu0 %v2184
        %2799 = vmatpush.bf16.msra.mxu0 %v2183
        %2800 = vmatpush.bf16.msra.mxu0 %v2182
        %2801 = vmatmul.bf16.gmra.mxu0 %v1499
        %v2802 = vpop.f32.mrf.mxu0
        %v2803 = vadd.f32 %v2754, %v2802
        %v2804 = vpop.f32.mrf.mxu0
        %v2805 = vadd.f32 %v2756, %v2804
        %2806 = vmatmul.bf16.gmra.mxu0 %v1501
        %v2807 = vpop.f32.mrf.mxu0
        %v2808 = vadd.f32 %v2759, %v2807
        %v2809 = vpop.f32.mrf.mxu0
        %v2810 = vadd.f32 %v2761, %v2809
        %2811 = vmatmul.bf16.gmra.mxu0 %v1503
        %v2812 = vpop.f32.mrf.mxu0
        %v2813 = vadd.f32 %v2764, %v2812
        %v2814 = vpop.f32.mrf.mxu0
        %v2815 = vadd.f32 %v2766, %v2814
        %2816 = vmatmul.bf16.gmra.mxu0 %v1505
        %v2817 = vpop.f32.mrf.mxu0
        %v2818 = vadd.f32 %v2769, %v2817
        %v2819 = vpop.f32.mrf.mxu0
        %v2820 = vadd.f32 %v2771, %v2819
        %2821 = vmatmul.bf16.gmra.mxu0 %v1507
        %v2822 = vpop.f32.mrf.mxu0
        %v2823 = vadd.f32 %v2774, %v2822
        %v2824 = vpop.f32.mrf.mxu0
        %v2825 = vadd.f32 %v2776, %v2824
        %2826 = vmatmul.bf16.gmra.mxu0 %v1509
        %v2827 = vpop.f32.mrf.mxu0
        %v2828 = vadd.f32 %v2779, %v2827
        %v2829 = vpop.f32.mrf.mxu0
        %v2830 = vadd.f32 %v2781, %v2829
        %2831 = vmatmul.bf16.gmra.mxu0 %v1511
        %v2832 = vpop.f32.mrf.mxu0
        %v2833 = vadd.f32 %v2784, %v2832
        %v2834 = vpop.f32.mrf.mxu0
        %v2835 = vadd.f32 %v2786, %v2834
        %2836 = vmatmul.bf16.gmra.mxu0 %v1513
        %v2837 = vpop.f32.mrf.mxu0
        %v2838 = vadd.f32 %v2789, %v2837
        %v2839 = vpop.f32.mrf.mxu0
        %v2840 = vadd.f32 %v2791, %v2839
        %2841 = vdwg.mxu0
        %2842 = vmatpush.bf16.msra.mxu0 %v1891
        %2843 = vmatpush.bf16.msra.mxu0 %v1890
        %2844 = vmatpush.bf16.msra.mxu0 %v1889
        %2845 = vmatpush.bf16.msra.mxu0 %v1888
        %2846 = vmatpush.bf16.msra.mxu0 %v1887
        %2847 = vmatpush.bf16.msra.mxu0 %v1886
        %2848 = vmatpush.bf16.msra.mxu0 %v1885
        %2849 = vmatpush.bf16.msra.mxu0 %v1884
        %2850 = vmatmul.bf16.gmra.mxu0 %v1224
        %v2851 = vpop.f32.mrf.mxu0
        %v2852 = vadd.f32 %v2803, %v2851
        %v2853 = vpop.f32.mrf.mxu0
        %v2854 = vadd.f32 %v2805, %v2853
        %2855 = vmatmul.bf16.gmra.mxu0 %v1226
        %v2856 = vpop.f32.mrf.mxu0
        %v2857 = vadd.f32 %v2808, %v2856
        %v2858 = vpop.f32.mrf.mxu0
        %v2859 = vadd.f32 %v2810, %v2858
        %2860 = vmatmul.bf16.gmra.mxu0 %v1228
        %v2861 = vpop.f32.mrf.mxu0
        %v2862 = vadd.f32 %v2813, %v2861
        %v2863 = vpop.f32.mrf.mxu0
        %v2864 = vadd.f32 %v2815, %v2863
        %2865 = vmatmul.bf16.gmra.mxu0 %v1230
        %v2866 = vpop.f32.mrf.mxu0
        %v2867 = vadd.f32 %v2818, %v2866
        %v2868 = vpop.f32.mrf.mxu0
        %v2869 = vadd.f32 %v2820, %v2868
        %2870 = vmatmul.bf16.gmra.mxu0 %v1232
        %v2871 = vpop.f32.mrf.mxu0
        %v2872 = vadd.f32 %v2823, %v2871
        %v2873 = vpop.f32.mrf.mxu0
        %v2874 = vadd.f32 %v2825, %v2873
        %2875 = vmatmul.bf16.gmra.mxu0 %v1234
        %v2876 = vpop.f32.mrf.mxu0
        %v2877 = vadd.f32 %v2828, %v2876
        %v2878 = vpop.f32.mrf.mxu0
        %v2879 = vadd.f32 %v2830, %v2878
        %2880 = vmatmul.bf16.gmra.mxu0 %v1236
        %v2881 = vpop.f32.mrf.mxu0
        %v2882 = vadd.f32 %v2833, %v2881
        %v2883 = vpop.f32.mrf.mxu0
        %v2884 = vadd.f32 %v2835, %v2883
        %2885 = vmatmul.bf16.gmra.mxu0 %v1238
        %v2886 = vpop.f32.mrf.mxu0
        %v2887 = vadd.f32 %v2838, %v2886
        %v2888 = vpop.f32.mrf.mxu0
        %v2889 = vadd.f32 %v2840, %v2888
        %2890 = vdwg.mxu0
        %2891 = vmatpush.bf16.msra.mxu0 %v1899
        %2892 = vmatpush.bf16.msra.mxu0 %v1898
        %2893 = vmatpush.bf16.msra.mxu0 %v1897
        %2894 = vmatpush.bf16.msra.mxu0 %v1896
        %2895 = vmatpush.bf16.msra.mxu0 %v1895
        %2896 = vmatpush.bf16.msra.mxu0 %v1894
        %2897 = vmatpush.bf16.msra.mxu0 %v1893
        %2898 = vmatpush.bf16.msra.mxu0 %v1892
        %2899 = vmatmul.bf16.gmra.mxu0 %v1225
        %v2900 = vpop.f32.mrf.mxu0
        %v2901 = vadd.f32 %v2852, %v2900
        %v2902 = vpop.f32.mrf.mxu0
        %v2903 = vadd.f32 %v2854, %v2902
        %2904 = vmatmul.bf16.gmra.mxu0 %v1227
        %v2905 = vpop.f32.mrf.mxu0
        %v2906 = vadd.f32 %v2857, %v2905
        %v2907 = vpop.f32.mrf.mxu0
        %v2908 = vadd.f32 %v2859, %v2907
        %2909 = vmatmul.bf16.gmra.mxu0 %v1229
        %v2910 = vpop.f32.mrf.mxu0
        %v2911 = vadd.f32 %v2862, %v2910
        %v2912 = vpop.f32.mrf.mxu0
        %v2913 = vadd.f32 %v2864, %v2912
        %2914 = vmatmul.bf16.gmra.mxu0 %v1231
        %v2915 = vpop.f32.mrf.mxu0
        %v2916 = vadd.f32 %v2867, %v2915
        %v2917 = vpop.f32.mrf.mxu0
        %v2918 = vadd.f32 %v2869, %v2917
        %2919 = vmatmul.bf16.gmra.mxu0 %v1233
        %v2920 = vpop.f32.mrf.mxu0
        %v2921 = vadd.f32 %v2872, %v2920
        %v2922 = vpop.f32.mrf.mxu0
        %v2923 = vadd.f32 %v2874, %v2922
        %2924 = vmatmul.bf16.gmra.mxu0 %v1235
        %v2925 = vpop.f32.mrf.mxu0
        %v2926 = vadd.f32 %v2877, %v2925
        %v2927 = vpop.f32.mrf.mxu0
        %v2928 = vadd.f32 %v2879, %v2927
        %2929 = vmatmul.bf16.gmra.mxu0 %v1237
        %v2930 = vpop.f32.mrf.mxu0
        %v2931 = vadd.f32 %v2882, %v2930
        %v2932 = vpop.f32.mrf.mxu0
        %v2933 = vadd.f32 %v2884, %v2932
        %2934 = vmatmul.bf16.gmra.mxu0 %v1239
        %v2935 = vpop.f32.mrf.mxu0
        %v2936 = vadd.f32 %v2887, %v2935
        %v2937 = vpop.f32.mrf.mxu0
        %v2938 = vadd.f32 %v2889, %v2937
        %2939 = vdwg.mxu0
        %2940 = vmatpush.bf16.msra.mxu0 %v1327
        %2941 = vmatpush.bf16.msra.mxu0 %v1326
        %2942 = vmatpush.bf16.msra.mxu0 %v1325
        %2943 = vmatpush.bf16.msra.mxu0 %v1324
        %2944 = vmatpush.bf16.msra.mxu0 %v1323
        %2945 = vmatpush.bf16.msra.mxu0 %v1322
        %2946 = vmatpush.bf16.msra.mxu0 %v1321
        %2947 = vmatpush.bf16.msra.mxu0 %v1320
        %2948 = vmatmul.bf16.gmra.mxu0 %v1788
        %v2949 = vpop.f32.mrf.mxu0
        %v2950 = vadd.f32 0.0, %v2949
        %v2951 = vpop.f32.mrf.mxu0
        %v2952 = vadd.f32 0.0, %v2951
        %2953 = vmatmul.bf16.gmra.mxu0 %v1790
        %v2954 = vpop.f32.mrf.mxu0
        %v2955 = vadd.f32 0.0, %v2954
        %v2956 = vpop.f32.mrf.mxu0
        %v2957 = vadd.f32 0.0, %v2956
        %2958 = vmatmul.bf16.gmra.mxu0 %v1792
        %v2959 = vpop.f32.mrf.mxu0
        %v2960 = vadd.f32 0.0, %v2959
        %v2961 = vpop.f32.mrf.mxu0
        %v2962 = vadd.f32 0.0, %v2961
        %2963 = vmatmul.bf16.gmra.mxu0 %v1794
        %v2964 = vpop.f32.mrf.mxu0
        %v2965 = vadd.f32 0.0, %v2964
        %v2966 = vpop.f32.mrf.mxu0
        %v2967 = vadd.f32 0.0, %v2966
        %2968 = vmatmul.bf16.gmra.mxu0 %v1796
        %v2969 = vpop.f32.mrf.mxu0
        %v2970 = vadd.f32 0.0, %v2969
        %v2971 = vpop.f32.mrf.mxu0
        %v2972 = vadd.f32 0.0, %v2971
        %2973 = vmatmul.bf16.gmra.mxu0 %v1798
        %v2974 = vpop.f32.mrf.mxu0
        %v2975 = vadd.f32 0.0, %v2974
        %v2976 = vpop.f32.mrf.mxu0
        %v2977 = vadd.f32 0.0, %v2976
        %2978 = vmatmul.bf16.gmra.mxu0 %v1800
        %v2979 = vpop.f32.mrf.mxu0
        %v2980 = vadd.f32 0.0, %v2979
        %v2981 = vpop.f32.mrf.mxu0
        %v2982 = vadd.f32 0.0, %v2981
        %2983 = vmatmul.bf16.gmra.mxu0 %v1802
        %v2984 = vpop.f32.mrf.mxu0
        %v2985 = vadd.f32 0.0, %v2984
        %v2986 = vpop.f32.mrf.mxu0
        %v2987 = vadd.f32 0.0, %v2986
        %2988 = vdwg.mxu0
        %2989 = vmatpush.bf16.msra.mxu0 %v1335
        %2990 = vmatpush.bf16.msra.mxu0 %v1334
        %2991 = vmatpush.bf16.msra.mxu0 %v1333
        %2992 = vmatpush.bf16.msra.mxu0 %v1332
        %2993 = vmatpush.bf16.msra.mxu0 %v1331
        %2994 = vmatpush.bf16.msra.mxu0 %v1330
        %2995 = vmatpush.bf16.msra.mxu0 %v1329
        %2996 = vmatpush.bf16.msra.mxu0 %v1328
        %2997 = vmatmul.bf16.gmra.mxu0 %v1789
        %v2998 = vpop.f32.mrf.mxu0
        %v2999 = vadd.f32 %v2950, %v2998
        %v3000 = vpop.f32.mrf.mxu0
        %v3001 = vadd.f32 %v2952, %v3000
        %3002 = vmatmul.bf16.gmra.mxu0 %v1791
        %v3003 = vpop.f32.mrf.mxu0
        %v3004 = vadd.f32 %v2955, %v3003
        %v3005 = vpop.f32.mrf.mxu0
        %v3006 = vadd.f32 %v2957, %v3005
        %3007 = vmatmul.bf16.gmra.mxu0 %v1793
        %v3008 = vpop.f32.mrf.mxu0
        %v3009 = vadd.f32 %v2960, %v3008
        %v3010 = vpop.f32.mrf.mxu0
        %v3011 = vadd.f32 %v2962, %v3010
        %3012 = vmatmul.bf16.gmra.mxu0 %v1795
        %v3013 = vpop.f32.mrf.mxu0
        %v3014 = vadd.f32 %v2965, %v3013
        %v3015 = vpop.f32.mrf.mxu0
        %v3016 = vadd.f32 %v2967, %v3015
        %3017 = vmatmul.bf16.gmra.mxu0 %v1797
        %v3018 = vpop.f32.mrf.mxu0
        %v3019 = vadd.f32 %v2970, %v3018
        %v3020 = vpop.f32.mrf.mxu0
        %v3021 = vadd.f32 %v2972, %v3020
        %3022 = vmatmul.bf16.gmra.mxu0 %v1799
        %v3023 = vpop.f32.mrf.mxu0
        %v3024 = vadd.f32 %v2975, %v3023
        %v3025 = vpop.f32.mrf.mxu0
        %v3026 = vadd.f32 %v2977, %v3025
        %3027 = vmatmul.bf16.gmra.mxu0 %v1801
        %v3028 = vpop.f32.mrf.mxu0
        %v3029 = vadd.f32 %v2980, %v3028
        %v3030 = vpop.f32.mrf.mxu0
        %v3031 = vadd.f32 %v2982, %v3030
        %3032 = vmatmul.bf16.gmra.mxu0 %v1803
        %v3033 = vpop.f32.mrf.mxu0
        %v3034 = vadd.f32 %v2985, %v3033
        %v3035 = vpop.f32.mrf.mxu0
        %v3036 = vadd.f32 %v2987, %v3035
        %3037 = vdwg.mxu0
        %v3038 = vadd.f32 %v2901, %v2999
        %v3039 = vadd.f32 %v2903, %v3001
        %v3040 = vadd.f32 %v2906, %v3004
        %v3041 = vadd.f32 %v2908, %v3006
        %v3042 = vadd.f32 %v2911, %v3009
        %v3043 = vadd.f32 %v2913, %v3011
        %v3044 = vadd.f32 %v2916, %v3014
        %v3045 = vadd.f32 %v2918, %v3016
        %v3046 = vadd.f32 %v2921, %v3019
        %v3047 = vadd.f32 %v2923, %v3021
        %v3048 = vadd.f32 %v2926, %v3024
        %v3049 = vadd.f32 %v2928, %v3026
        %v3050 = vadd.f32 %v2931, %v3029
        %v3051 = vadd.f32 %v2933, %v3031
        %v3052 = vadd.f32 %v2936, %v3034
        %v3053 = vadd.f32 %v2938, %v3036
        %3054 = vmatpush.bf16.msra.mxu0 %v1601
        %3055 = vmatpush.bf16.msra.mxu0 %v1600
        %3056 = vmatpush.bf16.msra.mxu0 %v1599
        %3057 = vmatpush.bf16.msra.mxu0 %v1598
        %3058 = vmatpush.bf16.msra.mxu0 %v1597
        %3059 = vmatpush.bf16.msra.mxu0 %v1596
        %3060 = vmatpush.bf16.msra.mxu0 %v1595
        %3061 = vmatpush.bf16.msra.mxu0 %v1594
        %3062 = vmatmul.bf16.gmra.mxu0 %v2078
        %v3063 = vpop.f32.mrf.mxu0
        %v3064 = vadd.f32 0.0, %v3063
        %v3065 = vpop.f32.mrf.mxu0
        %v3066 = vadd.f32 0.0, %v3065
        %3067 = vmatmul.bf16.gmra.mxu0 %v2080
        %v3068 = vpop.f32.mrf.mxu0
        %v3069 = vadd.f32 0.0, %v3068
        %v3070 = vpop.f32.mrf.mxu0
        %v3071 = vadd.f32 0.0, %v3070
        %3072 = vmatmul.bf16.gmra.mxu0 %v2082
        %v3073 = vpop.f32.mrf.mxu0
        %v3074 = vadd.f32 0.0, %v3073
        %v3075 = vpop.f32.mrf.mxu0
        %v3076 = vadd.f32 0.0, %v3075
        %3077 = vmatmul.bf16.gmra.mxu0 %v2084
        %v3078 = vpop.f32.mrf.mxu0
        %v3079 = vadd.f32 0.0, %v3078
        %v3080 = vpop.f32.mrf.mxu0
        %v3081 = vadd.f32 0.0, %v3080
        %3082 = vmatmul.bf16.gmra.mxu0 %v2086
        %v3083 = vpop.f32.mrf.mxu0
        %v3084 = vadd.f32 0.0, %v3083
        %v3085 = vpop.f32.mrf.mxu0
        %v3086 = vadd.f32 0.0, %v3085
        %3087 = vmatmul.bf16.gmra.mxu0 %v2088
        %v3088 = vpop.f32.mrf.mxu0
        %v3089 = vadd.f32 0.0, %v3088
        %v3090 = vpop.f32.mrf.mxu0
        %v3091 = vadd.f32 0.0, %v3090
        %3092 = vmatmul.bf16.gmra.mxu0 %v2090
        %v3093 = vpop.f32.mrf.mxu0
        %v3094 = vadd.f32 0.0, %v3093
        %v3095 = vpop.f32.mrf.mxu0
        %v3096 = vadd.f32 0.0, %v3095
        %3097 = vmatmul.bf16.gmra.mxu0 %v2092
        %v3098 = vpop.f32.mrf.mxu0
        %v3099 = vadd.f32 0.0, %v3098
        %v3100 = vpop.f32.mrf.mxu0
        %v3101 = vadd.f32 0.0, %v3100
        %3102 = vdwg.mxu0
        %3103 = vmatpush.bf16.msra.mxu0 %v1609
        %3104 = vmatpush.bf16.msra.mxu0 %v1608
        %3105 = vmatpush.bf16.msra.mxu0 %v1607
        %3106 = vmatpush.bf16.msra.mxu0 %v1606
        %3107 = vmatpush.bf16.msra.mxu0 %v1605
        %3108 = vmatpush.bf16.msra.mxu0 %v1604
        %3109 = vmatpush.bf16.msra.mxu0 %v1603
        %3110 = vmatpush.bf16.msra.mxu0 %v1602
        %3111 = vmatmul.bf16.gmra.mxu0 %v2079
        %v3112 = vpop.f32.mrf.mxu0
        %v3113 = vadd.f32 %v3064, %v3112
        %v3114 = vpop.f32.mrf.mxu0
        %v3115 = vadd.f32 %v3066, %v3114
        %3116 = vmatmul.bf16.gmra.mxu0 %v2081
        %v3117 = vpop.f32.mrf.mxu0
        %v3118 = vadd.f32 %v3069, %v3117
        %v3119 = vpop.f32.mrf.mxu0
        %v3120 = vadd.f32 %v3071, %v3119
        %3121 = vmatmul.bf16.gmra.mxu0 %v2083
        %v3122 = vpop.f32.mrf.mxu0
        %v3123 = vadd.f32 %v3074, %v3122
        %v3124 = vpop.f32.mrf.mxu0
        %v3125 = vadd.f32 %v3076, %v3124
        %3126 = vmatmul.bf16.gmra.mxu0 %v2085
        %v3127 = vpop.f32.mrf.mxu0
        %v3128 = vadd.f32 %v3079, %v3127
        %v3129 = vpop.f32.mrf.mxu0
        %v3130 = vadd.f32 %v3081, %v3129
        %3131 = vmatmul.bf16.gmra.mxu0 %v2087
        %v3132 = vpop.f32.mrf.mxu0
        %v3133 = vadd.f32 %v3084, %v3132
        %v3134 = vpop.f32.mrf.mxu0
        %v3135 = vadd.f32 %v3086, %v3134
        %3136 = vmatmul.bf16.gmra.mxu0 %v2089
        %v3137 = vpop.f32.mrf.mxu0
        %v3138 = vadd.f32 %v3089, %v3137
        %v3139 = vpop.f32.mrf.mxu0
        %v3140 = vadd.f32 %v3091, %v3139
        %3141 = vmatmul.bf16.gmra.mxu0 %v2091
        %v3142 = vpop.f32.mrf.mxu0
        %v3143 = vadd.f32 %v3094, %v3142
        %v3144 = vpop.f32.mrf.mxu0
        %v3145 = vadd.f32 %v3096, %v3144
        %3146 = vmatmul.bf16.gmra.mxu0 %v2093
        %v3147 = vpop.f32.mrf.mxu0
        %v3148 = vadd.f32 %v3099, %v3147
        %v3149 = vpop.f32.mrf.mxu0
        %v3150 = vadd.f32 %v3101, %v3149
        %3151 = vdwg.mxu0
        %v3152 = vsub.f32 %v3038, %v3113
        %v3153 = vsub.f32 %v3039, %v3115
        %v3154 = vsub.f32 %v3040, %v3118
        %v3155 = vsub.f32 %v3041, %v3120
        %v3156 = vsub.f32 %v3042, %v3123
        %v3157 = vsub.f32 %v3043, %v3125
        %v3158 = vsub.f32 %v3044, %v3128
        %v3159 = vsub.f32 %v3045, %v3130
        %v3160 = vsub.f32 %v3046, %v3133
        %v3161 = vsub.f32 %v3047, %v3135
        %v3162 = vsub.f32 %v3048, %v3138
        %v3163 = vsub.f32 %v3049, %v3140
        %v3164 = vsub.f32 %v3050, %v3143
        %v3165 = vsub.f32 %v3051, %v3145
        %v3166 = vsub.f32 %v3052, %v3148
        %v3167 = vsub.f32 %v3053, %v3150
        %3168 = vmatpush.bf16.msra.mxu0 %v2181
        %3169 = vmatpush.bf16.msra.mxu0 %v2180
        %3170 = vmatpush.bf16.msra.mxu0 %v2179
        %3171 = vmatpush.bf16.msra.mxu0 %v2178
        %3172 = vmatpush.bf16.msra.mxu0 %v2177
        %3173 = vmatpush.bf16.msra.mxu0 %v2176
        %3174 = vmatpush.bf16.msra.mxu0 %v2175
        %3175 = vmatpush.bf16.msra.mxu0 %v2174
        %3176 = vmatmul.bf16.gmra.mxu0 %v1224
        %v3177 = vpop.f32.mrf.mxu0
        %v3178 = vadd.f32 0.0, %v3177
        %v3179 = vpop.f32.mrf.mxu0
        %v3180 = vadd.f32 0.0, %v3179
        %3181 = vmatmul.bf16.gmra.mxu0 %v1226
        %v3182 = vpop.f32.mrf.mxu0
        %v3183 = vadd.f32 0.0, %v3182
        %v3184 = vpop.f32.mrf.mxu0
        %v3185 = vadd.f32 0.0, %v3184
        %3186 = vmatmul.bf16.gmra.mxu0 %v1228
        %v3187 = vpop.f32.mrf.mxu0
        %v3188 = vadd.f32 0.0, %v3187
        %v3189 = vpop.f32.mrf.mxu0
        %v3190 = vadd.f32 0.0, %v3189
        %3191 = vmatmul.bf16.gmra.mxu0 %v1230
        %v3192 = vpop.f32.mrf.mxu0
        %v3193 = vadd.f32 0.0, %v3192
        %v3194 = vpop.f32.mrf.mxu0
        %v3195 = vadd.f32 0.0, %v3194
        %3196 = vmatmul.bf16.gmra.mxu0 %v1232
        %v3197 = vpop.f32.mrf.mxu0
        %v3198 = vadd.f32 0.0, %v3197
        %v3199 = vpop.f32.mrf.mxu0
        %v3200 = vadd.f32 0.0, %v3199
        %3201 = vmatmul.bf16.gmra.mxu0 %v1234
        %v3202 = vpop.f32.mrf.mxu0
        %v3203 = vadd.f32 0.0, %v3202
        %v3204 = vpop.f32.mrf.mxu0
        %v3205 = vadd.f32 0.0, %v3204
        %3206 = vmatmul.bf16.gmra.mxu0 %v1236
        %v3207 = vpop.f32.mrf.mxu0
        %v3208 = vadd.f32 0.0, %v3207
        %v3209 = vpop.f32.mrf.mxu0
        %v3210 = vadd.f32 0.0, %v3209
        %3211 = vmatmul.bf16.gmra.mxu0 %v1238
        %v3212 = vpop.f32.mrf.mxu0
        %v3213 = vadd.f32 0.0, %v3212
        %v3214 = vpop.f32.mrf.mxu0
        %v3215 = vadd.f32 0.0, %v3214
        %3216 = vdwg.mxu0
        %3217 = vmatpush.bf16.msra.mxu0 %v2189
        %3218 = vmatpush.bf16.msra.mxu0 %v2188
        %3219 = vmatpush.bf16.msra.mxu0 %v2187
        %3220 = vmatpush.bf16.msra.mxu0 %v2186
        %3221 = vmatpush.bf16.msra.mxu0 %v2185
        %3222 = vmatpush.bf16.msra.mxu0 %v2184
        %3223 = vmatpush.bf16.msra.mxu0 %v2183
        %3224 = vmatpush.bf16.msra.mxu0 %v2182
        %3225 = vmatmul.bf16.gmra.mxu0 %v1225
        %v3226 = vpop.f32.mrf.mxu0
        %v3227 = vadd.f32 %v3178, %v3226
        %v3228 = vpop.f32.mrf.mxu0
        %v3229 = vadd.f32 %v3180, %v3228
        %3230 = vmatmul.bf16.gmra.mxu0 %v1227
        %v3231 = vpop.f32.mrf.mxu0
        %v3232 = vadd.f32 %v3183, %v3231
        %v3233 = vpop.f32.mrf.mxu0
        %v3234 = vadd.f32 %v3185, %v3233
        %3235 = vmatmul.bf16.gmra.mxu0 %v1229
        %v3236 = vpop.f32.mrf.mxu0
        %v3237 = vadd.f32 %v3188, %v3236
        %v3238 = vpop.f32.mrf.mxu0
        %v3239 = vadd.f32 %v3190, %v3238
        %3240 = vmatmul.bf16.gmra.mxu0 %v1231
        %v3241 = vpop.f32.mrf.mxu0
        %v3242 = vadd.f32 %v3193, %v3241
        %v3243 = vpop.f32.mrf.mxu0
        %v3244 = vadd.f32 %v3195, %v3243
        %3245 = vmatmul.bf16.gmra.mxu0 %v1233
        %v3246 = vpop.f32.mrf.mxu0
        %v3247 = vadd.f32 %v3198, %v3246
        %v3248 = vpop.f32.mrf.mxu0
        %v3249 = vadd.f32 %v3200, %v3248
        %3250 = vmatmul.bf16.gmra.mxu0 %v1235
        %v3251 = vpop.f32.mrf.mxu0
        %v3252 = vadd.f32 %v3203, %v3251
        %v3253 = vpop.f32.mrf.mxu0
        %v3254 = vadd.f32 %v3205, %v3253
        %3255 = vmatmul.bf16.gmra.mxu0 %v1237
        %v3256 = vpop.f32.mrf.mxu0
        %v3257 = vadd.f32 %v3208, %v3256
        %v3258 = vpop.f32.mrf.mxu0
        %v3259 = vadd.f32 %v3210, %v3258
        %3260 = vmatmul.bf16.gmra.mxu0 %v1239
        %v3261 = vpop.f32.mrf.mxu0
        %v3262 = vadd.f32 %v3213, %v3261
        %v3263 = vpop.f32.mrf.mxu0
        %v3264 = vadd.f32 %v3215, %v3263
        %3265 = vdwg.mxu0
        %3266 = vmatpush.bf16.msra.mxu0 %v1891
        %3267 = vmatpush.bf16.msra.mxu0 %v1890
        %3268 = vmatpush.bf16.msra.mxu0 %v1889
        %3269 = vmatpush.bf16.msra.mxu0 %v1888
        %3270 = vmatpush.bf16.msra.mxu0 %v1887
        %3271 = vmatpush.bf16.msra.mxu0 %v1886
        %3272 = vmatpush.bf16.msra.mxu0 %v1885
        %3273 = vmatpush.bf16.msra.mxu0 %v1884
        %3274 = vmatmul.bf16.gmra.mxu0 %v1498
        %v3275 = vpop.f32.mrf.mxu0
        %v3276 = vadd.f32 0.0, %v3275
        %v3277 = vpop.f32.mrf.mxu0
        %v3278 = vadd.f32 0.0, %v3277
        %3279 = vmatmul.bf16.gmra.mxu0 %v1500
        %v3280 = vpop.f32.mrf.mxu0
        %v3281 = vadd.f32 0.0, %v3280
        %v3282 = vpop.f32.mrf.mxu0
        %v3283 = vadd.f32 0.0, %v3282
        %3284 = vmatmul.bf16.gmra.mxu0 %v1502
        %v3285 = vpop.f32.mrf.mxu0
        %v3286 = vadd.f32 0.0, %v3285
        %v3287 = vpop.f32.mrf.mxu0
        %v3288 = vadd.f32 0.0, %v3287
        %3289 = vmatmul.bf16.gmra.mxu0 %v1504
        %v3290 = vpop.f32.mrf.mxu0
        %v3291 = vadd.f32 0.0, %v3290
        %v3292 = vpop.f32.mrf.mxu0
        %v3293 = vadd.f32 0.0, %v3292
        %3294 = vmatmul.bf16.gmra.mxu0 %v1506
        %v3295 = vpop.f32.mrf.mxu0
        %v3296 = vadd.f32 0.0, %v3295
        %v3297 = vpop.f32.mrf.mxu0
        %v3298 = vadd.f32 0.0, %v3297
        %3299 = vmatmul.bf16.gmra.mxu0 %v1508
        %v3300 = vpop.f32.mrf.mxu0
        %v3301 = vadd.f32 0.0, %v3300
        %v3302 = vpop.f32.mrf.mxu0
        %v3303 = vadd.f32 0.0, %v3302
        %3304 = vmatmul.bf16.gmra.mxu0 %v1510
        %v3305 = vpop.f32.mrf.mxu0
        %v3306 = vadd.f32 0.0, %v3305
        %v3307 = vpop.f32.mrf.mxu0
        %v3308 = vadd.f32 0.0, %v3307
        %3309 = vmatmul.bf16.gmra.mxu0 %v1512
        %v3310 = vpop.f32.mrf.mxu0
        %v3311 = vadd.f32 0.0, %v3310
        %v3312 = vpop.f32.mrf.mxu0
        %v3313 = vadd.f32 0.0, %v3312
        %3314 = vdwg.mxu0
        %3315 = vmatpush.bf16.msra.mxu0 %v1899
        %3316 = vmatpush.bf16.msra.mxu0 %v1898
        %3317 = vmatpush.bf16.msra.mxu0 %v1897
        %3318 = vmatpush.bf16.msra.mxu0 %v1896
        %3319 = vmatpush.bf16.msra.mxu0 %v1895
        %3320 = vmatpush.bf16.msra.mxu0 %v1894
        %3321 = vmatpush.bf16.msra.mxu0 %v1893
        %3322 = vmatpush.bf16.msra.mxu0 %v1892
        %3323 = vmatmul.bf16.gmra.mxu0 %v1499
        %v3324 = vpop.f32.mrf.mxu0
        %v3325 = vadd.f32 %v3276, %v3324
        %v3326 = vpop.f32.mrf.mxu0
        %v3327 = vadd.f32 %v3278, %v3326
        %3328 = vmatmul.bf16.gmra.mxu0 %v1501
        %v3329 = vpop.f32.mrf.mxu0
        %v3330 = vadd.f32 %v3281, %v3329
        %v3331 = vpop.f32.mrf.mxu0
        %v3332 = vadd.f32 %v3283, %v3331
        %3333 = vmatmul.bf16.gmra.mxu0 %v1503
        %v3334 = vpop.f32.mrf.mxu0
        %v3335 = vadd.f32 %v3286, %v3334
        %v3336 = vpop.f32.mrf.mxu0
        %v3337 = vadd.f32 %v3288, %v3336
        %3338 = vmatmul.bf16.gmra.mxu0 %v1505
        %v3339 = vpop.f32.mrf.mxu0
        %v3340 = vadd.f32 %v3291, %v3339
        %v3341 = vpop.f32.mrf.mxu0
        %v3342 = vadd.f32 %v3293, %v3341
        %3343 = vmatmul.bf16.gmra.mxu0 %v1507
        %v3344 = vpop.f32.mrf.mxu0
        %v3345 = vadd.f32 %v3296, %v3344
        %v3346 = vpop.f32.mrf.mxu0
        %v3347 = vadd.f32 %v3298, %v3346
        %3348 = vmatmul.bf16.gmra.mxu0 %v1509
        %v3349 = vpop.f32.mrf.mxu0
        %v3350 = vadd.f32 %v3301, %v3349
        %v3351 = vpop.f32.mrf.mxu0
        %v3352 = vadd.f32 %v3303, %v3351
        %3353 = vmatmul.bf16.gmra.mxu0 %v1511
        %v3354 = vpop.f32.mrf.mxu0
        %v3355 = vadd.f32 %v3306, %v3354
        %v3356 = vpop.f32.mrf.mxu0
        %v3357 = vadd.f32 %v3308, %v3356
        %3358 = vmatmul.bf16.gmra.mxu0 %v1513
        %v3359 = vpop.f32.mrf.mxu0
        %v3360 = vadd.f32 %v3311, %v3359
        %v3361 = vpop.f32.mrf.mxu0
        %v3362 = vadd.f32 %v3313, %v3361
        %3363 = vdwg.mxu0
        %v3364 = vsub.f32 %v3227, %v3325
        %v3365 = vsub.f32 %v3229, %v3327
        %v3366 = vsub.f32 %v3232, %v3330
        %v3367 = vsub.f32 %v3234, %v3332
        %v3368 = vsub.f32 %v3237, %v3335
        %v3369 = vsub.f32 %v3239, %v3337
        %v3370 = vsub.f32 %v3242, %v3340
        %v3371 = vsub.f32 %v3244, %v3342
        %v3372 = vsub.f32 %v3247, %v3345
        %v3373 = vsub.f32 %v3249, %v3347
        %v3374 = vsub.f32 %v3252, %v3350
        %v3375 = vsub.f32 %v3254, %v3352
        %v3376 = vsub.f32 %v3257, %v3355
        %v3377 = vsub.f32 %v3259, %v3357
        %v3378 = vsub.f32 %v3262, %v3360
        %v3379 = vsub.f32 %v3264, %v3362
        %3380 = vmatpush.bf16.msra.mxu0 %v1601
        %3381 = vmatpush.bf16.msra.mxu0 %v1600
        %3382 = vmatpush.bf16.msra.mxu0 %v1599
        %3383 = vmatpush.bf16.msra.mxu0 %v1598
        %3384 = vmatpush.bf16.msra.mxu0 %v1597
        %3385 = vmatpush.bf16.msra.mxu0 %v1596
        %3386 = vmatpush.bf16.msra.mxu0 %v1595
        %3387 = vmatpush.bf16.msra.mxu0 %v1594
        %3388 = vmatmul.bf16.gmra.mxu0 %v1788
        %v3389 = vpop.f32.mrf.mxu0
        %v3390 = vadd.f32 0.0, %v3389
        %v3391 = vpop.f32.mrf.mxu0
        %v3392 = vadd.f32 0.0, %v3391
        %3393 = vmatmul.bf16.gmra.mxu0 %v1790
        %v3394 = vpop.f32.mrf.mxu0
        %v3395 = vadd.f32 0.0, %v3394
        %v3396 = vpop.f32.mrf.mxu0
        %v3397 = vadd.f32 0.0, %v3396
        %3398 = vmatmul.bf16.gmra.mxu0 %v1792
        %v3399 = vpop.f32.mrf.mxu0
        %v3400 = vadd.f32 0.0, %v3399
        %v3401 = vpop.f32.mrf.mxu0
        %v3402 = vadd.f32 0.0, %v3401
        %3403 = vmatmul.bf16.gmra.mxu0 %v1794
        %v3404 = vpop.f32.mrf.mxu0
        %v3405 = vadd.f32 0.0, %v3404
        %v3406 = vpop.f32.mrf.mxu0
        %v3407 = vadd.f32 0.0, %v3406
        %3408 = vmatmul.bf16.gmra.mxu0 %v1796
        %v3409 = vpop.f32.mrf.mxu0
        %v3410 = vadd.f32 0.0, %v3409
        %v3411 = vpop.f32.mrf.mxu0
        %v3412 = vadd.f32 0.0, %v3411
        %3413 = vmatmul.bf16.gmra.mxu0 %v1798
        %v3414 = vpop.f32.mrf.mxu0
        %v3415 = vadd.f32 0.0, %v3414
        %v3416 = vpop.f32.mrf.mxu0
        %v3417 = vadd.f32 0.0, %v3416
        %3418 = vmatmul.bf16.gmra.mxu0 %v1800
        %v3419 = vpop.f32.mrf.mxu0
        %v3420 = vadd.f32 0.0, %v3419
        %v3421 = vpop.f32.mrf.mxu0
        %v3422 = vadd.f32 0.0, %v3421
        %3423 = vmatmul.bf16.gmra.mxu0 %v1802
        %v3424 = vpop.f32.mrf.mxu0
        %v3425 = vadd.f32 0.0, %v3424
        %v3426 = vpop.f32.mrf.mxu0
        %v3427 = vadd.f32 0.0, %v3426
        %3428 = vdwg.mxu0
        %3429 = vmatpush.bf16.msra.mxu0 %v1609
        %3430 = vmatpush.bf16.msra.mxu0 %v1608
        %3431 = vmatpush.bf16.msra.mxu0 %v1607
        %3432 = vmatpush.bf16.msra.mxu0 %v1606
        %3433 = vmatpush.bf16.msra.mxu0 %v1605
        %3434 = vmatpush.bf16.msra.mxu0 %v1604
        %3435 = vmatpush.bf16.msra.mxu0 %v1603
        %3436 = vmatpush.bf16.msra.mxu0 %v1602
        %3437 = vmatmul.bf16.gmra.mxu0 %v1789
        %v3438 = vpop.f32.mrf.mxu0
        %v3439 = vadd.f32 %v3390, %v3438
        %v3440 = vpop.f32.mrf.mxu0
        %v3441 = vadd.f32 %v3392, %v3440
        %3442 = vmatmul.bf16.gmra.mxu0 %v1791
        %v3443 = vpop.f32.mrf.mxu0
        %v3444 = vadd.f32 %v3395, %v3443
        %v3445 = vpop.f32.mrf.mxu0
        %v3446 = vadd.f32 %v3397, %v3445
        %3447 = vmatmul.bf16.gmra.mxu0 %v1793
        %v3448 = vpop.f32.mrf.mxu0
        %v3449 = vadd.f32 %v3400, %v3448
        %v3450 = vpop.f32.mrf.mxu0
        %v3451 = vadd.f32 %v3402, %v3450
        %3452 = vmatmul.bf16.gmra.mxu0 %v1795
        %v3453 = vpop.f32.mrf.mxu0
        %v3454 = vadd.f32 %v3405, %v3453
        %v3455 = vpop.f32.mrf.mxu0
        %v3456 = vadd.f32 %v3407, %v3455
        %3457 = vmatmul.bf16.gmra.mxu0 %v1797
        %v3458 = vpop.f32.mrf.mxu0
        %v3459 = vadd.f32 %v3410, %v3458
        %v3460 = vpop.f32.mrf.mxu0
        %v3461 = vadd.f32 %v3412, %v3460
        %3462 = vmatmul.bf16.gmra.mxu0 %v1799
        %v3463 = vpop.f32.mrf.mxu0
        %v3464 = vadd.f32 %v3415, %v3463
        %v3465 = vpop.f32.mrf.mxu0
        %v3466 = vadd.f32 %v3417, %v3465
        %3467 = vmatmul.bf16.gmra.mxu0 %v1801
        %v3468 = vpop.f32.mrf.mxu0
        %v3469 = vadd.f32 %v3420, %v3468
        %v3470 = vpop.f32.mrf.mxu0
        %v3471 = vadd.f32 %v3422, %v3470
        %3472 = vmatmul.bf16.gmra.mxu0 %v1803
        %v3473 = vpop.f32.mrf.mxu0
        %v3474 = vadd.f32 %v3425, %v3473
        %v3475 = vpop.f32.mrf.mxu0
        %v3476 = vadd.f32 %v3427, %v3475
        %3477 = vdwg.mxu0
        %v3478 = vadd.f32 %v3364, %v3439
        %v3479 = vadd.f32 %v3365, %v3441
        %v3480 = vadd.f32 %v3366, %v3444
        %v3481 = vadd.f32 %v3367, %v3446
        %v3482 = vadd.f32 %v3368, %v3449
        %v3483 = vadd.f32 %v3369, %v3451
        %v3484 = vadd.f32 %v3370, %v3454
        %v3485 = vadd.f32 %v3371, %v3456
        %v3486 = vadd.f32 %v3372, %v3459
        %v3487 = vadd.f32 %v3373, %v3461
        %v3488 = vadd.f32 %v3374, %v3464
        %v3489 = vadd.f32 %v3375, %v3466
        %v3490 = vadd.f32 %v3376, %v3469
        %v3491 = vadd.f32 %v3377, %v3471
        %v3492 = vadd.f32 %v3378, %v3474
        %v3493 = vadd.f32 %v3379, %v3476
        %3494 = vmatpush.bf16.msra.mxu0 %v1327
        %3495 = vmatpush.bf16.msra.mxu0 %v1326
        %3496 = vmatpush.bf16.msra.mxu0 %v1325
        %3497 = vmatpush.bf16.msra.mxu0 %v1324
        %3498 = vmatpush.bf16.msra.mxu0 %v1323
        %3499 = vmatpush.bf16.msra.mxu0 %v1322
        %3500 = vmatpush.bf16.msra.mxu0 %v1321
        %3501 = vmatpush.bf16.msra.mxu0 %v1320
        %3502 = vmatmul.bf16.gmra.mxu0 %v2078
        %v3503 = vpop.f32.mrf.mxu0
        %v3504 = vadd.f32 0.0, %v3503
        %v3505 = vpop.f32.mrf.mxu0
        %v3506 = vadd.f32 0.0, %v3505
        %3507 = vmatmul.bf16.gmra.mxu0 %v2080
        %v3508 = vpop.f32.mrf.mxu0
        %v3509 = vadd.f32 0.0, %v3508
        %v3510 = vpop.f32.mrf.mxu0
        %v3511 = vadd.f32 0.0, %v3510
        %3512 = vmatmul.bf16.gmra.mxu0 %v2082
        %v3513 = vpop.f32.mrf.mxu0
        %v3514 = vadd.f32 0.0, %v3513
        %v3515 = vpop.f32.mrf.mxu0
        %v3516 = vadd.f32 0.0, %v3515
        %3517 = vmatmul.bf16.gmra.mxu0 %v2084
        %v3518 = vpop.f32.mrf.mxu0
        %v3519 = vadd.f32 0.0, %v3518
        %v3520 = vpop.f32.mrf.mxu0
        %v3521 = vadd.f32 0.0, %v3520
        %3522 = vmatmul.bf16.gmra.mxu0 %v2086
        %v3523 = vpop.f32.mrf.mxu0
        %v3524 = vadd.f32 0.0, %v3523
        %v3525 = vpop.f32.mrf.mxu0
        %v3526 = vadd.f32 0.0, %v3525
        %3527 = vmatmul.bf16.gmra.mxu0 %v2088
        %v3528 = vpop.f32.mrf.mxu0
        %v3529 = vadd.f32 0.0, %v3528
        %v3530 = vpop.f32.mrf.mxu0
        %v3531 = vadd.f32 0.0, %v3530
        %3532 = vmatmul.bf16.gmra.mxu0 %v2090
        %v3533 = vpop.f32.mrf.mxu0
        %v3534 = vadd.f32 0.0, %v3533
        %v3535 = vpop.f32.mrf.mxu0
        %v3536 = vadd.f32 0.0, %v3535
        %3537 = vmatmul.bf16.gmra.mxu0 %v2092
        %v3538 = vpop.f32.mrf.mxu0
        %v3539 = vadd.f32 0.0, %v3538
        %v3540 = vpop.f32.mrf.mxu0
        %v3541 = vadd.f32 0.0, %v3540
        %3542 = vdwg.mxu0
        %3543 = vmatpush.bf16.msra.mxu0 %v1335
        %3544 = vmatpush.bf16.msra.mxu0 %v1334
        %3545 = vmatpush.bf16.msra.mxu0 %v1333
        %3546 = vmatpush.bf16.msra.mxu0 %v1332
        %3547 = vmatpush.bf16.msra.mxu0 %v1331
        %3548 = vmatpush.bf16.msra.mxu0 %v1330
        %3549 = vmatpush.bf16.msra.mxu0 %v1329
        %3550 = vmatpush.bf16.msra.mxu0 %v1328
        %3551 = vmatmul.bf16.gmra.mxu0 %v2079
        %v3552 = vpop.f32.mrf.mxu0
        %v3553 = vadd.f32 %v3504, %v3552
        %v3554 = vpop.f32.mrf.mxu0
        %v3555 = vadd.f32 %v3506, %v3554
        %3556 = vmatmul.bf16.gmra.mxu0 %v2081
        %v3557 = vpop.f32.mrf.mxu0
        %v3558 = vadd.f32 %v3509, %v3557
        %v3559 = vpop.f32.mrf.mxu0
        %v3560 = vadd.f32 %v3511, %v3559
        %3561 = vmatmul.bf16.gmra.mxu0 %v2083
        %v3562 = vpop.f32.mrf.mxu0
        %v3563 = vadd.f32 %v3514, %v3562
        %v3564 = vpop.f32.mrf.mxu0
        %v3565 = vadd.f32 %v3516, %v3564
        %3566 = vmatmul.bf16.gmra.mxu0 %v2085
        %v3567 = vpop.f32.mrf.mxu0
        %v3568 = vadd.f32 %v3519, %v3567
        %v3569 = vpop.f32.mrf.mxu0
        %v3570 = vadd.f32 %v3521, %v3569
        %3571 = vmatmul.bf16.gmra.mxu0 %v2087
        %v3572 = vpop.f32.mrf.mxu0
        %v3573 = vadd.f32 %v3524, %v3572
        %v3574 = vpop.f32.mrf.mxu0
        %v3575 = vadd.f32 %v3526, %v3574
        %3576 = vmatmul.bf16.gmra.mxu0 %v2089
        %v3577 = vpop.f32.mrf.mxu0
        %v3578 = vadd.f32 %v3529, %v3577
        %v3579 = vpop.f32.mrf.mxu0
        %v3580 = vadd.f32 %v3531, %v3579
        %3581 = vmatmul.bf16.gmra.mxu0 %v2091
        %v3582 = vpop.f32.mrf.mxu0
        %v3583 = vadd.f32 %v3534, %v3582
        %v3584 = vpop.f32.mrf.mxu0
        %v3585 = vadd.f32 %v3536, %v3584
        %3586 = vmatmul.bf16.gmra.mxu0 %v2093
        %v3587 = vpop.f32.mrf.mxu0
        %v3588 = vadd.f32 %v3539, %v3587
        %v3589 = vpop.f32.mrf.mxu0
        %v3590 = vadd.f32 %v3541, %v3589
        %3591 = vdwg.mxu0
        %v3592 = vadd.f32 %v3478, %v3553
        %v3593 = vadd.f32 %v3479, %v3555
        %v3594 = vadd.f32 %v3480, %v3558
        %v3595 = vadd.f32 %v3481, %v3560
        %v3596 = vadd.f32 %v3482, %v3563
        %v3597 = vadd.f32 %v3483, %v3565
        %v3598 = vadd.f32 %v3484, %v3568
        %v3599 = vadd.f32 %v3485, %v3570
        %v3600 = vadd.f32 %v3486, %v3573
        %v3601 = vadd.f32 %v3487, %v3575
        %v3602 = vadd.f32 %v3488, %v3578
        %v3603 = vadd.f32 %v3489, %v3580
        %v3604 = vadd.f32 %v3490, %v3583
        %v3605 = vadd.f32 %v3491, %v3585
        %v3606 = vadd.f32 %v3492, %v3588
        %v3607 = vadd.f32 %v3493, %v3590
        %v3608 = vld [vmem:[%s879] sm:$0xff]
        %v3609 = vld [vmem:[%s879 + $0x20] sm:$0xff]
        %v3610 = vld [vmem:[%s879 + $0x40] sm:$0xff]
        %v3611 = vld [vmem:[%s879 + $0x60] sm:$0xff]
        %v3612 = vld [vmem:[%s879 + $0x80] sm:$0xff]
        %v3613 = vld [vmem:[%s879 + $0xa0] sm:$0xff]
        %v3614 = vld [vmem:[%s879 + $0xc0] sm:$0xff]
        %v3615 = vld [vmem:[%s879 + $0xe0] sm:$0xff]
        %v3616 = vld [vmem:[%s879 + $0x100] sm:$0xff]
        %v3617 = vld [vmem:[%s879 + $0x120] sm:$0xff]
        %v3618 = vld [vmem:[%s879 + $0x140] sm:$0xff]
        %v3619 = vld [vmem:[%s879 + $0x160] sm:$0xff]
        %v3620 = vld [vmem:[%s879 + $0x180] sm:$0xff]
        %v3621 = vld [vmem:[%s879 + $0x1a0] sm:$0xff]
        %v3622 = vld [vmem:[%s879 + $0x1c0] sm:$0xff]
        %v3623 = vld [vmem:[%s879 + $0x1e0] sm:$0xff]
        %v3624 = vadd.f32 %v3608, %v2304
        %v3625 = vadd.f32 %v3609, %v2305
        %v3626 = vadd.f32 %v3610, %v2306
        %v3627 = vadd.f32 %v3611, %v2307
        %v3628 = vadd.f32 %v3612, %v2308
        %v3629 = vadd.f32 %v3613, %v2309
        %v3630 = vadd.f32 %v3614, %v2310
        %v3631 = vadd.f32 %v3615, %v2311
        %v3632 = vadd.f32 %v3616, %v2312
        %v3633 = vadd.f32 %v3617, %v2313
        %v3634 = vadd.f32 %v3618, %v2314
        %v3635 = vadd.f32 %v3619, %v2315
        %v3636 = vadd.f32 %v3620, %v2316
        %v3637 = vadd.f32 %v3621, %v2317
        %v3638 = vadd.f32 %v3622, %v2318
        %v3639 = vadd.f32 %v3623, %v2319
        %3640 = vst [vmem:[%s879] sm:$0xff] %v3624
        %3641 = vst [vmem:[%s879 + $0x20] sm:$0xff] %v3625
        %3642 = vst [vmem:[%s879 + $0x40] sm:$0xff] %v3626
        %3643 = vst [vmem:[%s879 + $0x60] sm:$0xff] %v3627
        %3644 = vst [vmem:[%s879 + $0x80] sm:$0xff] %v3628
        %3645 = vst [vmem:[%s879 + $0xa0] sm:$0xff] %v3629
        %3646 = vst [vmem:[%s879 + $0xc0] sm:$0xff] %v3630
        %3647 = vst [vmem:[%s879 + $0xe0] sm:$0xff] %v3631
        %3648 = vst [vmem:[%s879 + $0x100] sm:$0xff] %v3632
        %3649 = vst [vmem:[%s879 + $0x120] sm:$0xff] %v3633
        %3650 = vst [vmem:[%s879 + $0x140] sm:$0xff] %v3634
        %3651 = vst [vmem:[%s879 + $0x160] sm:$0xff] %v3635
        %3652 = vst [vmem:[%s879 + $0x180] sm:$0xff] %v3636
        %3653 = vst [vmem:[%s879 + $0x1a0] sm:$0xff] %v3637
        %3654 = vst [vmem:[%s879 + $0x1c0] sm:$0xff] %v3638
        %3655 = vst [vmem:[%s879 + $0x1e0] sm:$0xff] %v3639
        %v3656 = vld [vmem:[%s879 + $0x8] sm:$0xff]
        %v3657 = vld [vmem:[%s879 + $0x28] sm:$0xff]
        %v3658 = vld [vmem:[%s879 + $0x48] sm:$0xff]
        %v3659 = vld [vmem:[%s879 + $0x68] sm:$0xff]
        %v3660 = vld [vmem:[%s879 + $0x88] sm:$0xff]
        %v3661 = vld [vmem:[%s879 + $0xa8] sm:$0xff]
        %v3662 = vld [vmem:[%s879 + $0xc8] sm:$0xff]
        %v3663 = vld [vmem:[%s879 + $0xe8] sm:$0xff]
        %v3664 = vld [vmem:[%s879 + $0x108] sm:$0xff]
        %v3665 = vld [vmem:[%s879 + $0x128] sm:$0xff]
        %v3666 = vld [vmem:[%s879 + $0x148] sm:$0xff]
        %v3667 = vld [vmem:[%s879 + $0x168] sm:$0xff]
        %v3668 = vld [vmem:[%s879 + $0x188] sm:$0xff]
        %v3669 = vld [vmem:[%s879 + $0x1a8] sm:$0xff]
        %v3670 = vld [vmem:[%s879 + $0x1c8] sm:$0xff]
        %v3671 = vld [vmem:[%s879 + $0x1e8] sm:$0xff]
        %v3672 = vadd.f32 %v3656, %v2728
        %v3673 = vadd.f32 %v3657, %v2729
        %v3674 = vadd.f32 %v3658, %v2730
        %v3675 = vadd.f32 %v3659, %v2731
        %v3676 = vadd.f32 %v3660, %v2732
        %v3677 = vadd.f32 %v3661, %v2733
        %v3678 = vadd.f32 %v3662, %v2734
        %v3679 = vadd.f32 %v3663, %v2735
        %v3680 = vadd.f32 %v3664, %v2736
        %v3681 = vadd.f32 %v3665, %v2737
        %v3682 = vadd.f32 %v3666, %v2738
        %v3683 = vadd.f32 %v3667, %v2739
        %v3684 = vadd.f32 %v3668, %v2740
        %v3685 = vadd.f32 %v3669, %v2741
        %v3686 = vadd.f32 %v3670, %v2742
        %v3687 = vadd.f32 %v3671, %v2743
        %3688 = vst [vmem:[%s879 + $0x8] sm:$0xff] %v3672
        %3689 = vst [vmem:[%s879 + $0x28] sm:$0xff] %v3673
        %3690 = vst [vmem:[%s879 + $0x48] sm:$0xff] %v3674
        %3691 = vst [vmem:[%s879 + $0x68] sm:$0xff] %v3675
        %3692 = vst [vmem:[%s879 + $0x88] sm:$0xff] %v3676
        %3693 = vst [vmem:[%s879 + $0xa8] sm:$0xff] %v3677
        %3694 = vst [vmem:[%s879 + $0xc8] sm:$0xff] %v3678
        %3695 = vst [vmem:[%s879 + $0xe8] sm:$0xff] %v3679
        %3696 = vst [vmem:[%s879 + $0x108] sm:$0xff] %v3680
        %3697 = vst [vmem:[%s879 + $0x128] sm:$0xff] %v3681
        %3698 = vst [vmem:[%s879 + $0x148] sm:$0xff] %v3682
        %3699 = vst [vmem:[%s879 + $0x168] sm:$0xff] %v3683
        %3700 = vst [vmem:[%s879 + $0x188] sm:$0xff] %v3684
        %3701 = vst [vmem:[%s879 + $0x1a8] sm:$0xff] %v3685
        %3702 = vst [vmem:[%s879 + $0x1c8] sm:$0xff] %v3686
        %3703 = vst [vmem:[%s879 + $0x1e8] sm:$0xff] %v3687
        %v3704 = vld [vmem:[%s879 + $0x10] sm:$0xff]
        %v3705 = vld [vmem:[%s879 + $0x30] sm:$0xff]
        %v3706 = vld [vmem:[%s879 + $0x50] sm:$0xff]
        %v3707 = vld [vmem:[%s879 + $0x70] sm:$0xff]
        %v3708 = vld [vmem:[%s879 + $0x90] sm:$0xff]
        %v3709 = vld [vmem:[%s879 + $0xb0] sm:$0xff]
        %v3710 = vld [vmem:[%s879 + $0xd0] sm:$0xff]
        %v3711 = vld [vmem:[%s879 + $0xf0] sm:$0xff]
        %v3712 = vld [vmem:[%s879 + $0x110] sm:$0xff]
        %v3713 = vld [vmem:[%s879 + $0x130] sm:$0xff]
        %v3714 = vld [vmem:[%s879 + $0x150] sm:$0xff]
        %v3715 = vld [vmem:[%s879 + $0x170] sm:$0xff]
        %v3716 = vld [vmem:[%s879 + $0x190] sm:$0xff]
        %v3717 = vld [vmem:[%s879 + $0x1b0] sm:$0xff]
        %v3718 = vld [vmem:[%s879 + $0x1d0] sm:$0xff]
        %v3719 = vld [vmem:[%s879 + $0x1f0] sm:$0xff]
        %v3720 = vadd.f32 %v3704, %v3152
        %v3721 = vadd.f32 %v3705, %v3153
        %v3722 = vadd.f32 %v3706, %v3154
        %v3723 = vadd.f32 %v3707, %v3155
        %v3724 = vadd.f32 %v3708, %v3156
        %v3725 = vadd.f32 %v3709, %v3157
        %v3726 = vadd.f32 %v3710, %v3158
        %v3727 = vadd.f32 %v3711, %v3159
        %v3728 = vadd.f32 %v3712, %v3160
        %v3729 = vadd.f32 %v3713, %v3161
        %v3730 = vadd.f32 %v3714, %v3162
        %v3731 = vadd.f32 %v3715, %v3163
        %v3732 = vadd.f32 %v3716, %v3164
        %v3733 = vadd.f32 %v3717, %v3165
        %v3734 = vadd.f32 %v3718, %v3166
        %v3735 = vadd.f32 %v3719, %v3167
        %3736 = vst [vmem:[%s879 + $0x10] sm:$0xff] %v3720
        %3737 = vst [vmem:[%s879 + $0x30] sm:$0xff] %v3721
        %3738 = vst [vmem:[%s879 + $0x50] sm:$0xff] %v3722
        %3739 = vst [vmem:[%s879 + $0x70] sm:$0xff] %v3723
        %3740 = vst [vmem:[%s879 + $0x90] sm:$0xff] %v3724
        %3741 = vst [vmem:[%s879 + $0xb0] sm:$0xff] %v3725
        %3742 = vst [vmem:[%s879 + $0xd0] sm:$0xff] %v3726
        %3743 = vst [vmem:[%s879 + $0xf0] sm:$0xff] %v3727
        %3744 = vst [vmem:[%s879 + $0x110] sm:$0xff] %v3728
        %3745 = vst [vmem:[%s879 + $0x130] sm:$0xff] %v3729
        %3746 = vst [vmem:[%s879 + $0x150] sm:$0xff] %v3730
        %3747 = vst [vmem:[%s879 + $0x170] sm:$0xff] %v3731
        %3748 = vst [vmem:[%s879 + $0x190] sm:$0xff] %v3732
        %3749 = vst [vmem:[%s879 + $0x1b0] sm:$0xff] %v3733
        %3750 = vst [vmem:[%s879 + $0x1d0] sm:$0xff] %v3734
        %3751 = vst [vmem:[%s879 + $0x1f0] sm:$0xff] %v3735
        %v3752 = vld [vmem:[%s879 + $0x18] sm:$0xff]
        %v3753 = vld [vmem:[%s879 + $0x38] sm:$0xff]
        %v3754 = vld [vmem:[%s879 + $0x58] sm:$0xff]
        %v3755 = vld [vmem:[%s879 + $0x78] sm:$0xff]
        %v3756 = vld [vmem:[%s879 + $0x98] sm:$0xff]
        %v3757 = vld [vmem:[%s879 + $0xb8] sm:$0xff]
        %v3758 = vld [vmem:[%s879 + $0xd8] sm:$0xff]
        %v3759 = vld [vmem:[%s879 + $0xf8] sm:$0xff]
        %v3760 = vld [vmem:[%s879 + $0x118] sm:$0xff]
        %v3761 = vld [vmem:[%s879 + $0x138] sm:$0xff]
        %v3762 = vld [vmem:[%s879 + $0x158] sm:$0xff]
        %v3763 = vld [vmem:[%s879 + $0x178] sm:$0xff]
        %v3764 = vld [vmem:[%s879 + $0x198] sm:$0xff]
        %v3765 = vld [vmem:[%s879 + $0x1b8] sm:$0xff]
        %v3766 = vld [vmem:[%s879 + $0x1d8] sm:$0xff]
        %v3767 = vld [vmem:[%s879 + $0x1f8] sm:$0xff]
        %v3768 = vadd.f32 %v3752, %v3592
        %v3769 = vadd.f32 %v3753, %v3593
        %v3770 = vadd.f32 %v3754, %v3594
        %v3771 = vadd.f32 %v3755, %v3595
        %v3772 = vadd.f32 %v3756, %v3596
        %v3773 = vadd.f32 %v3757, %v3597
        %v3774 = vadd.f32 %v3758, %v3598
        %v3775 = vadd.f32 %v3759, %v3599
        %v3776 = vadd.f32 %v3760, %v3600
        %v3777 = vadd.f32 %v3761, %v3601
        %v3778 = vadd.f32 %v3762, %v3602
        %v3779 = vadd.f32 %v3763, %v3603
        %v3780 = vadd.f32 %v3764, %v3604
        %v3781 = vadd.f32 %v3765, %v3605
        %v3782 = vadd.f32 %v3766, %v3606
        %v3783 = vadd.f32 %v3767, %v3607
        %3784 = vst [vmem:[%s879 + $0x18] sm:$0xff] %v3768
        %3785 = vst [vmem:[%s879 + $0x38] sm:$0xff] %v3769
        %3786 = vst [vmem:[%s879 + $0x58] sm:$0xff] %v3770
        %3787 = vst [vmem:[%s879 + $0x78] sm:$0xff] %v3771
        %3788 = vst [vmem:[%s879 + $0x98] sm:$0xff] %v3772
        %3789 = vst [vmem:[%s879 + $0xb8] sm:$0xff] %v3773
        %3790 = vst [vmem:[%s879 + $0xd8] sm:$0xff] %v3774
        %3791 = vst [vmem:[%s879 + $0xf8] sm:$0xff] %v3775
        %3792 = vst [vmem:[%s879 + $0x118] sm:$0xff] %v3776
        %3793 = vst [vmem:[%s879 + $0x138] sm:$0xff] %v3777
        %3794 = vst [vmem:[%s879 + $0x158] sm:$0xff] %v3778
        %3795 = vst [vmem:[%s879 + $0x178] sm:$0xff] %v3779
        %3796 = vst [vmem:[%s879 + $0x198] sm:$0xff] %v3780
        %3797 = vst [vmem:[%s879 + $0x1b8] sm:$0xff] %v3781
        %3798 = vst [vmem:[%s879 + $0x1d8] sm:$0xff] %v3782
        %3799 = vst [vmem:[%s879 + $0x1f8] sm:$0xff] %v3783
        // Predicated region
        $region213: #{quaternion_linear_pallas.1} parent=191 // pred_check
          %p3800 = pneg %p916
        $region214: #{quaternion_linear_pallas.1} parent=191 // pred_check_branch
          %3802 = sbr.rel (%p3800) target = $region216
        $region215: #{quaternion_linear_pallas.1} parent=191 // pred_region
          %v3803 = vld [vmem:[%s879] sm:$0xff]
          %v3804 = vld [vmem:[%s879 + $0x8] sm:$0xff]
          %v3805 = vld [vmem:[%s879 + $0x10] sm:$0xff]
          %v3806 = vld [vmem:[%s879 + $0x18] sm:$0xff]
          %v3807 = vld [vmem:[%s879 + $0x20] sm:$0xff]
          %v3808 = vld [vmem:[%s879 + $0x28] sm:$0xff]
          %v3809 = vld [vmem:[%s879 + $0x30] sm:$0xff]
          %v3810 = vld [vmem:[%s879 + $0x38] sm:$0xff]
          %v3811 = vld [vmem:[%s879 + $0x40] sm:$0xff]
          %v3812 = vld [vmem:[%s879 + $0x48] sm:$0xff]
          %v3813 = vld [vmem:[%s879 + $0x50] sm:$0xff]
          %v3814 = vld [vmem:[%s879 + $0x58] sm:$0xff]
          %v3815 = vld [vmem:[%s879 + $0x60] sm:$0xff]
          %v3816 = vld [vmem:[%s879 + $0x68] sm:$0xff]
          %v3817 = vld [vmem:[%s879 + $0x70] sm:$0xff]
          %v3818 = vld [vmem:[%s879 + $0x78] sm:$0xff]
          %v3819 = vld [vmem:[%s879 + $0x80] sm:$0xff]
          %v3820 = vld [vmem:[%s879 + $0x88] sm:$0xff]
          %v3821 = vld [vmem:[%s879 + $0x90] sm:$0xff]
          %v3822 = vld [vmem:[%s879 + $0x98] sm:$0xff]
          %v3823 = vld [vmem:[%s879 + $0xa0] sm:$0xff]
          %v3824 = vld [vmem:[%s879 + $0xa8] sm:$0xff]
          %v3825 = vld [vmem:[%s879 + $0xb0] sm:$0xff]
          %v3826 = vld [vmem:[%s879 + $0xb8] sm:$0xff]
          %v3827 = vld [vmem:[%s879 + $0xc0] sm:$0xff]
          %v3828 = vld [vmem:[%s879 + $0xc8] sm:$0xff]
          %v3829 = vld [vmem:[%s879 + $0xd0] sm:$0xff]
          %v3830 = vld [vmem:[%s879 + $0xd8] sm:$0xff]
          %v3831 = vld [vmem:[%s879 + $0xe0] sm:$0xff]
          %v3832 = vld [vmem:[%s879 + $0xe8] sm:$0xff]
          %v3833 = vld [vmem:[%s879 + $0xf0] sm:$0xff]
          %v3834 = vld [vmem:[%s879 + $0xf8] sm:$0xff]
          %v3835 = vld [vmem:[%s879 + $0x100] sm:$0xff]
          %v3836 = vld [vmem:[%s879 + $0x108] sm:$0xff]
          %v3837 = vld [vmem:[%s879 + $0x110] sm:$0xff]
          %v3838 = vld [vmem:[%s879 + $0x118] sm:$0xff]
          %v3839 = vld [vmem:[%s879 + $0x120] sm:$0xff]
          %v3840 = vld [vmem:[%s879 + $0x128] sm:$0xff]
          %v3841 = vld [vmem:[%s879 + $0x130] sm:$0xff]
          %v3842 = vld [vmem:[%s879 + $0x138] sm:$0xff]
          %v3843 = vld [vmem:[%s879 + $0x140] sm:$0xff]
          %v3844 = vld [vmem:[%s879 + $0x148] sm:$0xff]
          %v3845 = vld [vmem:[%s879 + $0x150] sm:$0xff]
          %v3846 = vld [vmem:[%s879 + $0x158] sm:$0xff]
          %v3847 = vld [vmem:[%s879 + $0x160] sm:$0xff]
          %v3848 = vld [vmem:[%s879 + $0x168] sm:$0xff]
          %v3849 = vld [vmem:[%s879 + $0x170] sm:$0xff]
          %v3850 = vld [vmem:[%s879 + $0x178] sm:$0xff]
          %v3851 = vld [vmem:[%s879 + $0x180] sm:$0xff]
          %v3852 = vld [vmem:[%s879 + $0x188] sm:$0xff]
          %v3853 = vld [vmem:[%s879 + $0x190] sm:$0xff]
          %v3854 = vld [vmem:[%s879 + $0x198] sm:$0xff]
          %v3855 = vld [vmem:[%s879 + $0x1a0] sm:$0xff]
          %v3856 = vld [vmem:[%s879 + $0x1a8] sm:$0xff]
          %v3857 = vld [vmem:[%s879 + $0x1b0] sm:$0xff]
          %v3858 = vld [vmem:[%s879 + $0x1b8] sm:$0xff]
          %v3859 = vld [vmem:[%s879 + $0x1c0] sm:$0xff]
          %v3860 = vld [vmem:[%s879 + $0x1c8] sm:$0xff]
          %v3861 = vld [vmem:[%s879 + $0x1d0] sm:$0xff]
          %v3862 = vld [vmem:[%s879 + $0x1d8] sm:$0xff]
          %v3863 = vld [vmem:[%s879 + $0x1e0] sm:$0xff]
          %v3864 = vld [vmem:[%s879 + $0x1e8] sm:$0xff]
          %v3865 = vld [vmem:[%s879 + $0x1f0] sm:$0xff]
          %v3866 = vld [vmem:[%s879 + $0x1f8] sm:$0xff]
          %v3867 = vld [vmem:[%s8] sm:$0xf]
          %v3869 = vperm.slane %v3867, 0
          %v3870 = vperm.slane %v3867, 1
          %v3871 = vperm.slane %v3867, 2
          %v3872 = vperm.slane %v3867, 3
          %v3877 = vadd.f32 %v3803, %v3869
          %v3878 = vadd.f32 %v3804, %v3870
          %v3879 = vadd.f32 %v3805, %v3871
          %v3880 = vadd.f32 %v3806, %v3872
          %v3881 = vadd.f32 %v3807, %v3869
          %v3882 = vadd.f32 %v3808, %v3870
          %v3883 = vadd.f32 %v3809, %v3871
          %v3884 = vadd.f32 %v3810, %v3872
          %v3885 = vadd.f32 %v3811, %v3869
          %v3886 = vadd.f32 %v3812, %v3870
          %v3887 = vadd.f32 %v3813, %v3871
          %v3888 = vadd.f32 %v3814, %v3872
          %v3889 = vadd.f32 %v3815, %v3869
          %v3890 = vadd.f32 %v3816, %v3870
          %v3891 = vadd.f32 %v3817, %v3871
          %v3892 = vadd.f32 %v3818, %v3872
          %v3893 = vadd.f32 %v3819, %v3869
          %v3894 = vadd.f32 %v3820, %v3870
          %v3895 = vadd.f32 %v3821, %v3871
          %v3896 = vadd.f32 %v3822, %v3872
          %v3897 = vadd.f32 %v3823, %v3869
          %v3898 = vadd.f32 %v3824, %v3870
          %v3899 = vadd.f32 %v3825, %v3871
          %v3900 = vadd.f32 %v3826, %v3872
          %v3901 = vadd.f32 %v3827, %v3869
          %v3902 = vadd.f32 %v3828, %v3870
          %v3903 = vadd.f32 %v3829, %v3871
          %v3904 = vadd.f32 %v3830, %v3872
          %v3905 = vadd.f32 %v3831, %v3869
          %v3906 = vadd.f32 %v3832, %v3870
          %v3907 = vadd.f32 %v3833, %v3871
          %v3908 = vadd.f32 %v3834, %v3872
          %v3909 = vadd.f32 %v3835, %v3869
          %v3910 = vadd.f32 %v3836, %v3870
          %v3911 = vadd.f32 %v3837, %v3871
          %v3912 = vadd.f32 %v3838, %v3872
          %v3913 = vadd.f32 %v3839, %v3869
          %v3914 = vadd.f32 %v3840, %v3870
          %v3915 = vadd.f32 %v3841, %v3871
          %v3916 = vadd.f32 %v3842, %v3872
          %v3917 = vadd.f32 %v3843, %v3869
          %v3918 = vadd.f32 %v3844, %v3870
          %v3919 = vadd.f32 %v3845, %v3871
          %v3920 = vadd.f32 %v3846, %v3872
          %v3921 = vadd.f32 %v3847, %v3869
          %v3922 = vadd.f32 %v3848, %v3870
          %v3923 = vadd.f32 %v3849, %v3871
          %v3924 = vadd.f32 %v3850, %v3872
          %v3925 = vadd.f32 %v3851, %v3869
          %v3926 = vadd.f32 %v3852, %v3870
          %v3927 = vadd.f32 %v3853, %v3871
          %v3928 = vadd.f32 %v3854, %v3872
          %v3929 = vadd.f32 %v3855, %v3869
          %v3930 = vadd.f32 %v3856, %v3870
          %v3931 = vadd.f32 %v3857, %v3871
          %v3932 = vadd.f32 %v3858, %v3872
          %v3933 = vadd.f32 %v3859, %v3869
          %v3934 = vadd.f32 %v3860, %v3870
          %v3935 = vadd.f32 %v3861, %v3871
          %v3936 = vadd.f32 %v3862, %v3872
          %v3937 = vadd.f32 %v3863, %v3869
          %v3938 = vadd.f32 %v3864, %v3870
          %v3939 = vadd.f32 %v3865, %v3871
          %v3940 = vadd.f32 %v3866, %v3872
          %3941 = vst [vmem:[%s879] sm:$0xff] %v3877
          %3942 = vst [vmem:[%s879 + $0x8] sm:$0xff] %v3878
          %3943 = vst [vmem:[%s879 + $0x10] sm:$0xff] %v3879
          %3944 = vst [vmem:[%s879 + $0x18] sm:$0xff] %v3880
          %3945 = vst [vmem:[%s879 + $0x20] sm:$0xff] %v3881
          %3946 = vst [vmem:[%s879 + $0x28] sm:$0xff] %v3882
          %3947 = vst [vmem:[%s879 + $0x30] sm:$0xff] %v3883
          %3948 = vst [vmem:[%s879 + $0x38] sm:$0xff] %v3884
          %3949 = vst [vmem:[%s879 + $0x40] sm:$0xff] %v3885
          %3950 = vst [vmem:[%s879 + $0x48] sm:$0xff] %v3886
          %3951 = vst [vmem:[%s879 + $0x50] sm:$0xff] %v3887
          %3952 = vst [vmem:[%s879 + $0x58] sm:$0xff] %v3888
          %3953 = vst [vmem:[%s879 + $0x60] sm:$0xff] %v3889
          %3954 = vst [vmem:[%s879 + $0x68] sm:$0xff] %v3890
          %3955 = vst [vmem:[%s879 + $0x70] sm:$0xff] %v3891
          %3956 = vst [vmem:[%s879 + $0x78] sm:$0xff] %v3892
          %3957 = vst [vmem:[%s879 + $0x80] sm:$0xff] %v3893
          %3958 = vst [vmem:[%s879 + $0x88] sm:$0xff] %v3894
          %3959 = vst [vmem:[%s879 + $0x90] sm:$0xff] %v3895
          %3960 = vst [vmem:[%s879 + $0x98] sm:$0xff] %v3896
          %3961 = vst [vmem:[%s879 + $0xa0] sm:$0xff] %v3897
          %3962 = vst [vmem:[%s879 + $0xa8] sm:$0xff] %v3898
          %3963 = vst [vmem:[%s879 + $0xb0] sm:$0xff] %v3899
          %3964 = vst [vmem:[%s879 + $0xb8] sm:$0xff] %v3900
          %3965 = vst [vmem:[%s879 + $0xc0] sm:$0xff] %v3901
          %3966 = vst [vmem:[%s879 + $0xc8] sm:$0xff] %v3902
          %3967 = vst [vmem:[%s879 + $0xd0] sm:$0xff] %v3903
          %3968 = vst [vmem:[%s879 + $0xd8] sm:$0xff] %v3904
          %3969 = vst [vmem:[%s879 + $0xe0] sm:$0xff] %v3905
          %3970 = vst [vmem:[%s879 + $0xe8] sm:$0xff] %v3906
          %3971 = vst [vmem:[%s879 + $0xf0] sm:$0xff] %v3907
          %3972 = vst [vmem:[%s879 + $0xf8] sm:$0xff] %v3908
          %3973 = vst [vmem:[%s879 + $0x100] sm:$0xff] %v3909
          %3974 = vst [vmem:[%s879 + $0x108] sm:$0xff] %v3910
          %3975 = vst [vmem:[%s879 + $0x110] sm:$0xff] %v3911
          %3976 = vst [vmem:[%s879 + $0x118] sm:$0xff] %v3912
          %3977 = vst [vmem:[%s879 + $0x120] sm:$0xff] %v3913
          %3978 = vst [vmem:[%s879 + $0x128] sm:$0xff] %v3914
          %3979 = vst [vmem:[%s879 + $0x130] sm:$0xff] %v3915
          %3980 = vst [vmem:[%s879 + $0x138] sm:$0xff] %v3916
          %3981 = vst [vmem:[%s879 + $0x140] sm:$0xff] %v3917
          %3982 = vst [vmem:[%s879 + $0x148] sm:$0xff] %v3918
          %3983 = vst [vmem:[%s879 + $0x150] sm:$0xff] %v3919
          %3984 = vst [vmem:[%s879 + $0x158] sm:$0xff] %v3920
          %3985 = vst [vmem:[%s879 + $0x160] sm:$0xff] %v3921
          %3986 = vst [vmem:[%s879 + $0x168] sm:$0xff] %v3922
          %3987 = vst [vmem:[%s879 + $0x170] sm:$0xff] %v3923
          %3988 = vst [vmem:[%s879 + $0x178] sm:$0xff] %v3924
          %3989 = vst [vmem:[%s879 + $0x180] sm:$0xff] %v3925
          %3990 = vst [vmem:[%s879 + $0x188] sm:$0xff] %v3926
          %3991 = vst [vmem:[%s879 + $0x190] sm:$0xff] %v3927
          %3992 = vst [vmem:[%s879 + $0x198] sm:$0xff] %v3928
          %3993 = vst [vmem:[%s879 + $0x1a0] sm:$0xff] %v3929
          %3994 = vst [vmem:[%s879 + $0x1a8] sm:$0xff] %v3930
          %3995 = vst [vmem:[%s879 + $0x1b0] sm:$0xff] %v3931
          %3996 = vst [vmem:[%s879 + $0x1b8] sm:$0xff] %v3932
          %3997 = vst [vmem:[%s879 + $0x1c0] sm:$0xff] %v3933
          %3998 = vst [vmem:[%s879 + $0x1c8] sm:$0xff] %v3934
          %3999 = vst [vmem:[%s879 + $0x1d0] sm:$0xff] %v3935
          %4000 = vst [vmem:[%s879 + $0x1d8] sm:$0xff] %v3936
          %4001 = vst [vmem:[%s879 + $0x1e0] sm:$0xff] %v3937
          %4002 = vst [vmem:[%s879 + $0x1e8] sm:$0xff] %v3938
          %4003 = vst [vmem:[%s879 + $0x1f0] sm:$0xff] %v3939
          %4004 = vst [vmem:[%s879 + $0x1f8] sm:$0xff] %v3940
        $region216: #{quaternion_linear_pallas.1} parent=191 // pred_fallthru
          _
        %s4005 = sand.u32 %s286, 1
        %s4006 = scalar_lea.sflag [#allocation7], %s4005
        %s4007 = sand.u32 %s286, 1
        %s4008 = smul.addr %s4007, 512
        %s4009 = scalar_lea.vmem [#allocation6], %s4008
        // Predicated region
        $region217: #{quaternion_linear_pallas.1} parent=191 // pred_check
          %p4010 = pneg %p296
        $region218: #{quaternion_linear_pallas.1} parent=191 // pred_check_branch
          %4012 = sbr.rel (%p4010) target = $region220
        $region219: #{quaternion_linear_pallas.1} parent=191 // pred_region
          %s4013 = smul.u32 16, %s27
          %4015 = vsyncadd %s4006, 0
          %s4016 = smul.addr %s4013, 4
          %s4017 = smul.addr %s4016, 8
          %s4018 = scalar_lea.hbm %s9, %s4017
          %s4019 = sshll.u32 %s4009, 4
          %s4020 = int_to_ptr.vmem [resolvable:$true] %s4019
          %s4021 = sshll.u32 %s4018, 4
          %s4022 = int_to_ptr.hbm [resolvable:$true] %s4021
          %4027 = dma.vmem_to_hbm [thread:$0]  %s4020, 8192, %s4022, %s4006, 512, 512, 32
        $region220: #{quaternion_linear_pallas.1} parent=191 // pred_fallthru
          _
      $region192: #{quaternion_linear_pallas.1} parent=5 // pred_fallthru
        _
      %p4028 = scmp.le.s32.totalorder 2, %s18
      // Predicated region
      $region221: #{quaternion_linear_pallas.1} parent=5 // pred_check
        %p4029 = pneg %p4028
      $region222: #{quaternion_linear_pallas.1} parent=5 // pred_check_branch
        %4031 = sbr.rel (%p4029) target = $region224
      $region223: #{quaternion_linear_pallas.1} parent=5 // pred_region
        %s4032 = ssub.s32 %s18, 2
        // Predicated region
        $region225: #{quaternion_linear_pallas.1} parent=223 // pred_check
          %p4033 = pneg %p302
        $region226: #{quaternion_linear_pallas.1} parent=223 // pred_check_branch
          %4035 = sbr.rel (%p4033) target = $region228
        $region227: #{quaternion_linear_pallas.1} parent=223 // pred_region
          %s4036 = sand.u32 %s287, 1
          %s4037 = scalar_lea.sflag [#allocation7], %s4036
          %s4038 = sand.u32 %s287, 1
          %s4039 = smul.addr %s4038, 512
          %s4040 = scalar_lea.vmem [#allocation6], %s4039
          %4042 = dma.done %s4037, 8192
        $region228: #{quaternion_linear_pallas.1} parent=223 // pred_fallthru
          _
      $region224: #{quaternion_linear_pallas.1} parent=5 // pred_fallthru
        _
    $region6: #{quaternion_linear_pallas.1} parent=1 // loop_footer
      %s22 = sadd.s32 1, %s18
    $region7: #{quaternion_linear_pallas.1} parent=1 // loop_footer_branch
      %17 = sbr.rel target = $region3
    $region8: #{quaternion_linear_pallas.1} parent=1 // loop_exit
      _
    %4043 = vsyncpa [#allocation7], 1
    %s4044 = scalar_lea.sflag [#allocation7], 1
    %4045 = vsyncpa %s4044, 1

</llo_original>
